<compile_context>
chip_gen: v7x
topology: tpu7x:2x2x1
jax: 0.10.0
libtpu: 0.0.40
codegen_flags: <defaults>
</compile_context>

<pallas_src>
import math

import jax
import jax.numpy as jnp
from jax import lax
from jax.experimental import pallas as pl
from jax.experimental.pallas import tpu as pltpu

# ---- constants mirroring the (undefined-in-snippet) globals of the module ----
PAD = "<pad>"
char2idx = {PAD: 0}
VOCAB_SIZE = 32
MAX_LEN = 16

D_MODEL = 64
N_HEADS = 2
N_LAYERS = 2
DIM_FF = 2048                      # nn.TransformerEncoderLayer default dim_feedforward
HEAD_DIM = D_MODEL // N_HEADS
LN_EPS = 1e-5

VOCAB_PAD = 128                    # vocab padded to a full lane width for the output store
TARGET_ROWS = 512                  # rows = b_blk*L per grid step (fits v5e 16 MiB scoped VMEM)
NEG_INF = -1e30                    # finite mask / logits-pad sentinel (no -inf arithmetic)

# row layout of the packed per-layer bias/LayerNorm array (N_LAYERS, 8, DIM_FF)
_R_BQKV, _R_BO, _R_LN1W, _R_LN1B, _R_B1, _R_B2, _R_LN2W, _R_LN2B = range(8)
N_VEC_ROWS = 8


def _layernorm(x, w, b):
    mu = jnp.mean(x, axis=-1, keepdims=True)
    xc = x - mu
    var = jnp.mean(xc * xc, axis=-1, keepdims=True)
    return xc * lax.rsqrt(var + LN_EPS) * w + b


def flownet_kernel(x_ref,
                   wqkv0_ref, wo0_ref, w10_ref, w20_ref,
                   wqkv1_ref, wo1_ref, w11_ref, w21_ref,
                   vecs_ref, fcw_ref, fcb_ref,
                   out_ref):
    """Forward for a block of batch elements: 2 encoder layers + tied fc + log_softmax."""
    b_blk, L, D = x_ref.shape
    rows = b_blk * L

    x = x_ref[...].reshape(rows, D)            # (rows, D) f32 embedded + positional input

    # in-kernel causal mask (finite sentinel; broadcasts over the batched heads)
    row_id = lax.broadcasted_iota(jnp.int32, (L, L), 0)
    col_id = lax.broadcasted_iota(jnp.int32, (L, L), 1)
    mask = jnp.where(col_id > row_id, jnp.float32(NEG_INF), jnp.float32(0.0))

    layer_mats = ((wqkv0_ref, wo0_ref, w10_ref, w20_ref),
                  (wqkv1_ref, wo1_ref, w11_ref, w21_ref))

    for li in range(N_LAYERS):
        wqkv_ref, wo_ref, w1_ref, w2_ref = layer_mats[li]
        lvecs = vecs_ref[li]                                   # (8, DIM_FF) f32
        bqkv = lvecs[_R_BQKV:_R_BQKV + 1, 0:3 * D]             # (1, 3D)
        bo   = lvecs[_R_BO:_R_BO + 1, 0:D]
        ln1w = lvecs[_R_LN1W:_R_LN1W + 1, 0:D]
        ln1b = lvecs[_R_LN1B:_R_LN1B + 1, 0:D]
        b1   = lvecs[_R_B1:_R_B1 + 1, :]                       # (1, DIM_FF)
        b2   = lvecs[_R_B2:_R_B2 + 1, 0:D]
        ln2w = lvecs[_R_LN2W:_R_LN2W + 1, 0:D]
        ln2b = lvecs[_R_LN2B:_R_LN2B + 1, 0:D]

        # ---- fused QKV projection (1/sqrt(head_dim) pre-folded into Q) ----
        x_bf = x.astype(jnp.bfloat16)
        qkv = jnp.dot(x_bf, wqkv_ref[...], preferred_element_type=jnp.float32) + bqkv

        # ---- merged-head attention: fold the head axis into the batch axis ----
        def to_heads(off):
            parts = [qkv[:, off + h * HEAD_DIM: off + (h + 1) * HEAD_DIM]
                     for h in range(N_HEADS)]
            return (jnp.concatenate(parts, axis=0)             # (H*rows, hd), head-major
                    .reshape(N_HEADS * b_blk, L, HEAD_DIM)
                    .astype(jnp.bfloat16))

        qh, kh, vh = to_heads(0), to_heads(D), to_heads(2 * D)

        s = jnp.einsum('bqd,bkd->bqk', qh, kh,
                       preferred_element_type=jnp.float32)      # (H*b, L, L)
        s = s + mask
        s = s - jnp.max(s, axis=-1, keepdims=True)
        p = jnp.exp(s)
        p = p * pl.reciprocal(jnp.sum(p, axis=-1, keepdims=True), approx=True)
        ctx = jnp.einsum('bqk,bkd->bqd', p.astype(jnp.bfloat16), vh,
                         preferred_element_type=jnp.float32)    # (H*b, L, hd)

        # un-fold heads back onto the lane axis: (b, L, H*hd) -> (rows, D)
        ctx2d = jnp.concatenate(
            [ctx[h * b_blk:(h + 1) * b_blk] for h in range(N_HEADS)],
            axis=-1).reshape(rows, D)

        attn = jnp.dot(ctx2d.astype(jnp.bfloat16), wo_ref[...],
                       preferred_element_type=jnp.float32) + bo

        # ---- post-norm residual blocks (norm_first=False; dropout no-op in eval) ----
        x = _layernorm(x + attn, ln1w, ln1b)

        x_bf = x.astype(jnp.bfloat16)
        hdn = jnp.maximum(
            jnp.dot(x_bf, w1_ref[...], preferred_element_type=jnp.float32) + b1, 0.0)
        ff = jnp.dot(hdn.astype(jnp.bfloat16), w2_ref[...],
                     preferred_element_type=jnp.float32) + b2
        x = _layernorm(x + ff, ln2w, ln2b)

    # ---- tied output projection + log_softmax for the LAST token only ----
    last = x.reshape(b_blk, L, D)[:, L - 1, :]                  # (b_blk, D)
    logits = jnp.dot(last.astype(jnp.bfloat16), fcw_ref[...],
                     preferred_element_type=jnp.float32) + fcb_ref[...]
    logits = logits - jnp.max(logits, axis=-1, keepdims=True)
    lse = jnp.log(jnp.sum(jnp.exp(logits), axis=-1, keepdims=True))
    out_ref[...] = logits - lse


# ----------------------------- parameter setup -----------------------------
def init_params(key):
    keys = jax.random.split(key, 3 + N_LAYERS * 8)
    it = iter(keys)

    def rnd(shape, s=0.05):
        return (s * jax.random.normal(next(it), shape)).astype(jnp.float32)

    emb_w = rnd((VOCAB_SIZE, D_MODEL), 0.1)
    emb_w = emb_w.at[char2idx[PAD]].set(0.0)          # padding_idx row zeroed
    pos_w = rnd((MAX_LEN + 1, D_MODEL), 0.1)
    fc_b = rnd((VOCAB_SIZE,), 0.05)

    layers = []
    for _ in range(N_LAYERS):
        layers.append(dict(
            in_proj_w=rnd((3 * D_MODEL, D_MODEL)),
            in_proj_b=rnd((3 * D_MODEL,)),
            out_proj_w=rnd((D_MODEL, D_MODEL)),
            out_proj_b=rnd((D_MODEL,)),
            lin1_w=rnd((DIM_FF, D_MODEL)),
            lin1_b=rnd((DIM_FF,)),
            lin2_w=rnd((D_MODEL, DIM_FF)),
            lin2_b=rnd((D_MODEL,)),
            ln1_w=jnp.ones((D_MODEL,), jnp.float32),
            ln1_b=jnp.zeros((D_MODEL,), jnp.float32),
            ln2_w=jnp.ones((D_MODEL,), jnp.float32),
            ln2_b=jnp.zeros((D_MODEL,), jnp.float32),
        ))
    # logZ exists in the module but is unused in forward.
    return dict(emb_w=emb_w, pos_w=pos_w, fc_b=fc_b, layers=layers,
                logZ=jnp.zeros((), jnp.float32))


def _pack_layer_mats(p):
    """Pre-transposed bf16 matmul weights; attention scale folded into Q."""
    scale = jnp.float32(1.0 / math.sqrt(HEAD_DIM))
    in_w = p["in_proj_w"].at[:D_MODEL].multiply(scale)         # rows = [Wq; Wk; Wv]
    return [in_w.T.astype(jnp.bfloat16),                       # (D, 3D)
            p["out_proj_w"].T.astype(jnp.bfloat16),            # (D, D)
            p["lin1_w"].T.astype(jnp.bfloat16),                # (D, DIM_FF)
            p["lin2_w"].T.astype(jnp.bfloat16)]                # (DIM_FF, D)


def _pack_layer_vecs(p):
    """All per-layer bias / LayerNorm vectors packed into one (8, DIM_FF) f32 array."""
    scale = jnp.float32(1.0 / math.sqrt(HEAD_DIM))
    in_b = p["in_proj_b"].at[:D_MODEL].multiply(scale)         # fold scale into Q bias
    v = jnp.zeros((N_VEC_ROWS, DIM_FF), jnp.float32)
    v = v.at[_R_BQKV, :3 * D_MODEL].set(in_b)
    v = v.at[_R_BO, :D_MODEL].set(p["out_proj_b"])
    v = v.at[_R_LN1W, :D_MODEL].set(p["ln1_w"])
    v = v.at[_R_LN1B, :D_MODEL].set(p["ln1_b"])
    v = v.at[_R_B1, :].set(p["lin1_b"])
    v = v.at[_R_B2, :D_MODEL].set(p["lin2_b"])
    v = v.at[_R_LN2W, :D_MODEL].set(p["ln2_w"])
    v = v.at[_R_LN2B, :D_MODEL].set(p["ln2_b"])
    return v


# ------------------------------ Pallas wrapper ------------------------------
@jax.jit
def flownet_forward(params, prefix):
    B, L = prefix.shape
    pos = jnp.arange(L, dtype=jnp.int32)
    x = params["emb_w"][prefix] + params["pos_w"][pos][None, :, :]        # (B, L, D) f32

    # ---- batch blocking: <= TARGET_ROWS rows per grid step; >= 2 steps whenever
    # the batch is big enough so the "parallel" axis shards across v7x's 2 TCs;
    # b_blk = round_up(cdiv(B, n_blk), 8) limits batch over-padding. ----
    n_blk = max(1, -(-(B * L) // TARGET_ROWS))
    if B >= 16:
        n_blk = max(n_blk, 2)
    b_blk = -(-B // n_blk)
    if n_blk > 1:
        b_blk = ((b_blk + 7) // 8) * 8            # sublane-aligned multi-block shape
    n_blk = -(-B // b_blk)
    b_pad = b_blk * n_blk
    if b_pad != B:
        x = jnp.pad(x, ((0, b_pad - B), (0, 0), (0, 0)))

    mats = []
    for p in params["layers"]:
        mats += _pack_layer_mats(p)
    vecs = jnp.stack([_pack_layer_vecs(p) for p in params["layers"]])     # (n_layers, 8, FF)

    # tied fc weights (= emb.weight), vocab padded to 128 lanes; padded logits are
    # driven to -1e30 through the bias so they vanish from the softmax sum.
    fcw_t = jnp.zeros((D_MODEL, VOCAB_PAD), jnp.bfloat16)
    fcw_t = fcw_t.at[:, :VOCAB_SIZE].set(params["emb_w"].T.astype(jnp.bfloat16))
    fcb = jnp.full((1, VOCAB_PAD), NEG_INF, jnp.float32)
    fcb = fcb.at[0, :VOCAB_SIZE].set(params["fc_b"])

    consts = mats + [vecs, fcw_t, fcb]            # 11 grid-invariant operands
    in_specs = [pl.BlockSpec((b_blk, L, D_MODEL), lambda b: (b, 0, 0))]
    for w in consts:
        in_specs.append(pl.BlockSpec(w.shape, lambda b, _n=w.ndim: (0,) * _n))

    out = pl.pallas_call(
        flownet_kernel,
        out_shape=jax.ShapeDtypeStruct((b_pad, VOCAB_PAD), jnp.float32),
        grid_spec=pltpu.PrefetchScalarGridSpec(
            num_scalar_prefetch=0,
            grid=(n_blk,),
            in_specs=in_specs,
            out_specs=pl.BlockSpec((b_blk, VOCAB_PAD), lambda b: (b, 0)),
        ),
        compiler_params=pltpu.CompilerParams(
            dimension_semantics=("parallel",),    # independent batch blocks (v7x 2 TCs)
        ),
    )(x.astype(jnp.float32), *consts)
    return out[:B, :VOCAB_SIZE]                   # log_softmax(fc(x[:, -1]))


# --------------------------- pure-JAX reference ----------------------------
def flownet_reference(params, prefix):
    B, L = prefix.shape
    x = params["emb_w"][prefix] + params["pos_w"][jnp.arange(L)][None]
    mask = jnp.triu(jnp.full((L, L), -jnp.inf, dtype=jnp.float32), k=1)

    def ln(v, w, b):
        mu = jnp.mean(v, axis=-1, keepdims=True)
        var = jnp.mean((v - mu) ** 2, axis=-1, keepdims=True)
        return (v - mu) / jnp.sqrt(var + LN_EPS) * w + b

    for p in params["layers"]:
        qkv = x @ p["in_proj_w"].T + p["in_proj_b"]
        q, k, v = jnp.split(qkv, 3, axis=-1)

        def heads(t):
            return t.reshape(B, L, N_HEADS, HEAD_DIM).transpose(0, 2, 1, 3)

        q, k, v = heads(q), heads(k), heads(v)
        s = (q @ jnp.swapaxes(k, -1, -2)) / math.sqrt(HEAD_DIM) + mask
        a = jax.nn.softmax(s, axis=-1)
        ctx = (a @ v).transpose(0, 2, 1, 3).reshape(B, L, D_MODEL)
        attn = ctx @ p["out_proj_w"].T + p["out_proj_b"]
        x = ln(x + attn, p["ln1_w"], p["ln1_b"])
        ff = jnp.maximum(x @ p["lin1_w"].T + p["lin1_b"], 0.0) @ p["lin2_w"].T + p["lin2_b"]
        x = ln(x + ff, p["ln2_w"], p["ln2_b"])

    logits = x[:, -1] @ params["emb_w"].T + params["fc_b"]
    return jax.nn.log_softmax(logits, axis=-1)


if __name__ == "__main__":
    key = jax.random.PRNGKey(0)
    pkey, dkey = jax.random.split(key)
    params = init_params(pkey)

    B, L = 2, 8
    prefix = jax.random.randint(dkey, (B, L), 0, VOCAB_SIZE, dtype=jnp.int32)

    out = flownet_forward(params, prefix)
    out = jax.block_until_ready(out)
    assert out.shape == (B, VOCAB_SIZE), out.shape

    ref = flownet_reference(params, prefix)
    max_err = float(jnp.max(jnp.abs(out - ref)))
    # bf16 matmul inputs with f32 accumulation + approx softmax reciprocal:
    # tolerance covers bf16 rounding (documented, intentional approximation).
    assert max_err < 3e-2, f"mismatch vs reference: max abs err {max_err}"

    print("KERNEL_OK")
</pallas_src>

<mosaic_0001>
module attributes {stable_mosaic.version = 11 : i64} {
  func.func @flownet_kernel(%arg0: i32, %arg1: memref<2x8x64xf32, #tpu.memory_space<vmem>>, %arg2: memref<64x192xbf16, #tpu.memory_space<vmem>>, %arg3: memref<64x64xbf16, #tpu.memory_space<vmem>>, %arg4: memref<64x2048xbf16, #tpu.memory_space<vmem>>, %arg5: memref<2048x64xbf16, #tpu.memory_space<vmem>>, %arg6: memref<64x192xbf16, #tpu.memory_space<vmem>>, %arg7: memref<64x64xbf16, #tpu.memory_space<vmem>>, %arg8: memref<64x2048xbf16, #tpu.memory_space<vmem>>, %arg9: memref<2048x64xbf16, #tpu.memory_space<vmem>>, %arg10: memref<2x8x2048xf32, #tpu.memory_space<vmem>>, %arg11: memref<64x128xbf16, #tpu.memory_space<vmem>>, %arg12: memref<1x128xf32, #tpu.memory_space<vmem>>, %arg13: memref<2x128xf32, #tpu.memory_space<vmem>>) attributes {dimension_semantics = [#tpu.dimension_semantics<parallel>], iteration_bounds = array<i64: 1>, scalar_prefetch = 0 : i64, scratch_operands = 0 : i64, tpu.core_type = #tpu.core_type<tc>, window_params = [{transform_indices = @transform_0, window_bounds = array<i64: 2, 8, 64>}, {pipeline_mode = #tpu.pipeline_mode<synchronous>, transform_indices = @transform_1, window_bounds = array<i64: 64, 192>}, {pipeline_mode = #tpu.pipeline_mode<synchronous>, transform_indices = @transform_2, window_bounds = array<i64: 64, 64>}, {pipeline_mode = #tpu.pipeline_mode<synchronous>, transform_indices = @transform_3, window_bounds = array<i64: 64, 2048>}, {pipeline_mode = #tpu.pipeline_mode<synchronous>, transform_indices = @transform_4, window_bounds = array<i64: 2048, 64>}, {pipeline_mode = #tpu.pipeline_mode<synchronous>, transform_indices = @transform_5, window_bounds = array<i64: 64, 192>}, {pipeline_mode = #tpu.pipeline_mode<synchronous>, transform_indices = @transform_6, window_bounds = array<i64: 64, 64>}, {pipeline_mode = #tpu.pipeline_mode<synchronous>, transform_indices = @transform_7, window_bounds = array<i64: 64, 2048>}, {pipeline_mode = #tpu.pipeline_mode<synchronous>, transform_indices = @transform_8, window_bounds = array<i64: 2048, 64>}, {pipeline_mode = #tpu.pipeline_mode<synchronous>, transform_indices = @transform_9, window_bounds = array<i64: 2, 8, 2048>}, {pipeline_mode = #tpu.pipeline_mode<synchronous>, transform_indices = @transform_10, window_bounds = array<i64: 64, 128>}, {pipeline_mode = #tpu.pipeline_mode<synchronous>, transform_indices = @transform_11, window_bounds = array<i64: 1, 128>}, {transform_indices = @transform_12, window_bounds = array<i64: 2, 128>}]} {
    %c0 = arith.constant 0 : index
    %c0_0 = arith.constant 0 : index
    %c0_1 = arith.constant 0 : index
    %0 = vector.load %arg1[%c0, %c0_0, %c0_1] : memref<2x8x64xf32, #tpu.memory_space<vmem>>, vector<2x8x64xf32>
    %1 = vector.shape_cast %0 : vector<2x8x64xf32> to vector<16x64xf32>
    %2 = tpu.iota {dimensions = array<i32: 0>} : vector<8x8xi32>
    %3 = tpu.iota {dimensions = array<i32: 1>} : vector<8x8xi32>
    %4 = arith.cmpi sgt, %3, %2 : vector<8x8xi32>
    %cst = arith.constant -1.000000e+30 : f32
    %cst_2 = arith.constant 0.000000e+00 : f32
    %5 = vector.broadcast %cst : f32 to vector<8x8xf32>
    %6 = vector.broadcast %cst_2 : f32 to vector<8x8xf32>
    %7 = arith.select %4, %5, %6 : vector<8x8xi1>, vector<8x8xf32>
    %c0_3 = arith.constant 0 : index
    %c0_4 = arith.constant 0 : index
    %c0_5 = arith.constant 0 : index
    %8 = vector.load %arg10[%c0_3, %c0_4, %c0_5] : memref<2x8x2048xf32, #tpu.memory_space<vmem>>, vector<1x8x2048xf32>
    %9 = vector.shape_cast %8 : vector<1x8x2048xf32> to vector<8x2048xf32>
    %10 = vector.extract_strided_slice %9 {offsets = [0, 0], sizes = [1, 192], strides = [1, 1]} : vector<8x2048xf32> to vector<1x192xf32>
    %11 = vector.extract_strided_slice %9 {offsets = [1, 0], sizes = [1, 64], strides = [1, 1]} : vector<8x2048xf32> to vector<1x64xf32>
    %12 = vector.extract_strided_slice %9 {offsets = [2, 0], sizes = [1, 64], strides = [1, 1]} : vector<8x2048xf32> to vector<1x64xf32>
    %13 = vector.extract_strided_slice %9 {offsets = [3, 0], sizes = [1, 64], strides = [1, 1]} : vector<8x2048xf32> to vector<1x64xf32>
    %14 = vector.extract_strided_slice %9 {offsets = [4, 0], sizes = [1, 2048], strides = [1, 1]} : vector<8x2048xf32> to vector<1x2048xf32>
    %15 = vector.extract_strided_slice %9 {offsets = [5, 0], sizes = [1, 64], strides = [1, 1]} : vector<8x2048xf32> to vector<1x64xf32>
    %16 = vector.extract_strided_slice %9 {offsets = [6, 0], sizes = [1, 64], strides = [1, 1]} : vector<8x2048xf32> to vector<1x64xf32>
    %17 = vector.extract_strided_slice %9 {offsets = [7, 0], sizes = [1, 64], strides = [1, 1]} : vector<8x2048xf32> to vector<1x64xf32>
    %18 = arith.truncf %1 : vector<16x64xf32> to vector<16x64xbf16>
    %c0_6 = arith.constant 0 : index
    %c0_7 = arith.constant 0 : index
    %19 = vector.load %arg2[%c0_6, %c0_7] : memref<64x192xbf16, #tpu.memory_space<vmem>>, vector<64x192xbf16>
    %cst_8 = arith.constant dense<0.000000e+00> : vector<16x192xf32>
    %20 = tpu.matmul %18, %19, %cst_8 {dimension_numbers = #tpu.dot_dimension_numbers<[1], [0], [0], [1], [0, 0, 1, 1], [], []>} : vector<16x64xbf16>, vector<64x192xbf16>, vector<16x192xf32> -> vector<16x192xf32>
    %21 = vector.broadcast %10 : vector<1x192xf32> to vector<16x192xf32>
    %22 = arith.addf %20, %21 : vector<16x192xf32>
    %23 = vector.extract_strided_slice %22 {offsets = [0, 0], sizes = [16, 32], strides = [1, 1]} : vector<16x192xf32> to vector<16x32xf32>
    %24 = vector.extract_strided_slice %22 {offsets = [0, 32], sizes = [16, 32], strides = [1, 1]} : vector<16x192xf32> to vector<16x32xf32>
    %25 = tpu.concatenate %23, %24 in 0 : vector<16x32xf32>, vector<16x32xf32> -> vector<32x32xf32>
    %26 = vector.shape_cast %25 : vector<32x32xf32> to vector<4x8x32xf32>
    %27 = arith.truncf %26 : vector<4x8x32xf32> to vector<4x8x32xbf16>
    %28 = vector.extract_strided_slice %22 {offsets = [0, 64], sizes = [16, 32], strides = [1, 1]} : vector<16x192xf32> to vector<16x32xf32>
    %29 = vector.extract_strided_slice %22 {offsets = [0, 96], sizes = [16, 32], strides = [1, 1]} : vector<16x192xf32> to vector<16x32xf32>
    %30 = tpu.concatenate %28, %29 in 0 : vector<16x32xf32>, vector<16x32xf32> -> vector<32x32xf32>
    %31 = vector.shape_cast %30 : vector<32x32xf32> to vector<4x8x32xf32>
    %32 = arith.truncf %31 : vector<4x8x32xf32> to vector<4x8x32xbf16>
    %33 = vector.extract_strided_slice %22 {offsets = [0, 128], sizes = [16, 32], strides = [1, 1]} : vector<16x192xf32> to vector<16x32xf32>
    %34 = vector.extract_strided_slice %22 {offsets = [0, 160], sizes = [16, 32], strides = [1, 1]} : vector<16x192xf32> to vector<16x32xf32>
    %35 = tpu.concatenate %33, %34 in 0 : vector<16x32xf32>, vector<16x32xf32> -> vector<32x32xf32>
    %36 = vector.shape_cast %35 : vector<32x32xf32> to vector<4x8x32xf32>
    %37 = arith.truncf %36 : vector<4x8x32xf32> to vector<4x8x32xbf16>
    "tpu.trace_start"() <{level = 10 : i32, message = "bqd,bkd->bqk"}> : () -> ()
    %cst_9 = arith.constant dense<0.000000e+00> : vector<4x8x8xf32>
    %38 = tpu.matmul %27, %32, %cst_9 {dimension_numbers = #tpu.dot_dimension_numbers<[2], [2], [1], [1], [0, 0, 0, 1, 1, 1], [0], [0]>} : vector<4x8x32xbf16>, vector<4x8x32xbf16>, vector<4x8x8xf32> -> vector<4x8x8xf32>
    "tpu.trace_stop"() : () -> ()
    %39 = vector.shape_cast %7 : vector<8x8xf32> to vector<1x8x8xf32>
    %40 = vector.broadcast %39 : vector<1x8x8xf32> to vector<4x8x8xf32>
    %41 = arith.addf %38, %40 : vector<4x8x8xf32>
    %cst_10 = arith.constant dense<0xFF800000> : vector<4x8xf32>
    %42 = vector.multi_reduction <maximumf>, %41, %cst_10 [2] : vector<4x8x8xf32> to vector<4x8xf32>
    %43 = vector.shape_cast %42 : vector<4x8xf32> to vector<4x8x1xf32>
    %44 = vector.broadcast %43 : vector<4x8x1xf32> to vector<4x8x8xf32>
    %45 = arith.subf %41, %44 : vector<4x8x8xf32>
    %46 = math.exp %45 : vector<4x8x8xf32>
    %cst_11 = arith.constant dense<0.000000e+00> : vector<4x8xf32>
    %47 = vector.multi_reduction <add>, %46, %cst_11 [2] : vector<4x8x8xf32> to vector<4x8xf32>
    %48 = vector.shape_cast %47 : vector<4x8xf32> to vector<4x8x1xf32>
    %49 = tpu.reciprocal %48 {approx = true} : vector<4x8x1xf32> -> vector<4x8x1xf32>
    %50 = vector.broadcast %49 : vector<4x8x1xf32> to vector<4x8x8xf32>
    %51 = arith.mulf %46, %50 : vector<4x8x8xf32>
    %52 = arith.truncf %51 : vector<4x8x8xf32> to vector<4x8x8xbf16>
    "tpu.trace_start"() <{level = 10 : i32, message = "bqk,bkd->bqd"}> : () -> ()
    %cst_12 = arith.constant dense<0.000000e+00> : vector<4x8x32xf32>
    %53 = tpu.matmul %52, %37, %cst_12 {dimension_numbers = #tpu.dot_dimension_numbers<[2], [1], [1], [2], [0, 0, 0, 1, 1, 2], [0], [0]>} : vector<4x8x8xbf16>, vector<4x8x32xbf16>, vector<4x8x32xf32> -> vector<4x8x32xf32>
    "tpu.trace_stop"() : () -> ()
    %54 = vector.extract_strided_slice %53 {offsets = [0, 0, 0], sizes = [2, 8, 32], strides = [1, 1, 1]} : vector<4x8x32xf32> to vector<2x8x32xf32>
    %55 = vector.extract_strided_slice %53 {offsets = [2, 0, 0], sizes = [2, 8, 32], strides = [1, 1, 1]} : vector<4x8x32xf32> to vector<2x8x32xf32>
    %56 = tpu.concatenate %54, %55 in 2 : vector<2x8x32xf32>, vector<2x8x32xf32> -> vector<2x8x64xf32>
    %57 = vector.shape_cast %56 : vector<2x8x64xf32> to vector<16x64xf32>
    %58 = arith.truncf %57 : vector<16x64xf32> to vector<16x64xbf16>
    %c0_13 = arith.constant 0 : index
    %c0_14 = arith.constant 0 : index
    %59 = vector.load %arg3[%c0_13, %c0_14] : memref<64x64xbf16, #tpu.memory_space<vmem>>, vector<64x64xbf16>
    %cst_15 = arith.constant dense<0.000000e+00> : vector<16x64xf32>
    %60 = tpu.matmul %58, %59, %cst_15 {dimension_numbers = #tpu.dot_dimension_numbers<[1], [0], [0], [1], [0, 0, 1, 1], [], []>} : vector<16x64xbf16>, vector<64x64xbf16>, vector<16x64xf32> -> vector<16x64xf32>
    %61 = vector.broadcast %11 : vector<1x64xf32> to vector<16x64xf32>
    %62 = arith.addf %60, %61 : vector<16x64xf32>
    %63 = arith.addf %1, %62 : vector<16x64xf32>
    %cst_16 = arith.constant dense<0.000000e+00> : vector<16xf32>
    %64 = vector.multi_reduction <add>, %63, %cst_16 [1] : vector<16x64xf32> to vector<16xf32>
    %65 = vector.shape_cast %64 : vector<16xf32> to vector<16x1xf32>
    %cst_17 = arith.constant 6.400000e+01 : f32
    %66 = vector.broadcast %cst_17 : f32 to vector<16x1xf32>
    %67 = arith.divf %65, %66 : vector<16x1xf32>
    %68 = vector.broadcast %67 : vector<16x1xf32> to vector<16x64xf32>
    %69 = arith.subf %63, %68 : vector<16x64xf32>
    %70 = arith.mulf %69, %69 : vector<16x64xf32>
    %cst_18 = arith.constant dense<0.000000e+00> : vector<16xf32>
    %71 = vector.multi_reduction <add>, %70, %cst_18 [1] : vector<16x64xf32> to vector<16xf32>
    %72 = vector.shape_cast %71 : vector<16xf32> to vector<16x1xf32>
    %cst_19 = arith.constant 6.400000e+01 : f32
    %73 = vector.broadcast %cst_19 : f32 to vector<16x1xf32>
    %74 = arith.divf %72, %73 : vector<16x1xf32>
    %cst_20 = arith.constant 9.99999974E-6 : f32
    %75 = vector.broadcast %cst_20 : f32 to vector<16x1xf32>
    %76 = arith.addf %74, %75 : vector<16x1xf32>
    %77 = math.rsqrt %76 : vector<16x1xf32>
    %78 = vector.broadcast %77 : vector<16x1xf32> to vector<16x64xf32>
    %79 = arith.mulf %69, %78 : vector<16x64xf32>
    %80 = vector.broadcast %12 : vector<1x64xf32> to vector<16x64xf32>
    %81 = arith.mulf %79, %80 : vector<16x64xf32>
    %82 = vector.broadcast %13 : vector<1x64xf32> to vector<16x64xf32>
    %83 = arith.addf %81, %82 : vector<16x64xf32>
    %84 = arith.truncf %83 : vector<16x64xf32> to vector<16x64xbf16>
    %c0_21 = arith.constant 0 : index
    %c0_22 = arith.constant 0 : index
    %85 = vector.load %arg4[%c0_21, %c0_22] : memref<64x2048xbf16, #tpu.memory_space<vmem>>, vector<64x2048xbf16>
    %cst_23 = arith.constant dense<0.000000e+00> : vector<16x2048xf32>
    %86 = tpu.matmul %84, %85, %cst_23 {dimension_numbers = #tpu.dot_dimension_numbers<[1], [0], [0], [1], [0, 0, 1, 1], [], []>} : vector<16x64xbf16>, vector<64x2048xbf16>, vector<16x2048xf32> -> vector<16x2048xf32>
    %87 = vector.broadcast %14 : vector<1x2048xf32> to vector<16x2048xf32>
    %88 = arith.addf %86, %87 : vector<16x2048xf32>
    %cst_24 = arith.constant 0.000000e+00 : f32
    %89 = vector.broadcast %cst_24 : f32 to vector<16x2048xf32>
    %90 = arith.maximumf %88, %89 : vector<16x2048xf32>
    %91 = arith.truncf %90 : vector<16x2048xf32> to vector<16x2048xbf16>
    %c0_25 = arith.constant 0 : index
    %c0_26 = arith.constant 0 : index
    %92 = vector.load %arg5[%c0_25, %c0_26] : memref<2048x64xbf16, #tpu.memory_space<vmem>>, vector<2048x64xbf16>
    %cst_27 = arith.constant dense<0.000000e+00> : vector<16x64xf32>
    %93 = tpu.matmul %91, %92, %cst_27 {dimension_numbers = #tpu.dot_dimension_numbers<[1], [0], [0], [1], [0, 0, 1, 1], [], []>} : vector<16x2048xbf16>, vector<2048x64xbf16>, vector<16x64xf32> -> vector<16x64xf32>
    %94 = vector.broadcast %15 : vector<1x64xf32> to vector<16x64xf32>
    %95 = arith.addf %93, %94 : vector<16x64xf32>
    %96 = arith.addf %83, %95 : vector<16x64xf32>
    %cst_28 = arith.constant dense<0.000000e+00> : vector<16xf32>
    %97 = vector.multi_reduction <add>, %96, %cst_28 [1] : vector<16x64xf32> to vector<16xf32>
    %98 = vector.shape_cast %97 : vector<16xf32> to vector<16x1xf32>
    %cst_29 = arith.constant 6.400000e+01 : f32
    %99 = vector.broadcast %cst_29 : f32 to vector<16x1xf32>
    %100 = arith.divf %98, %99 : vector<16x1xf32>
    %101 = vector.broadcast %100 : vector<16x1xf32> to vector<16x64xf32>
    %102 = arith.subf %96, %101 : vector<16x64xf32>
    %103 = arith.mulf %102, %102 : vector<16x64xf32>
    %cst_30 = arith.constant dense<0.000000e+00> : vector<16xf32>
    %104 = vector.multi_reduction <add>, %103, %cst_30 [1] : vector<16x64xf32> to vector<16xf32>
    %105 = vector.shape_cast %104 : vector<16xf32> to vector<16x1xf32>
    %cst_31 = arith.constant 6.400000e+01 : f32
    %106 = vector.broadcast %cst_31 : f32 to vector<16x1xf32>
    %107 = arith.divf %105, %106 : vector<16x1xf32>
    %cst_32 = arith.constant 9.99999974E-6 : f32
    %108 = vector.broadcast %cst_32 : f32 to vector<16x1xf32>
    %109 = arith.addf %107, %108 : vector<16x1xf32>
    %110 = math.rsqrt %109 : vector<16x1xf32>
    %111 = vector.broadcast %110 : vector<16x1xf32> to vector<16x64xf32>
    %112 = arith.mulf %102, %111 : vector<16x64xf32>
    %113 = vector.broadcast %16 : vector<1x64xf32> to vector<16x64xf32>
    %114 = arith.mulf %112, %113 : vector<16x64xf32>
    %115 = vector.broadcast %17 : vector<1x64xf32> to vector<16x64xf32>
    %116 = arith.addf %114, %115 : vector<16x64xf32>
    %c1 = arith.constant 1 : index
    %c0_33 = arith.constant 0 : index
    %c0_34 = arith.constant 0 : index
    %117 = vector.load %arg10[%c1, %c0_33, %c0_34] : memref<2x8x2048xf32, #tpu.memory_space<vmem>>, vector<1x8x2048xf32>
    %118 = vector.shape_cast %117 : vector<1x8x2048xf32> to vector<8x2048xf32>
    %119 = vector.extract_strided_slice %118 {offsets = [0, 0], sizes = [1, 192], strides = [1, 1]} : vector<8x2048xf32> to vector<1x192xf32>
    %120 = vector.extract_strided_slice %118 {offsets = [1, 0], sizes = [1, 64], strides = [1, 1]} : vector<8x2048xf32> to vector<1x64xf32>
    %121 = vector.extract_strided_slice %118 {offsets = [2, 0], sizes = [1, 64], strides = [1, 1]} : vector<8x2048xf32> to vector<1x64xf32>
    %122 = vector.extract_strided_slice %118 {offsets = [3, 0], sizes = [1, 64], strides = [1, 1]} : vector<8x2048xf32> to vector<1x64xf32>
    %123 = vector.extract_strided_slice %118 {offsets = [4, 0], sizes = [1, 2048], strides = [1, 1]} : vector<8x2048xf32> to vector<1x2048xf32>
    %124 = vector.extract_strided_slice %118 {offsets = [5, 0], sizes = [1, 64], strides = [1, 1]} : vector<8x2048xf32> to vector<1x64xf32>
    %125 = vector.extract_strided_slice %118 {offsets = [6, 0], sizes = [1, 64], strides = [1, 1]} : vector<8x2048xf32> to vector<1x64xf32>
    %126 = vector.extract_strided_slice %118 {offsets = [7, 0], sizes = [1, 64], strides = [1, 1]} : vector<8x2048xf32> to vector<1x64xf32>
    %127 = arith.truncf %116 : vector<16x64xf32> to vector<16x64xbf16>
    %c0_35 = arith.constant 0 : index
    %c0_36 = arith.constant 0 : index
    %128 = vector.load %arg6[%c0_35, %c0_36] : memref<64x192xbf16, #tpu.memory_space<vmem>>, vector<64x192xbf16>
    %cst_37 = arith.constant dense<0.000000e+00> : vector<16x192xf32>
    %129 = tpu.matmul %127, %128, %cst_37 {dimension_numbers = #tpu.dot_dimension_numbers<[1], [0], [0], [1], [0, 0, 1, 1], [], []>} : vector<16x64xbf16>, vector<64x192xbf16>, vector<16x192xf32> -> vector<16x192xf32>
    %130 = vector.broadcast %119 : vector<1x192xf32> to vector<16x192xf32>
    %131 = arith.addf %129, %130 : vector<16x192xf32>
    %132 = vector.extract_strided_slice %131 {offsets = [0, 0], sizes = [16, 32], strides = [1, 1]} : vector<16x192xf32> to vector<16x32xf32>
    %133 = vector.extract_strided_slice %131 {offsets = [0, 32], sizes = [16, 32], strides = [1, 1]} : vector<16x192xf32> to vector<16x32xf32>
    %134 = tpu.concatenate %132, %133 in 0 : vector<16x32xf32>, vector<16x32xf32> -> vector<32x32xf32>
    %135 = vector.shape_cast %134 : vector<32x32xf32> to vector<4x8x32xf32>
    %136 = arith.truncf %135 : vector<4x8x32xf32> to vector<4x8x32xbf16>
    %137 = vector.extract_strided_slice %131 {offsets = [0, 64], sizes = [16, 32], strides = [1, 1]} : vector<16x192xf32> to vector<16x32xf32>
    %138 = vector.extract_strided_slice %131 {offsets = [0, 96], sizes = [16, 32], strides = [1, 1]} : vector<16x192xf32> to vector<16x32xf32>
    %139 = tpu.concatenate %137, %138 in 0 : vector<16x32xf32>, vector<16x32xf32> -> vector<32x32xf32>
    %140 = vector.shape_cast %139 : vector<32x32xf32> to vector<4x8x32xf32>
    %141 = arith.truncf %140 : vector<4x8x32xf32> to vector<4x8x32xbf16>
    %142 = vector.extract_strided_slice %131 {offsets = [0, 128], sizes = [16, 32], strides = [1, 1]} : vector<16x192xf32> to vector<16x32xf32>
    %143 = vector.extract_strided_slice %131 {offsets = [0, 160], sizes = [16, 32], strides = [1, 1]} : vector<16x192xf32> to vector<16x32xf32>
    %144 = tpu.concatenate %142, %143 in 0 : vector<16x32xf32>, vector<16x32xf32> -> vector<32x32xf32>
    %145 = vector.shape_cast %144 : vector<32x32xf32> to vector<4x8x32xf32>
    %146 = arith.truncf %145 : vector<4x8x32xf32> to vector<4x8x32xbf16>
    "tpu.trace_start"() <{level = 10 : i32, message = "bqd,bkd->bqk"}> : () -> ()
    %cst_38 = arith.constant dense<0.000000e+00> : vector<4x8x8xf32>
    %147 = tpu.matmul %136, %141, %cst_38 {dimension_numbers = #tpu.dot_dimension_numbers<[2], [2], [1], [1], [0, 0, 0, 1, 1, 1], [0], [0]>} : vector<4x8x32xbf16>, vector<4x8x32xbf16>, vector<4x8x8xf32> -> vector<4x8x8xf32>
    "tpu.trace_stop"() : () -> ()
    %148 = vector.shape_cast %7 : vector<8x8xf32> to vector<1x8x8xf32>
    %149 = vector.broadcast %148 : vector<1x8x8xf32> to vector<4x8x8xf32>
    %150 = arith.addf %147, %149 : vector<4x8x8xf32>
    %cst_39 = arith.constant dense<0xFF800000> : vector<4x8xf32>
    %151 = vector.multi_reduction <maximumf>, %150, %cst_39 [2] : vector<4x8x8xf32> to vector<4x8xf32>
    %152 = vector.shape_cast %151 : vector<4x8xf32> to vector<4x8x1xf32>
    %153 = vector.broadcast %152 : vector<4x8x1xf32> to vector<4x8x8xf32>
    %154 = arith.subf %150, %153 : vector<4x8x8xf32>
    %155 = math.exp %154 : vector<4x8x8xf32>
    %cst_40 = arith.constant dense<0.000000e+00> : vector<4x8xf32>
    %156 = vector.multi_reduction <add>, %155, %cst_40 [2] : vector<4x8x8xf32> to vector<4x8xf32>
    %157 = vector.shape_cast %156 : vector<4x8xf32> to vector<4x8x1xf32>
    %158 = tpu.reciprocal %157 {approx = true} : vector<4x8x1xf32> -> vector<4x8x1xf32>
    %159 = vector.broadcast %158 : vector<4x8x1xf32> to vector<4x8x8xf32>
    %160 = arith.mulf %155, %159 : vector<4x8x8xf32>
    %161 = arith.truncf %160 : vector<4x8x8xf32> to vector<4x8x8xbf16>
    "tpu.trace_start"() <{level = 10 : i32, message = "bqk,bkd->bqd"}> : () -> ()
    %cst_41 = arith.constant dense<0.000000e+00> : vector<4x8x32xf32>
    %162 = tpu.matmul %161, %146, %cst_41 {dimension_numbers = #tpu.dot_dimension_numbers<[2], [1], [1], [2], [0, 0, 0, 1, 1, 2], [0], [0]>} : vector<4x8x8xbf16>, vector<4x8x32xbf16>, vector<4x8x32xf32> -> vector<4x8x32xf32>
    "tpu.trace_stop"() : () -> ()
    %163 = vector.extract_strided_slice %162 {offsets = [0, 0, 0], sizes = [2, 8, 32], strides = [1, 1, 1]} : vector<4x8x32xf32> to vector<2x8x32xf32>
    %164 = vector.extract_strided_slice %162 {offsets = [2, 0, 0], sizes = [2, 8, 32], strides = [1, 1, 1]} : vector<4x8x32xf32> to vector<2x8x32xf32>
    %165 = tpu.concatenate %163, %164 in 2 : vector<2x8x32xf32>, vector<2x8x32xf32> -> vector<2x8x64xf32>
    %166 = vector.shape_cast %165 : vector<2x8x64xf32> to vector<16x64xf32>
    %167 = arith.truncf %166 : vector<16x64xf32> to vector<16x64xbf16>
    %c0_42 = arith.constant 0 : index
    %c0_43 = arith.constant 0 : index
    %168 = vector.load %arg7[%c0_42, %c0_43] : memref<64x64xbf16, #tpu.memory_space<vmem>>, vector<64x64xbf16>
    %cst_44 = arith.constant dense<0.000000e+00> : vector<16x64xf32>
    %169 = tpu.matmul %167, %168, %cst_44 {dimension_numbers = #tpu.dot_dimension_numbers<[1], [0], [0], [1], [0, 0, 1, 1], [], []>} : vector<16x64xbf16>, vector<64x64xbf16>, vector<16x64xf32> -> vector<16x64xf32>
    %170 = vector.broadcast %120 : vector<1x64xf32> to vector<16x64xf32>
    %171 = arith.addf %169, %170 : vector<16x64xf32>
    %172 = arith.addf %116, %171 : vector<16x64xf32>
    %cst_45 = arith.constant dense<0.000000e+00> : vector<16xf32>
    %173 = vector.multi_reduction <add>, %172, %cst_45 [1] : vector<16x64xf32> to vector<16xf32>
    %174 = vector.shape_cast %173 : vector<16xf32> to vector<16x1xf32>
    %cst_46 = arith.constant 6.400000e+01 : f32
    %175 = vector.broadcast %cst_46 : f32 to vector<16x1xf32>
    %176 = arith.divf %174, %175 : vector<16x1xf32>
    %177 = vector.broadcast %176 : vector<16x1xf32> to vector<16x64xf32>
    %178 = arith.subf %172, %177 : vector<16x64xf32>
    %179 = arith.mulf %178, %178 : vector<16x64xf32>
    %cst_47 = arith.constant dense<0.000000e+00> : vector<16xf32>
    %180 = vector.multi_reduction <add>, %179, %cst_47 [1] : vector<16x64xf32> to vector<16xf32>
    %181 = vector.shape_cast %180 : vector<16xf32> to vector<16x1xf32>
    %cst_48 = arith.constant 6.400000e+01 : f32
    %182 = vector.broadcast %cst_48 : f32 to vector<16x1xf32>
    %183 = arith.divf %181, %182 : vector<16x1xf32>
    %cst_49 = arith.constant 9.99999974E-6 : f32
    %184 = vector.broadcast %cst_49 : f32 to vector<16x1xf32>
    %185 = arith.addf %183, %184 : vector<16x1xf32>
    %186 = math.rsqrt %185 : vector<16x1xf32>
    %187 = vector.broadcast %186 : vector<16x1xf32> to vector<16x64xf32>
    %188 = arith.mulf %178, %187 : vector<16x64xf32>
    %189 = vector.broadcast %121 : vector<1x64xf32> to vector<16x64xf32>
    %190 = arith.mulf %188, %189 : vector<16x64xf32>
    %191 = vector.broadcast %122 : vector<1x64xf32> to vector<16x64xf32>
    %192 = arith.addf %190, %191 : vector<16x64xf32>
    %193 = arith.truncf %192 : vector<16x64xf32> to vector<16x64xbf16>
    %c0_50 = arith.constant 0 : index
    %c0_51 = arith.constant 0 : index
    %194 = vector.load %arg8[%c0_50, %c0_51] : memref<64x2048xbf16, #tpu.memory_space<vmem>>, vector<64x2048xbf16>
    %cst_52 = arith.constant dense<0.000000e+00> : vector<16x2048xf32>
    %195 = tpu.matmul %193, %194, %cst_52 {dimension_numbers = #tpu.dot_dimension_numbers<[1], [0], [0], [1], [0, 0, 1, 1], [], []>} : vector<16x64xbf16>, vector<64x2048xbf16>, vector<16x2048xf32> -> vector<16x2048xf32>
    %196 = vector.broadcast %123 : vector<1x2048xf32> to vector<16x2048xf32>
    %197 = arith.addf %195, %196 : vector<16x2048xf32>
    %cst_53 = arith.constant 0.000000e+00 : f32
    %198 = vector.broadcast %cst_53 : f32 to vector<16x2048xf32>
    %199 = arith.maximumf %197, %198 : vector<16x2048xf32>
    %200 = arith.truncf %199 : vector<16x2048xf32> to vector<16x2048xbf16>
    %c0_54 = arith.constant 0 : index
    %c0_55 = arith.constant 0 : index
    %201 = vector.load %arg9[%c0_54, %c0_55] : memref<2048x64xbf16, #tpu.memory_space<vmem>>, vector<2048x64xbf16>
    %cst_56 = arith.constant dense<0.000000e+00> : vector<16x64xf32>
    %202 = tpu.matmul %200, %201, %cst_56 {dimension_numbers = #tpu.dot_dimension_numbers<[1], [0], [0], [1], [0, 0, 1, 1], [], []>} : vector<16x2048xbf16>, vector<2048x64xbf16>, vector<16x64xf32> -> vector<16x64xf32>
    %203 = vector.broadcast %124 : vector<1x64xf32> to vector<16x64xf32>
    %204 = arith.addf %202, %203 : vector<16x64xf32>
    %205 = arith.addf %192, %204 : vector<16x64xf32>
    %cst_57 = arith.constant dense<0.000000e+00> : vector<16xf32>
    %206 = vector.multi_reduction <add>, %205, %cst_57 [1] : vector<16x64xf32> to vector<16xf32>
    %207 = vector.shape_cast %206 : vector<16xf32> to vector<16x1xf32>
    %cst_58 = arith.constant 6.400000e+01 : f32
    %208 = vector.broadcast %cst_58 : f32 to vector<16x1xf32>
    %209 = arith.divf %207, %208 : vector<16x1xf32>
    %210 = vector.broadcast %209 : vector<16x1xf32> to vector<16x64xf32>
    %211 = arith.subf %205, %210 : vector<16x64xf32>
    %212 = arith.mulf %211, %211 : vector<16x64xf32>
    %cst_59 = arith.constant dense<0.000000e+00> : vector<16xf32>
    %213 = vector.multi_reduction <add>, %212, %cst_59 [1] : vector<16x64xf32> to vector<16xf32>
    %214 = vector.shape_cast %213 : vector<16xf32> to vector<16x1xf32>
    %cst_60 = arith.constant 6.400000e+01 : f32
    %215 = vector.broadcast %cst_60 : f32 to vector<16x1xf32>
    %216 = arith.divf %214, %215 : vector<16x1xf32>
    %cst_61 = arith.constant 9.99999974E-6 : f32
    %217 = vector.broadcast %cst_61 : f32 to vector<16x1xf32>
    %218 = arith.addf %216, %217 : vector<16x1xf32>
    %219 = math.rsqrt %218 : vector<16x1xf32>
    %220 = vector.broadcast %219 : vector<16x1xf32> to vector<16x64xf32>
    %221 = arith.mulf %211, %220 : vector<16x64xf32>
    %222 = vector.broadcast %125 : vector<1x64xf32> to vector<16x64xf32>
    %223 = arith.mulf %221, %222 : vector<16x64xf32>
    %224 = vector.broadcast %126 : vector<1x64xf32> to vector<16x64xf32>
    %225 = arith.addf %223, %224 : vector<16x64xf32>
    %226 = vector.shape_cast %225 : vector<16x64xf32> to vector<2x8x64xf32>
    %227 = vector.extract_strided_slice %226 {offsets = [0, 7, 0], sizes = [2, 1, 64], strides = [1, 1, 1]} : vector<2x8x64xf32> to vector<2x1x64xf32>
    %228 = vector.shape_cast %227 : vector<2x1x64xf32> to vector<2x64xf32>
    %229 = arith.truncf %228 : vector<2x64xf32> to vector<2x64xbf16>
    %c0_62 = arith.constant 0 : index
    %c0_63 = arith.constant 0 : index
    %230 = vector.load %arg11[%c0_62, %c0_63] : memref<64x128xbf16, #tpu.memory_space<vmem>>, vector<64x128xbf16>
    %cst_64 = arith.constant dense<0.000000e+00> : vector<2x128xf32>
    %231 = tpu.matmul %229, %230, %cst_64 {dimension_numbers = #tpu.dot_dimension_numbers<[1], [0], [0], [1], [0, 0, 1, 1], [], []>} : vector<2x64xbf16>, vector<64x128xbf16>, vector<2x128xf32> -> vector<2x128xf32>
    %c0_65 = arith.constant 0 : index
    %c0_66 = arith.constant 0 : index
    %232 = vector.load %arg12[%c0_65, %c0_66] : memref<1x128xf32, #tpu.memory_space<vmem>>, vector<1x128xf32>
    %233 = vector.broadcast %232 : vector<1x128xf32> to vector<2x128xf32>
    %234 = arith.addf %231, %233 : vector<2x128xf32>
    %cst_67 = arith.constant dense<0xFF800000> : vector<2xf32>
    %235 = vector.multi_reduction <maximumf>, %234, %cst_67 [1] : vector<2x128xf32> to vector<2xf32>
    %236 = vector.shape_cast %235 : vector<2xf32> to vector<2x1xf32>
    %237 = vector.broadcast %236 : vector<2x1xf32> to vector<2x128xf32>
    %238 = arith.subf %234, %237 : vector<2x128xf32>
    %239 = math.exp %238 : vector<2x128xf32>
    %cst_68 = arith.constant dense<0.000000e+00> : vector<2xf32>
    %240 = vector.multi_reduction <add>, %239, %cst_68 [1] : vector<2x128xf32> to vector<2xf32>
    %241 = vector.shape_cast %240 : vector<2xf32> to vector<2x1xf32>
    %242 = math.log %241 : vector<2x1xf32>
    %243 = vector.broadcast %242 : vector<2x1xf32> to vector<2x128xf32>
    %244 = arith.subf %238, %243 : vector<2x128xf32>
    %c0_69 = arith.constant 0 : index
    %c0_70 = arith.constant 0 : index
    %245 = vector.load %arg13[%c0_69, %c0_70] : memref<2x128xf32, #tpu.memory_space<vmem>>, vector<2x128xf32>
    tpu.vector_store %arg13[%c0_69, %c0_70], %244 {strides = array<i32>} : memref<2x128xf32, #tpu.memory_space<vmem>>, vector<2x128xf32>,
    return
  }
  func.func @transform_0(%arg0: i32) -> (i32, i32, i32) {
    %c0_i32 = arith.constant 0 : i32
    %c0_i32_0 = arith.constant 0 : i32
    %c0_i32_1 = arith.constant 0 : i32
    return %arg0, %c0_i32, %c0_i32_0 : i32, i32, i32
  }
  func.func @transform_1(%arg0: i32) -> (i32, i32) {
    %c0_i32 = arith.constant 0 : i32
    %c0_i32_0 = arith.constant 0 : i32
    %c0_i32_1 = arith.constant 0 : i32
    return %c0_i32, %c0_i32_0 : i32, i32
  }
  func.func @transform_2(%arg0: i32) -> (i32, i32) {
    %c0_i32 = arith.constant 0 : i32
    %c0_i32_0 = arith.constant 0 : i32
    %c0_i32_1 = arith.constant 0 : i32
    return %c0_i32, %c0_i32_0 : i32, i32
  }
  func.func @transform_3(%arg0: i32) -> (i32, i32) {
    %c0_i32 = arith.constant 0 : i32
    %c0_i32_0 = arith.constant 0 : i32
    %c0_i32_1 = arith.constant 0 : i32
    return %c0_i32, %c0_i32_0 : i32, i32
  }
  func.func @transform_4(%arg0: i32) -> (i32, i32) {
    %c0_i32 = arith.constant 0 : i32
    %c0_i32_0 = arith.constant 0 : i32
    %c0_i32_1 = arith.constant 0 : i32
    return %c0_i32, %c0_i32_0 : i32, i32
  }
  func.func @transform_5(%arg0: i32) -> (i32, i32) {
    %c0_i32 = arith.constant 0 : i32
    %c0_i32_0 = arith.constant 0 : i32
    %c0_i32_1 = arith.constant 0 : i32
    return %c0_i32, %c0_i32_0 : i32, i32
  }
  func.func @transform_6(%arg0: i32) -> (i32, i32) {
    %c0_i32 = arith.constant 0 : i32
    %c0_i32_0 = arith.constant 0 : i32
    %c0_i32_1 = arith.constant 0 : i32
    return %c0_i32, %c0_i32_0 : i32, i32
  }
  func.func @transform_7(%arg0: i32) -> (i32, i32) {
    %c0_i32 = arith.constant 0 : i32
    %c0_i32_0 = arith.constant 0 : i32
    %c0_i32_1 = arith.constant 0 : i32
    return %c0_i32, %c0_i32_0 : i32, i32
  }
  func.func @transform_8(%arg0: i32) -> (i32, i32) {
    %c0_i32 = arith.constant 0 : i32
    %c0_i32_0 = arith.constant 0 : i32
    %c0_i32_1 = arith.constant 0 : i32
    return %c0_i32, %c0_i32_0 : i32, i32
  }
  func.func @transform_9(%arg0: i32) -> (i32, i32, i32) {
    %c0_i32 = arith.constant 0 : i32
    %c0_i32_0 = arith.constant 0 : i32
    %c0_i32_1 = arith.constant 0 : i32
    %c0_i32_2 = arith.constant 0 : i32
    return %c0_i32, %c0_i32_0, %c0_i32_1 : i32, i32, i32
  }
  func.func @transform_10(%arg0: i32) -> (i32, i32) {
    %c0_i32 = arith.constant 0 : i32
    %c0_i32_0 = arith.constant 0 : i32
    %c0_i32_1 = arith.constant 0 : i32
    return %c0_i32, %c0_i32_0 : i32, i32
  }
  func.func @transform_11(%arg0: i32) -> (i32, i32) {
    %c0_i32 = arith.constant 0 : i32
    %c0_i32_0 = arith.constant 0 : i32
    %c0_i32_1 = arith.constant 0 : i32
    return %c0_i32, %c0_i32_0 : i32, i32
  }
  func.func @transform_12(%arg0: i32) -> (i32, i32) {
    %c0_i32 = arith.constant 0 : i32
    %c0_i32_0 = arith.constant 0 : i32
    return %arg0, %c0_i32 : i32, i32
  }
}

</mosaic_0001>

<llo_original>
// kernel: flownet_forward.1
$region0: #{flownet_forward.1}
  #allocation0 [shape = 'u32[]', space=smem, size = 0x4, offset = 0x4, fixed_abs, tag = 'smem constant byte address 0x4 - core index']
  #allocation1 [shape = 'u32[144,128]{1,0:T(1,128)}', space=vmem, size = 0x12000, scoped, tag = 'internal scratch']
  %s0 = inlined_call_operand.vmem [shape: f32[2,8,64], index: 0, kind: input, shape index: {}]
  %s1 = inlined_call_operand.vmem [shape: bf16[64,192], index: 1, kind: input, shape index: {}]
  %s2 = inlined_call_operand.vmem [shape: bf16[64,64], index: 2, kind: input, shape index: {}]
  %s3 = inlined_call_operand.vmem [shape: bf16[64,2048], index: 3, kind: input, shape index: {}]
  %s4 = inlined_call_operand.vmem [shape: bf16[2048,64], index: 4, kind: input, shape index: {}]
  %s5 = inlined_call_operand.vmem [shape: bf16[64,192], index: 5, kind: input, shape index: {}]
  %s6 = inlined_call_operand.vmem [shape: bf16[64,64], index: 6, kind: input, shape index: {}]
  %s7 = inlined_call_operand.vmem [shape: bf16[64,2048], index: 7, kind: input, shape index: {}]
  %s8 = inlined_call_operand.vmem [shape: bf16[2048,64], index: 8, kind: input, shape index: {}]
  %s9 = inlined_call_operand.vmem [shape: f32[2,8,2048], index: 9, kind: input, shape index: {}]
  %s10 = inlined_call_operand.vmem [shape: bf16[64,128], index: 10, kind: input, shape index: {}]
  %s11 = inlined_call_operand.vmem [shape: f32[1,128], index: 11, kind: input, shape index: {}]
  %s12 = inlined_call_operand.hbm [shape: f32[2,128], index: 12, kind: output, shape index: {}]
  %s13 = sld [smem:[#allocation0]]
  $region58: #{flownet_forward.1} parent=0
    _
  %s15 = ssub.s32 1, %s13
  %s16 = scalar_select 0, %s15, %s13
  $region1: #{flownet_forward.1} parent=0
    #allocation2 [shape = 'u8[1024]{0}', space=vmem, size = 0x400, scoped, tag = 'output window, operand 0, single buffered']
    #allocation3 [shape = 's32[1]{0}', space=sflag, size = 0x4, scoped, tag = 'scoped memory for flownet_forward.1']
    %17 = vsyncpa [#allocation3], 0
    // Predicated region
    $region2: #{flownet_forward.1} parent=1 // pred_check
      _
    $region3: #{flownet_forward.1} parent=1 // pred_check_branch
      %19 = sbr.rel (0) target = $region5
    $region4: #{flownet_forward.1} parent=1 // pred_region
      _
    $region5: #{flownet_forward.1} parent=1 // pred_fallthru
      _
    // Predicated region
    $region6: #{flownet_forward.1} parent=1 // pred_check
      _
    $region7: #{flownet_forward.1} parent=1 // pred_check_branch
      %21 = sbr.rel (0) target = $region9
    $region8: #{flownet_forward.1} parent=1 // pred_region
      _
    $region9: #{flownet_forward.1} parent=1 // pred_fallthru
      _
    // Predicated region
    $region10: #{flownet_forward.1} parent=1 // pred_check
      _
    $region11: #{flownet_forward.1} parent=1 // pred_check_branch
      %23 = sbr.rel (0) target = $region13
    $region12: #{flownet_forward.1} parent=1 // pred_region
      _
    $region13: #{flownet_forward.1} parent=1 // pred_fallthru
      _
    // Predicated region
    $region14: #{flownet_forward.1} parent=1 // pred_check
      _
    $region15: #{flownet_forward.1} parent=1 // pred_check_branch
      %25 = sbr.rel (0) target = $region17
    $region16: #{flownet_forward.1} parent=1 // pred_region
      _
    $region17: #{flownet_forward.1} parent=1 // pred_fallthru
      _
    // Predicated region
    $region18: #{flownet_forward.1} parent=1 // pred_check
      _
    $region19: #{flownet_forward.1} parent=1 // pred_check_branch
      %27 = sbr.rel (0) target = $region21
    $region20: #{flownet_forward.1} parent=1 // pred_region
      _
    $region21: #{flownet_forward.1} parent=1 // pred_fallthru
      _
    // Predicated region
    $region22: #{flownet_forward.1} parent=1 // pred_check
      _
    $region23: #{flownet_forward.1} parent=1 // pred_check_branch
      %29 = sbr.rel (0) target = $region25
    $region24: #{flownet_forward.1} parent=1 // pred_region
      _
    $region25: #{flownet_forward.1} parent=1 // pred_fallthru
      _
    // Predicated region
    $region26: #{flownet_forward.1} parent=1 // pred_check
      _
    $region27: #{flownet_forward.1} parent=1 // pred_check_branch
      %31 = sbr.rel (0) target = $region29
    $region28: #{flownet_forward.1} parent=1 // pred_region
      _
    $region29: #{flownet_forward.1} parent=1 // pred_fallthru
      _
    // Predicated region
    $region30: #{flownet_forward.1} parent=1 // pred_check
      _
    $region31: #{flownet_forward.1} parent=1 // pred_check_branch
      %33 = sbr.rel (0) target = $region33
    $region32: #{flownet_forward.1} parent=1 // pred_region
      _
    $region33: #{flownet_forward.1} parent=1 // pred_fallthru
      _
    // Predicated region
    $region34: #{flownet_forward.1} parent=1 // pred_check
      _
    $region35: #{flownet_forward.1} parent=1 // pred_check_branch
      %35 = sbr.rel (0) target = $region37
    $region36: #{flownet_forward.1} parent=1 // pred_region
      _
    $region37: #{flownet_forward.1} parent=1 // pred_fallthru
      _
    // Predicated region
    $region38: #{flownet_forward.1} parent=1 // pred_check
      _
    $region39: #{flownet_forward.1} parent=1 // pred_check_branch
      %37 = sbr.rel (0) target = $region41
    $region40: #{flownet_forward.1} parent=1 // pred_region
      _
    $region41: #{flownet_forward.1} parent=1 // pred_fallthru
      _
    // Predicated region
    $region42: #{flownet_forward.1} parent=1 // pred_check
      _
    $region43: #{flownet_forward.1} parent=1 // pred_check_branch
      %39 = sbr.rel (0) target = $region45
    $region44: #{flownet_forward.1} parent=1 // pred_region
      _
    $region45: #{flownet_forward.1} parent=1 // pred_fallthru
      _
    // Predicated region
    $region46: #{flownet_forward.1} parent=1 // pred_check
      _
    $region47: #{flownet_forward.1} parent=1 // pred_check_branch
      %41 = sbr.rel (0) target = $region49
    $region48: #{flownet_forward.1} parent=1 // pred_region
      _
    $region49: #{flownet_forward.1} parent=1 // pred_fallthru
      _
    %v43 = vld [vmem:[%s0] sm:$0xff]
    %v44 = vld [vmem:[%s0 + $0x8] sm:$0xff]
    %v45 = vlaneseq
    %v46 = vshrl.u32 %v45, 7
    %v47 = vlaneseq
    %v48 = vand.u32 %v47, 127
    %vm49 = vcmp.gt.s32.totalorder %v48, %v46
    %v50 = vsel %vm49, -1e+30, 0.0
    %v51 = vld [vmem:[%s9] sm:$0xff]
    %v52 = vld [vmem:[%s9 + $0x8] sm:$0xff]
    %v53 = vld [vmem:[%s9 + $0x10] sm:$0xff]
    %v54 = vld [vmem:[%s9 + $0x18] sm:$0xff]
    %v55 = vld [vmem:[%s9 + $0x20] sm:$0xff]
    %v56 = vld [vmem:[%s9 + $0x28] sm:$0xff]
    %v57 = vld [vmem:[%s9 + $0x30] sm:$0xff]
    %v58 = vld [vmem:[%s9 + $0x38] sm:$0xff]
    %v59 = vld [vmem:[%s9 + $0x40] sm:$0xff]
    %v60 = vld [vmem:[%s9 + $0x48] sm:$0xff]
    %v61 = vld [vmem:[%s9 + $0x50] sm:$0xff]
    %v62 = vld [vmem:[%s9 + $0x58] sm:$0xff]
    %v63 = vld [vmem:[%s9 + $0x60] sm:$0xff]
    %v64 = vld [vmem:[%s9 + $0x68] sm:$0xff]
    %v65 = vld [vmem:[%s9 + $0x70] sm:$0xff]
    %v66 = vld [vmem:[%s9 + $0x78] sm:$0xff]
    %v67 = vpack.c.bf16 %v44, %v43
    %v68 = vld [vmem:[%s1] sm:$0xff]
    %v69 = vld [vmem:[%s1 + $0x8] sm:$0xff]
    %v70 = vld [vmem:[%s1 + $0x10] sm:$0xff]
    %v71 = vld [vmem:[%s1 + $0x18] sm:$0xff]
    %v72 = vld [vmem:[%s1 + $0x20] sm:$0xff]
    %v73 = vld [vmem:[%s1 + $0x28] sm:$0xff]
    %v74 = vld [vmem:[%s1 + $0x30] sm:$0xff]
    %v75 = vld [vmem:[%s1 + $0x38] sm:$0xff]
    %v76 = vlaneseq
    %v77 = vshrl.u32 %v76, 7
    %v78 = vsub.s32 0, %v77
    %v79 = vrot.slane %v51, %v78
    %v80 = vlaneseq
    %v81 = vshrl.u32 %v80, 7
    %v82 = vsub.s32 0, %v81
    %v83 = vrot.slane %v52, %v82
    %v92 = vunpack.c.l.b16 %v68
    %v93 = vunpack.c.h.b16 %v68
    %v94 = vunpack.c.l.b16 %v69
    %v95 = vunpack.c.h.b16 %v69
    %v96 = vunpack.c.l.b16 %v70
    %v97 = vunpack.c.h.b16 %v70
    %v98 = vunpack.c.l.b16 %v71
    %v99 = vunpack.c.h.b16 %v71
    %v100 = vunpack.c.l.b16 %v72
    %v101 = vunpack.c.h.b16 %v72
    %v102 = vunpack.c.l.b16 %v73
    %v103 = vunpack.c.h.b16 %v73
    %v104 = vunpack.c.l.b16 %v74
    %v105 = vunpack.c.h.b16 %v74
    %v106 = vunpack.c.l.b16 %v75
    %v107 = vunpack.c.h.b16 %v75
    %v108 = vpack.c.b16 %v94, %v92
    %v109 = vpack.c.b16 %v95, %v93
    %v110 = vpack.c.b16 %v98, %v96
    %v111 = vpack.c.b16 %v99, %v97
    %v112 = vpack.c.b16 %v102, %v100
    %v113 = vpack.c.b16 %v103, %v101
    %v114 = vpack.c.b16 %v106, %v104
    %v115 = vpack.c.b16 %v107, %v105
    %vm124 = vcmask 523264
    %v126 = vsel %vm124, %v67, 0
    %128 = vmatprep.subr.bf16.mxu0 %v109
    %129 = vmatpush1.bf16.msra.mxu0 %v108
    %130 = vmatprep.subr.bf16.mxu0 %v111
    %131 = vmatpush1.bf16.msra.mxu0 %v110
    %132 = vmatprep.subr.bf16.mxu0 %v113
    %133 = vmatpush1.bf16.msra.mxu0 %v112
    %134 = vmatprep.subr.bf16.mxu0 %v115
    %135 = vmatpush1.bf16.msra.mxu0 %v114
    %136 = vmatprep.subr.bf16.mxu0 0
    %137 = vmatpush1.bf16.msra.mxu0 0
    %138 = vmatprep.subr.bf16.mxu0 0
    %139 = vmatpush1.bf16.msra.mxu0 0
    %140 = vmatprep.subr.bf16.mxu0 0
    %141 = vmatpush1.bf16.msra.mxu0 0
    %142 = vmatprep.subr.bf16.mxu0 0
    %143 = vmatpush1.bf16.msra.mxu0 0
    %144 = vmatprep.subr.bf16.mxu0 0
    %145 = vmatpush1.bf16.msra.mxu0 0
    %146 = vmatprep.subr.bf16.mxu0 0
    %147 = vmatpush1.bf16.msra.mxu0 0
    %148 = vmatprep.subr.bf16.mxu0 0
    %149 = vmatpush1.bf16.msra.mxu0 0
    %150 = vmatprep.subr.bf16.mxu0 0
    %151 = vmatpush1.bf16.msra.mxu0 0
    %152 = vmatprep.subr.bf16.mxu0 0
    %153 = vmatpush1.bf16.msra.mxu0 0
    %154 = vmatprep.subr.bf16.mxu0 0
    %155 = vmatpush1.bf16.msra.mxu0 0
    %156 = vmatprep.subr.bf16.mxu0 0
    %157 = vmatpush1.bf16.msra.mxu0 0
    %158 = vmatprep.subr.bf16.mxu0 0
    %159 = vmatpush1.bf16.msra.mxu0 0
    %160 = vmatprep.mubr.bf16.mxu0 0
    %161 = vmatmul.mubr.bf16.gmra.mrb[0].mxu0 %v126
    %v162 = vpop.f32.mrb[0].mxu0
    %v163 = vadd.f32 %v79, %v162
    %v164 = vpop.f32.mrb[0].mxu0
    %v165 = vadd.f32 %v83, %v164
    %v166 = vpop.f32.mrb[0].mxu0
    %v167 = vadd.f32 %v79, %v166
    %v168 = vpop.f32.mrb[0].mxu0
    %v169 = vadd.f32 %v83, %v168
    %170 = vdwg.mxu0
    %173 = vrot.lane.b32.xlu0 %v163, 96
    %v174 = vpop.permute.xlu0 %173
    %175 = vrot.lane.b32.xlu0 %v167, 96
    %v176 = vpop.permute.xlu0 %175
    %v179 = vpack.c.bf16 %v163, %v163
    %v180 = vpack.c.bf16 %v167, %v167
    %v181 = vpack.c.bf16 %v174, %v174
    %v182 = vpack.c.bf16 %v176, %v176
    %185 = vrot.lane.b32.xlu0 %v165, 96
    %v186 = vpop.permute.xlu0 %185
    %187 = vrot.lane.b32.xlu0 %v169, 96
    %v188 = vpop.permute.xlu0 %187
    %v191 = vpack.c.bf16 %v165, %v165
    %v192 = vpack.c.bf16 %v169, %v169
    %v193 = vpack.c.bf16 %v186, %v186
    %v194 = vpack.c.bf16 %v188, %v188
    %196 = vrot.lane.b32.xlu0 %v179, 64
    %v197 = vpop.permute.xlu0 %196
    %vm198 = vcmask 261120
    %v200 = vsel %vm198, %v179, 0
    %v203 = vsel %vm198, %v197, 0
    %205 = vmatprep.subr.bf16.mxu0 0
    %206 = vmatpush1.bf16.xpose.msra.mxu0 %v203
    %207 = vmatprep.subr.bf16.mxu0 0
    %208 = vmatpush1.bf16.xpose.msra.mxu0 0
    %209 = vmatprep.subr.bf16.mxu0 0
    %210 = vmatpush1.bf16.xpose.msra.mxu0 0
    %211 = vmatprep.subr.bf16.mxu0 0
    %212 = vmatpush1.bf16.xpose.msra.mxu0 0
    %213 = vmatprep.subr.bf16.mxu0 0
    %214 = vmatpush1.bf16.xpose.msra.mxu0 0
    %215 = vmatprep.subr.bf16.mxu0 0
    %216 = vmatpush1.bf16.xpose.msra.mxu0 0
    %217 = vmatprep.subr.bf16.mxu0 0
    %218 = vmatpush1.bf16.xpose.msra.mxu0 0
    %219 = vmatprep.subr.bf16.mxu0 0
    %220 = vmatpush1.bf16.xpose.msra.mxu0 0
    %221 = vmatprep.subr.bf16.mxu0 0
    %222 = vmatpush1.bf16.xpose.msra.mxu0 0
    %223 = vmatprep.subr.bf16.mxu0 0
    %224 = vmatpush1.bf16.xpose.msra.mxu0 0
    %225 = vmatprep.subr.bf16.mxu0 0
    %226 = vmatpush1.bf16.xpose.msra.mxu0 0
    %227 = vmatprep.subr.bf16.mxu0 0
    %228 = vmatpush1.bf16.xpose.msra.mxu0 0
    %229 = vmatprep.subr.bf16.mxu0 0
    %230 = vmatpush1.bf16.xpose.msra.mxu0 0
    %231 = vmatprep.subr.bf16.mxu0 0
    %232 = vmatpush1.bf16.xpose.msra.mxu0 0
    %233 = vmatprep.subr.bf16.mxu0 0
    %234 = vmatpush1.bf16.xpose.msra.mxu0 0
    %235 = vmatprep.subr.bf16.mxu0 0
    %236 = vmatpush1.bf16.xpose.msra.mxu0 0
    %237 = vmatprep.mubr.bf16.mxu0 0
    %238 = vmatmul.mubr.bf16.gmra.mrb[0].mxu0 %v200
    %v239 = vpop.f32.mrb[0].mxu0
    %v240 = vadd.f32 %v50, %v239
    %v241 = vpop.f32.mrb[0].mxu0
    %v242 = vpop.f32.mrb[0].mxu0
    %v243 = vpop.f32.mrb[0].mxu0
    %244 = vdwg.mxu0
    %246 = vrot.lane.b32.xlu0 %v180, 64
    %v247 = vpop.permute.xlu0 %246
    %v249 = vsel %vm198, %v180, 0
    %v252 = vsel %vm198, %v247, 0
    %254 = vmatprep.subr.bf16.mxu0 0
    %255 = vmatpush1.bf16.xpose.msra.mxu0 %v252
    %256 = vmatprep.subr.bf16.mxu0 0
    %257 = vmatpush1.bf16.xpose.msra.mxu0 0
    %258 = vmatprep.subr.bf16.mxu0 0
    %259 = vmatpush1.bf16.xpose.msra.mxu0 0
    %260 = vmatprep.subr.bf16.mxu0 0
    %261 = vmatpush1.bf16.xpose.msra.mxu0 0
    %262 = vmatprep.subr.bf16.mxu0 0
    %263 = vmatpush1.bf16.xpose.msra.mxu0 0
    %264 = vmatprep.subr.bf16.mxu0 0
    %265 = vmatpush1.bf16.xpose.msra.mxu0 0
    %266 = vmatprep.subr.bf16.mxu0 0
    %267 = vmatpush1.bf16.xpose.msra.mxu0 0
    %268 = vmatprep.subr.bf16.mxu0 0
    %269 = vmatpush1.bf16.xpose.msra.mxu0 0
    %270 = vmatprep.subr.bf16.mxu0 0
    %271 = vmatpush1.bf16.xpose.msra.mxu0 0
    %272 = vmatprep.subr.bf16.mxu0 0
    %273 = vmatpush1.bf16.xpose.msra.mxu0 0
    %274 = vmatprep.subr.bf16.mxu0 0
    %275 = vmatpush1.bf16.xpose.msra.mxu0 0
    %276 = vmatprep.subr.bf16.mxu0 0
    %277 = vmatpush1.bf16.xpose.msra.mxu0 0
    %278 = vmatprep.subr.bf16.mxu0 0
    %279 = vmatpush1.bf16.xpose.msra.mxu0 0
    %280 = vmatprep.subr.bf16.mxu0 0
    %281 = vmatpush1.bf16.xpose.msra.mxu0 0
    %282 = vmatprep.subr.bf16.mxu0 0
    %283 = vmatpush1.bf16.xpose.msra.mxu0 0
    %284 = vmatprep.subr.bf16.mxu0 0
    %285 = vmatpush1.bf16.xpose.msra.mxu0 0
    %286 = vmatprep.mubr.bf16.mxu0 0
    %287 = vmatmul.mubr.bf16.gmra.mrb[0].mxu0 %v249
    %v288 = vpop.f32.mrb[0].mxu0
    %v289 = vadd.f32 %v50, %v288
    %v290 = vpop.f32.mrb[0].mxu0
    %v291 = vpop.f32.mrb[0].mxu0
    %v292 = vpop.f32.mrb[0].mxu0
    %293 = vdwg.mxu0
    %295 = vrot.lane.b32.xlu0 %v181, 64
    %v296 = vpop.permute.xlu0 %295
    %v298 = vsel %vm198, %v181, 0
    %v301 = vsel %vm198, %v296, 0
    %303 = vmatprep.subr.bf16.mxu0 0
    %304 = vmatpush1.bf16.xpose.msra.mxu0 %v301
    %305 = vmatprep.subr.bf16.mxu0 0
    %306 = vmatpush1.bf16.xpose.msra.mxu0 0
    %307 = vmatprep.subr.bf16.mxu0 0
    %308 = vmatpush1.bf16.xpose.msra.mxu0 0
    %309 = vmatprep.subr.bf16.mxu0 0
    %310 = vmatpush1.bf16.xpose.msra.mxu0 0
    %311 = vmatprep.subr.bf16.mxu0 0
    %312 = vmatpush1.bf16.xpose.msra.mxu0 0
    %313 = vmatprep.subr.bf16.mxu0 0
    %314 = vmatpush1.bf16.xpose.msra.mxu0 0
    %315 = vmatprep.subr.bf16.mxu0 0
    %316 = vmatpush1.bf16.xpose.msra.mxu0 0
    %317 = vmatprep.subr.bf16.mxu0 0
    %318 = vmatpush1.bf16.xpose.msra.mxu0 0
    %319 = vmatprep.subr.bf16.mxu0 0
    %320 = vmatpush1.bf16.xpose.msra.mxu0 0
    %321 = vmatprep.subr.bf16.mxu0 0
    %322 = vmatpush1.bf16.xpose.msra.mxu0 0
    %323 = vmatprep.subr.bf16.mxu0 0
    %324 = vmatpush1.bf16.xpose.msra.mxu0 0
    %325 = vmatprep.subr.bf16.mxu0 0
    %326 = vmatpush1.bf16.xpose.msra.mxu0 0
    %327 = vmatprep.subr.bf16.mxu0 0
    %328 = vmatpush1.bf16.xpose.msra.mxu0 0
    %329 = vmatprep.subr.bf16.mxu0 0
    %330 = vmatpush1.bf16.xpose.msra.mxu0 0
    %331 = vmatprep.subr.bf16.mxu0 0
    %332 = vmatpush1.bf16.xpose.msra.mxu0 0
    %333 = vmatprep.subr.bf16.mxu0 0
    %334 = vmatpush1.bf16.xpose.msra.mxu0 0
    %335 = vmatprep.mubr.bf16.mxu0 0
    %336 = vmatmul.mubr.bf16.gmra.mrb[0].mxu0 %v298
    %v337 = vpop.f32.mrb[0].mxu0
    %v338 = vadd.f32 %v50, %v337
    %v339 = vpop.f32.mrb[0].mxu0
    %v340 = vpop.f32.mrb[0].mxu0
    %v341 = vpop.f32.mrb[0].mxu0
    %342 = vdwg.mxu0
    %344 = vrot.lane.b32.xlu0 %v182, 64
    %v345 = vpop.permute.xlu0 %344
    %v347 = vsel %vm198, %v182, 0
    %v350 = vsel %vm198, %v345, 0
    %352 = vmatprep.subr.bf16.mxu0 0
    %353 = vmatpush1.bf16.xpose.msra.mxu0 %v350
    %354 = vmatprep.subr.bf16.mxu0 0
    %355 = vmatpush1.bf16.xpose.msra.mxu0 0
    %356 = vmatprep.subr.bf16.mxu0 0
    %357 = vmatpush1.bf16.xpose.msra.mxu0 0
    %358 = vmatprep.subr.bf16.mxu0 0
    %359 = vmatpush1.bf16.xpose.msra.mxu0 0
    %360 = vmatprep.subr.bf16.mxu0 0
    %361 = vmatpush1.bf16.xpose.msra.mxu0 0
    %362 = vmatprep.subr.bf16.mxu0 0
    %363 = vmatpush1.bf16.xpose.msra.mxu0 0
    %364 = vmatprep.subr.bf16.mxu0 0
    %365 = vmatpush1.bf16.xpose.msra.mxu0 0
    %366 = vmatprep.subr.bf16.mxu0 0
    %367 = vmatpush1.bf16.xpose.msra.mxu0 0
    %368 = vmatprep.subr.bf16.mxu0 0
    %369 = vmatpush1.bf16.xpose.msra.mxu0 0
    %370 = vmatprep.subr.bf16.mxu0 0
    %371 = vmatpush1.bf16.xpose.msra.mxu0 0
    %372 = vmatprep.subr.bf16.mxu0 0
    %373 = vmatpush1.bf16.xpose.msra.mxu0 0
    %374 = vmatprep.subr.bf16.mxu0 0
    %375 = vmatpush1.bf16.xpose.msra.mxu0 0
    %376 = vmatprep.subr.bf16.mxu0 0
    %377 = vmatpush1.bf16.xpose.msra.mxu0 0
    %378 = vmatprep.subr.bf16.mxu0 0
    %379 = vmatpush1.bf16.xpose.msra.mxu0 0
    %380 = vmatprep.subr.bf16.mxu0 0
    %381 = vmatpush1.bf16.xpose.msra.mxu0 0
    %382 = vmatprep.subr.bf16.mxu0 0
    %383 = vmatpush1.bf16.xpose.msra.mxu0 0
    %384 = vmatprep.mubr.bf16.mxu0 0
    %385 = vmatmul.mubr.bf16.gmra.mrb[0].mxu0 %v347
    %v386 = vpop.f32.mrb[0].mxu0
    %v387 = vadd.f32 %v50, %v386
    %v388 = vpop.f32.mrb[0].mxu0
    %v389 = vpop.f32.mrb[0].mxu0
    %v390 = vpop.f32.mrb[0].mxu0
    %391 = vdwg.mxu0
    %vm392 = vcmask 64512
    %v393 = vsel %vm392, %v240, -inf
    %394 = vmax.xlane.f32.xlu0 %v393
    %v395 = vpop.xlane.xlu0 %394
    %v396 = vsel %vm392, %v289, -inf
    %397 = vmax.xlane.f32.xlu0 %v396
    %v398 = vpop.xlane.xlu0 %397
    %v399 = vsel %vm392, %v338, -inf
    %400 = vmax.xlane.f32.xlu0 %v399
    %v401 = vpop.xlane.xlu0 %400
    %v402 = vsel %vm392, %v387, -inf
    %403 = vmax.xlane.f32.xlu0 %v402
    %v404 = vpop.xlane.xlu0 %403
    %v405 = vsub.f32 %v240, %v395
    %v406 = vsub.f32 %v289, %v398
    %v407 = vsub.f32 %v338, %v401
    %v408 = vsub.f32 %v387, %v404
    %v409 = vmul.f32 %v405, 1.442695
    %v410 = vpow.pop %v409
    %v411 = vmul.f32 %v406, 1.442695
    %v412 = vpow.pop %v411
    %v413 = vmul.f32 %v407, 1.442695
    %v414 = vpow.pop %v413
    %v415 = vmul.f32 %v408, 1.442695
    %v416 = vpow.pop %v415
    %v417 = vsel %vm392, %v410, 0.0
    %418 = vadd.xlane.f32.xlu0 %v417
    %v419 = vpop.xlane.xlu0 %418
    %v420 = vsel %vm392, %v412, 0.0
    %421 = vadd.xlane.f32.xlu0 %v420
    %v422 = vpop.xlane.xlu0 %421
    %v423 = vsel %vm392, %v414, 0.0
    %424 = vadd.xlane.f32.xlu0 %v423
    %v425 = vpop.xlane.xlu0 %424
    %v426 = vsel %vm392, %v416, 0.0
    %427 = vadd.xlane.f32.xlu0 %v426
    %v428 = vpop.xlane.xlu0 %427
    %v429 = vrcp.pop %v419
    %v430 = vrcp.pop %v422
    %v431 = vrcp.pop %v425
    %v432 = vrcp.pop %v428
    %v433 = vmul.f32 %v410, %v429
    %v434 = vmul.f32 %v412, %v430
    %v435 = vmul.f32 %v414, %v431
    %v436 = vmul.f32 %v416, %v432
    %v437 = vpack.c.bf16 %v433, %v433
    %v438 = vpack.c.bf16 %v434, %v434
    %v439 = vpack.c.bf16 %v435, %v435
    %v440 = vpack.c.bf16 %v436, %v436
    %v442 = vsel %vm392, %v437, 0
    %vm444 = vcmask 1043456
    %v446 = vsel %vm444, %v191, 0
    %448 = vmatprep.subr.bf16.mxu0 0
    %449 = vmatpush1.bf16.msra.mxu0 %v446
    %450 = vmatprep.subr.bf16.mxu0 0
    %451 = vmatpush1.bf16.msra.mxu0 0
    %452 = vmatprep.subr.bf16.mxu0 0
    %453 = vmatpush1.bf16.msra.mxu0 0
    %454 = vmatprep.subr.bf16.mxu0 0
    %455 = vmatpush1.bf16.msra.mxu0 0
    %456 = vmatprep.subr.bf16.mxu0 0
    %457 = vmatpush1.bf16.msra.mxu0 0
    %458 = vmatprep.subr.bf16.mxu0 0
    %459 = vmatpush1.bf16.msra.mxu0 0
    %460 = vmatprep.subr.bf16.mxu0 0
    %461 = vmatpush1.bf16.msra.mxu0 0
    %462 = vmatprep.subr.bf16.mxu0 0
    %463 = vmatpush1.bf16.msra.mxu0 0
    %464 = vmatprep.subr.bf16.mxu0 0
    %465 = vmatpush1.bf16.msra.mxu0 0
    %466 = vmatprep.subr.bf16.mxu0 0
    %467 = vmatpush1.bf16.msra.mxu0 0
    %468 = vmatprep.subr.bf16.mxu0 0
    %469 = vmatpush1.bf16.msra.mxu0 0
    %470 = vmatprep.subr.bf16.mxu0 0
    %471 = vmatpush1.bf16.msra.mxu0 0
    %472 = vmatprep.subr.bf16.mxu0 0
    %473 = vmatpush1.bf16.msra.mxu0 0
    %474 = vmatprep.subr.bf16.mxu0 0
    %475 = vmatpush1.bf16.msra.mxu0 0
    %476 = vmatprep.subr.bf16.mxu0 0
    %477 = vmatpush1.bf16.msra.mxu0 0
    %478 = vmatprep.subr.bf16.mxu0 0
    %479 = vmatpush1.bf16.msra.mxu0 0
    %480 = vmatprep.mubr.bf16.mxu0 0
    %481 = vmatmul.mubr.bf16.gmra.mrb[0].mxu0 %v442
    %v482 = vpop.f32.mrb[0].mxu0
    %v483 = vadd.f32 0.0, %v482
    %v484 = vpop.f32.mrb[0].mxu0
    %v485 = vpop.f32.mrb[0].mxu0
    %v486 = vpop.f32.mrb[0].mxu0
    %487 = vdwg.mxu0
    %v489 = vsel %vm392, %v438, 0
    %v492 = vsel %vm444, %v192, 0
    %494 = vmatprep.subr.bf16.mxu0 0
    %495 = vmatpush1.bf16.msra.mxu0 %v492
    %496 = vmatprep.subr.bf16.mxu0 0
    %497 = vmatpush1.bf16.msra.mxu0 0
    %498 = vmatprep.subr.bf16.mxu0 0
    %499 = vmatpush1.bf16.msra.mxu0 0
    %500 = vmatprep.subr.bf16.mxu0 0
    %501 = vmatpush1.bf16.msra.mxu0 0
    %502 = vmatprep.subr.bf16.mxu0 0
    %503 = vmatpush1.bf16.msra.mxu0 0
    %504 = vmatprep.subr.bf16.mxu0 0
    %505 = vmatpush1.bf16.msra.mxu0 0
    %506 = vmatprep.subr.bf16.mxu0 0
    %507 = vmatpush1.bf16.msra.mxu0 0
    %508 = vmatprep.subr.bf16.mxu0 0
    %509 = vmatpush1.bf16.msra.mxu0 0
    %510 = vmatprep.subr.bf16.mxu0 0
    %511 = vmatpush1.bf16.msra.mxu0 0
    %512 = vmatprep.subr.bf16.mxu0 0
    %513 = vmatpush1.bf16.msra.mxu0 0
    %514 = vmatprep.subr.bf16.mxu0 0
    %515 = vmatpush1.bf16.msra.mxu0 0
    %516 = vmatprep.subr.bf16.mxu0 0
    %517 = vmatpush1.bf16.msra.mxu0 0
    %518 = vmatprep.subr.bf16.mxu0 0
    %519 = vmatpush1.bf16.msra.mxu0 0
    %520 = vmatprep.subr.bf16.mxu0 0
    %521 = vmatpush1.bf16.msra.mxu0 0
    %522 = vmatprep.subr.bf16.mxu0 0
    %523 = vmatpush1.bf16.msra.mxu0 0
    %524 = vmatprep.subr.bf16.mxu0 0
    %525 = vmatpush1.bf16.msra.mxu0 0
    %526 = vmatprep.mubr.bf16.mxu0 0
    %527 = vmatmul.mubr.bf16.gmra.mrb[0].mxu0 %v489
    %v528 = vpop.f32.mrb[0].mxu0
    %v529 = vadd.f32 0.0, %v528
    %v530 = vpop.f32.mrb[0].mxu0
    %v531 = vpop.f32.mrb[0].mxu0
    %v532 = vpop.f32.mrb[0].mxu0
    %533 = vdwg.mxu0
    %v535 = vsel %vm392, %v439, 0
    %v538 = vsel %vm444, %v193, 0
    %540 = vmatprep.subr.bf16.mxu0 0
    %541 = vmatpush1.bf16.msra.mxu0 %v538
    %542 = vmatprep.subr.bf16.mxu0 0
    %543 = vmatpush1.bf16.msra.mxu0 0
    %544 = vmatprep.subr.bf16.mxu0 0
    %545 = vmatpush1.bf16.msra.mxu0 0
    %546 = vmatprep.subr.bf16.mxu0 0
    %547 = vmatpush1.bf16.msra.mxu0 0
    %548 = vmatprep.subr.bf16.mxu0 0
    %549 = vmatpush1.bf16.msra.mxu0 0
    %550 = vmatprep.subr.bf16.mxu0 0
    %551 = vmatpush1.bf16.msra.mxu0 0
    %552 = vmatprep.subr.bf16.mxu0 0
    %553 = vmatpush1.bf16.msra.mxu0 0
    %554 = vmatprep.subr.bf16.mxu0 0
    %555 = vmatpush1.bf16.msra.mxu0 0
    %556 = vmatprep.subr.bf16.mxu0 0
    %557 = vmatpush1.bf16.msra.mxu0 0
    %558 = vmatprep.subr.bf16.mxu0 0
    %559 = vmatpush1.bf16.msra.mxu0 0
    %560 = vmatprep.subr.bf16.mxu0 0
    %561 = vmatpush1.bf16.msra.mxu0 0
    %562 = vmatprep.subr.bf16.mxu0 0
    %563 = vmatpush1.bf16.msra.mxu0 0
    %564 = vmatprep.subr.bf16.mxu0 0
    %565 = vmatpush1.bf16.msra.mxu0 0
    %566 = vmatprep.subr.bf16.mxu0 0
    %567 = vmatpush1.bf16.msra.mxu0 0
    %568 = vmatprep.subr.bf16.mxu0 0
    %569 = vmatpush1.bf16.msra.mxu0 0
    %570 = vmatprep.subr.bf16.mxu0 0
    %571 = vmatpush1.bf16.msra.mxu0 0
    %572 = vmatprep.mubr.bf16.mxu0 0
    %573 = vmatmul.mubr.bf16.gmra.mrb[0].mxu0 %v535
    %v574 = vpop.f32.mrb[0].mxu0
    %v575 = vadd.f32 0.0, %v574
    %v576 = vpop.f32.mrb[0].mxu0
    %v577 = vpop.f32.mrb[0].mxu0
    %v578 = vpop.f32.mrb[0].mxu0
    %579 = vdwg.mxu0
    %v581 = vsel %vm392, %v440, 0
    %v584 = vsel %vm444, %v194, 0
    %586 = vmatprep.subr.bf16.mxu0 0
    %587 = vmatpush1.bf16.msra.mxu0 %v584
    %588 = vmatprep.subr.bf16.mxu0 0
    %589 = vmatpush1.bf16.msra.mxu0 0
    %590 = vmatprep.subr.bf16.mxu0 0
    %591 = vmatpush1.bf16.msra.mxu0 0
    %592 = vmatprep.subr.bf16.mxu0 0
    %593 = vmatpush1.bf16.msra.mxu0 0
    %594 = vmatprep.subr.bf16.mxu0 0
    %595 = vmatpush1.bf16.msra.mxu0 0
    %596 = vmatprep.subr.bf16.mxu0 0
    %597 = vmatpush1.bf16.msra.mxu0 0
    %598 = vmatprep.subr.bf16.mxu0 0
    %599 = vmatpush1.bf16.msra.mxu0 0
    %600 = vmatprep.subr.bf16.mxu0 0
    %601 = vmatpush1.bf16.msra.mxu0 0
    %602 = vmatprep.subr.bf16.mxu0 0
    %603 = vmatpush1.bf16.msra.mxu0 0
    %604 = vmatprep.subr.bf16.mxu0 0
    %605 = vmatpush1.bf16.msra.mxu0 0
    %606 = vmatprep.subr.bf16.mxu0 0
    %607 = vmatpush1.bf16.msra.mxu0 0
    %608 = vmatprep.subr.bf16.mxu0 0
    %609 = vmatpush1.bf16.msra.mxu0 0
    %610 = vmatprep.subr.bf16.mxu0 0
    %611 = vmatpush1.bf16.msra.mxu0 0
    %612 = vmatprep.subr.bf16.mxu0 0
    %613 = vmatpush1.bf16.msra.mxu0 0
    %614 = vmatprep.subr.bf16.mxu0 0
    %615 = vmatpush1.bf16.msra.mxu0 0
    %616 = vmatprep.subr.bf16.mxu0 0
    %617 = vmatpush1.bf16.msra.mxu0 0
    %618 = vmatprep.mubr.bf16.mxu0 0
    %619 = vmatmul.mubr.bf16.gmra.mrb[0].mxu0 %v581
    %v620 = vpop.f32.mrb[0].mxu0
    %v621 = vadd.f32 0.0, %v620
    %v622 = vpop.f32.mrb[0].mxu0
    %v623 = vpop.f32.mrb[0].mxu0
    %v624 = vpop.f32.mrb[0].mxu0
    %625 = vdwg.mxu0
    %628 = vrot.lane.b32.xlu0 %v575, 32
    %v629 = vpop.permute.xlu0 %628
    %630 = vrot.lane.b32.xlu0 %v621, 32
    %v631 = vpop.permute.xlu0 %630
    %v634 = vsel %vm198, %v483, %v629
    %v635 = vsel %vm198, %v529, %v631
    %v636 = vpack.c.bf16 %v635, %v634
    %v637 = vld [vmem:[%s2] sm:$0xf]
    %v638 = vld [vmem:[%s2 + $0x4] sm:$0xf]
    %v639 = vld [vmem:[%s2 + $0x8] sm:$0xf]
    %v640 = vld [vmem:[%s2 + $0xc] sm:$0xf]
    %v641 = vld [vmem:[%s2 + $0x10] sm:$0xf]
    %v642 = vld [vmem:[%s2 + $0x14] sm:$0xf]
    %v643 = vld [vmem:[%s2 + $0x18] sm:$0xf]
    %v644 = vld [vmem:[%s2 + $0x1c] sm:$0xf]
    %v645 = vlaneseq
    %v646 = vshrl.u32 %v645, 7
    %v647 = vsub.s32 1, %v646
    %v648 = vrot.slane %v51, %v647
    %v657 = vunpack.c.l.b16 %v637
    %v658 = vunpack.c.l.b16 %v638
    %v659 = vunpack.c.l.b16 %v639
    %v660 = vunpack.c.l.b16 %v640
    %v661 = vunpack.c.l.b16 %v641
    %v662 = vunpack.c.l.b16 %v642
    %v663 = vunpack.c.l.b16 %v643
    %v664 = vunpack.c.l.b16 %v644
    %v665 = vpack.c.b16 %v658, %v657
    %v666 = vpack.c.b16 %v660, %v659
    %v667 = vpack.c.b16 %v662, %v661
    %v668 = vpack.c.b16 %v664, %v663
    %v674 = vsel %vm124, %v636, 0
    %676 = vmatprep.subr.bf16.mxu0 0
    %677 = vmatpush1.bf16.msra.mxu0 %v665
    %678 = vmatprep.subr.bf16.mxu0 0
    %679 = vmatpush1.bf16.msra.mxu0 %v666
    %680 = vmatprep.subr.bf16.mxu0 0
    %681 = vmatpush1.bf16.msra.mxu0 %v667
    %682 = vmatprep.subr.bf16.mxu0 0
    %683 = vmatpush1.bf16.msra.mxu0 %v668
    %684 = vmatprep.subr.bf16.mxu0 0
    %685 = vmatpush1.bf16.msra.mxu0 0
    %686 = vmatprep.subr.bf16.mxu0 0
    %687 = vmatpush1.bf16.msra.mxu0 0
    %688 = vmatprep.subr.bf16.mxu0 0
    %689 = vmatpush1.bf16.msra.mxu0 0
    %690 = vmatprep.subr.bf16.mxu0 0
    %691 = vmatpush1.bf16.msra.mxu0 0
    %692 = vmatprep.subr.bf16.mxu0 0
    %693 = vmatpush1.bf16.msra.mxu0 0
    %694 = vmatprep.subr.bf16.mxu0 0
    %695 = vmatpush1.bf16.msra.mxu0 0
    %696 = vmatprep.subr.bf16.mxu0 0
    %697 = vmatpush1.bf16.msra.mxu0 0
    %698 = vmatprep.subr.bf16.mxu0 0
    %699 = vmatpush1.bf16.msra.mxu0 0
    %700 = vmatprep.subr.bf16.mxu0 0
    %701 = vmatpush1.bf16.msra.mxu0 0
    %702 = vmatprep.subr.bf16.mxu0 0
    %703 = vmatpush1.bf16.msra.mxu0 0
    %704 = vmatprep.subr.bf16.mxu0 0
    %705 = vmatpush1.bf16.msra.mxu0 0
    %706 = vmatprep.subr.bf16.mxu0 0
    %707 = vmatpush1.bf16.msra.mxu0 0
    %708 = vmatprep.mubr.bf16.mxu0 0
    %709 = vmatmul.mubr.bf16.gmra.mrb[0].mxu0 %v674
    %v710 = vpop.f32.mrb[0].mxu0
    %v711 = vadd.f32 %v648, %v710
    %v712 = vpop.f32.mrb[0].mxu0
    %v713 = vpop.f32.mrb[0].mxu0
    %v714 = vadd.f32 %v648, %v713
    %v715 = vpop.f32.mrb[0].mxu0
    %716 = vdwg.mxu0
    %v717 = vadd.f32 %v43, %v711
    %v718 = vadd.f32 %v44, %v714
    %v719 = vsel %vm124, %v717, 0.0
    %720 = vadd.xlane.f32.xlu0 %v719
    %v721 = vpop.xlane.xlu0 %720
    %v722 = vsel %vm124, %v718, 0.0
    %723 = vadd.xlane.f32.xlu0 %v722
    %v724 = vpop.xlane.xlu0 %723
    %v725 = vrcp.pop 64.0
    %v726 = vmul.f32 %v721, %v725
    %v727 = vmul.f32 %v724, %v725
    %v728 = vsub.f32 %v717, %v726
    %v729 = vsub.f32 %v718, %v727
    %v730 = vmul.f32 %v728, %v728
    %v731 = vmul.f32 %v729, %v729
    %v732 = vsel %vm124, %v730, 0.0
    %733 = vadd.xlane.f32.xlu0 %v732
    %v734 = vpop.xlane.xlu0 %733
    %v735 = vsel %vm124, %v731, 0.0
    %736 = vadd.xlane.f32.xlu0 %v735
    %v737 = vpop.xlane.xlu0 %736
    %v738 = vmul.f32 %v734, %v725
    %v739 = vmul.f32 %v737, %v725
    %v740 = vadd.f32 %v738, 1e-05
    %v741 = vadd.f32 %v739, 1e-05
    %v742 = vrsqrt.pop %v740
    %v743 = vrsqrt.pop %v741
    %v744 = vmul.f32 %v728, %v742
    %v745 = vmul.f32 %v729, %v743
    %v746 = vlaneseq
    %v747 = vshrl.u32 %v746, 7
    %v748 = vsub.s32 2, %v747
    %v749 = vrot.slane %v51, %v748
    %v750 = vmul.f32 %v744, %v749
    %v751 = vmul.f32 %v745, %v749
    %v752 = vlaneseq
    %v753 = vshrl.u32 %v752, 7
    %v754 = vsub.s32 3, %v753
    %v755 = vrot.slane %v51, %v754
    %v756 = vadd.f32 %v750, %v755
    %v757 = vadd.f32 %v751, %v755
    %v758 = vpack.c.bf16 %v757, %v756
    %v759 = vld [vmem:[%s3] sm:$0xff]
    %v760 = vld [vmem:[%s3 + $0x8] sm:$0xff]
    %v761 = vld [vmem:[%s3 + $0x10] sm:$0xff]
    %v762 = vld [vmem:[%s3 + $0x18] sm:$0xff]
    %v763 = vld [vmem:[%s3 + $0x20] sm:$0xff]
    %v764 = vld [vmem:[%s3 + $0x28] sm:$0xff]
    %v765 = vld [vmem:[%s3 + $0x30] sm:$0xff]
    %v766 = vld [vmem:[%s3 + $0x38] sm:$0xff]
    %v767 = vld [vmem:[%s3 + $0x40] sm:$0xff]
    %v768 = vld [vmem:[%s3 + $0x48] sm:$0xff]
    %v769 = vld [vmem:[%s3 + $0x50] sm:$0xff]
    %v770 = vld [vmem:[%s3 + $0x58] sm:$0xff]
    %v771 = vld [vmem:[%s3 + $0x60] sm:$0xff]
    %v772 = vld [vmem:[%s3 + $0x68] sm:$0xff]
    %v773 = vld [vmem:[%s3 + $0x70] sm:$0xff]
    %v774 = vld [vmem:[%s3 + $0x78] sm:$0xff]
    %v775 = vld [vmem:[%s3 + $0x80] sm:$0xff]
    %v776 = vld [vmem:[%s3 + $0x88] sm:$0xff]
    %v777 = vld [vmem:[%s3 + $0x90] sm:$0xff]
    %v778 = vld [vmem:[%s3 + $0x98] sm:$0xff]
    %v779 = vld [vmem:[%s3 + $0xa0] sm:$0xff]
    %v780 = vld [vmem:[%s3 + $0xa8] sm:$0xff]
    %v781 = vld [vmem:[%s3 + $0xb0] sm:$0xff]
    %v782 = vld [vmem:[%s3 + $0xb8] sm:$0xff]
    %v783 = vld [vmem:[%s3 + $0xc0] sm:$0xff]
    %v784 = vld [vmem:[%s3 + $0xc8] sm:$0xff]
    %v785 = vld [vmem:[%s3 + $0xd0] sm:$0xff]
    %v786 = vld [vmem:[%s3 + $0xd8] sm:$0xff]
    %v787 = vld [vmem:[%s3 + $0xe0] sm:$0xff]
    %v788 = vld [vmem:[%s3 + $0xe8] sm:$0xff]
    %v789 = vld [vmem:[%s3 + $0xf0] sm:$0xff]
    %v790 = vld [vmem:[%s3 + $0xf8] sm:$0xff]
    %v791 = vld [vmem:[%s3 + $0x100] sm:$0xff]
    %v792 = vld [vmem:[%s3 + $0x108] sm:$0xff]
    %v793 = vld [vmem:[%s3 + $0x110] sm:$0xff]
    %v794 = vld [vmem:[%s3 + $0x118] sm:$0xff]
    %v795 = vld [vmem:[%s3 + $0x120] sm:$0xff]
    %v796 = vld [vmem:[%s3 + $0x128] sm:$0xff]
    %v797 = vld [vmem:[%s3 + $0x130] sm:$0xff]
    %v798 = vld [vmem:[%s3 + $0x138] sm:$0xff]
    %v799 = vld [vmem:[%s3 + $0x140] sm:$0xff]
    %v800 = vld [vmem:[%s3 + $0x148] sm:$0xff]
    %v801 = vld [vmem:[%s3 + $0x150] sm:$0xff]
    %v802 = vld [vmem:[%s3 + $0x158] sm:$0xff]
    %v803 = vld [vmem:[%s3 + $0x160] sm:$0xff]
    %v804 = vld [vmem:[%s3 + $0x168] sm:$0xff]
    %v805 = vld [vmem:[%s3 + $0x170] sm:$0xff]
    %v806 = vld [vmem:[%s3 + $0x178] sm:$0xff]
    %v807 = vld [vmem:[%s3 + $0x180] sm:$0xff]
    %v808 = vld [vmem:[%s3 + $0x188] sm:$0xff]
    %v809 = vld [vmem:[%s3 + $0x190] sm:$0xff]
    %v810 = vld [vmem:[%s3 + $0x198] sm:$0xff]
    %v811 = vld [vmem:[%s3 + $0x1a0] sm:$0xff]
    %v812 = vld [vmem:[%s3 + $0x1a8] sm:$0xff]
    %v813 = vld [vmem:[%s3 + $0x1b0] sm:$0xff]
    %v814 = vld [vmem:[%s3 + $0x1b8] sm:$0xff]
    %v815 = vld [vmem:[%s3 + $0x1c0] sm:$0xff]
    %v816 = vld [vmem:[%s3 + $0x1c8] sm:$0xff]
    %v817 = vld [vmem:[%s3 + $0x1d0] sm:$0xff]
    %v818 = vld [vmem:[%s3 + $0x1d8] sm:$0xff]
    %v819 = vld [vmem:[%s3 + $0x1e0] sm:$0xff]
    %v820 = vld [vmem:[%s3 + $0x1e8] sm:$0xff]
    %v821 = vld [vmem:[%s3 + $0x1f0] sm:$0xff]
    %v822 = vld [vmem:[%s3 + $0x1f8] sm:$0xff]
    %v823 = vlaneseq
    %v824 = vshrl.u32 %v823, 7
    %v825 = vsub.s32 4, %v824
    %v826 = vrot.slane %v51, %v825
    %v827 = vlaneseq
    %v828 = vshrl.u32 %v827, 7
    %v829 = vsub.s32 4, %v828
    %v830 = vrot.slane %v52, %v829
    %v831 = vlaneseq
    %v832 = vshrl.u32 %v831, 7
    %v833 = vsub.s32 4, %v832
    %v834 = vrot.slane %v53, %v833
    %v835 = vlaneseq
    %v836 = vshrl.u32 %v835, 7
    %v837 = vsub.s32 4, %v836
    %v838 = vrot.slane %v54, %v837
    %v839 = vlaneseq
    %v840 = vshrl.u32 %v839, 7
    %v841 = vsub.s32 4, %v840
    %v842 = vrot.slane %v55, %v841
    %v843 = vlaneseq
    %v844 = vshrl.u32 %v843, 7
    %v845 = vsub.s32 4, %v844
    %v846 = vrot.slane %v56, %v845
    %v847 = vlaneseq
    %v848 = vshrl.u32 %v847, 7
    %v849 = vsub.s32 4, %v848
    %v850 = vrot.slane %v57, %v849
    %v851 = vlaneseq
    %v852 = vshrl.u32 %v851, 7
    %v853 = vsub.s32 4, %v852
    %v854 = vrot.slane %v58, %v853
    %v855 = vlaneseq
    %v856 = vshrl.u32 %v855, 7
    %v857 = vsub.s32 4, %v856
    %v858 = vrot.slane %v59, %v857
    %v859 = vlaneseq
    %v860 = vshrl.u32 %v859, 7
    %v861 = vsub.s32 4, %v860
    %v862 = vrot.slane %v60, %v861
    %v863 = vlaneseq
    %v864 = vshrl.u32 %v863, 7
    %v865 = vsub.s32 4, %v864
    %v866 = vrot.slane %v61, %v865
    %v867 = vlaneseq
    %v868 = vshrl.u32 %v867, 7
    %v869 = vsub.s32 4, %v868
    %v870 = vrot.slane %v62, %v869
    %v871 = vlaneseq
    %v872 = vshrl.u32 %v871, 7
    %v873 = vsub.s32 4, %v872
    %v874 = vrot.slane %v63, %v873
    %v875 = vlaneseq
    %v876 = vshrl.u32 %v875, 7
    %v877 = vsub.s32 4, %v876
    %v878 = vrot.slane %v64, %v877
    %v879 = vlaneseq
    %v880 = vshrl.u32 %v879, 7
    %v881 = vsub.s32 4, %v880
    %v882 = vrot.slane %v65, %v881
    %v883 = vlaneseq
    %v884 = vshrl.u32 %v883, 7
    %v885 = vsub.s32 4, %v884
    %v886 = vrot.slane %v66, %v885
    %v951 = vunpack.c.l.b16 %v759
    %v952 = vunpack.c.h.b16 %v759
    %v953 = vunpack.c.l.b16 %v760
    %v954 = vunpack.c.h.b16 %v760
    %v955 = vunpack.c.l.b16 %v761
    %v956 = vunpack.c.h.b16 %v761
    %v957 = vunpack.c.l.b16 %v762
    %v958 = vunpack.c.h.b16 %v762
    %v959 = vunpack.c.l.b16 %v763
    %v960 = vunpack.c.h.b16 %v763
    %v961 = vunpack.c.l.b16 %v764
    %v962 = vunpack.c.h.b16 %v764
    %v963 = vunpack.c.l.b16 %v765
    %v964 = vunpack.c.h.b16 %v765
    %v965 = vunpack.c.l.b16 %v766
    %v966 = vunpack.c.h.b16 %v766
    %v967 = vunpack.c.l.b16 %v767
    %v968 = vunpack.c.h.b16 %v767
    %v969 = vunpack.c.l.b16 %v768
    %v970 = vunpack.c.h.b16 %v768
    %v971 = vunpack.c.l.b16 %v769
    %v972 = vunpack.c.h.b16 %v769
    %v973 = vunpack.c.l.b16 %v770
    %v974 = vunpack.c.h.b16 %v770
    %v975 = vunpack.c.l.b16 %v771
    %v976 = vunpack.c.h.b16 %v771
    %v977 = vunpack.c.l.b16 %v772
    %v978 = vunpack.c.h.b16 %v772
    %v979 = vunpack.c.l.b16 %v773
    %v980 = vunpack.c.h.b16 %v773
    %v981 = vunpack.c.l.b16 %v774
    %v982 = vunpack.c.h.b16 %v774
    %v983 = vunpack.c.l.b16 %v775
    %v984 = vunpack.c.h.b16 %v775
    %v985 = vunpack.c.l.b16 %v776
    %v986 = vunpack.c.h.b16 %v776
    %v987 = vunpack.c.l.b16 %v777
    %v988 = vunpack.c.h.b16 %v777
    %v989 = vunpack.c.l.b16 %v778
    %v990 = vunpack.c.h.b16 %v778
    %v991 = vunpack.c.l.b16 %v779
    %v992 = vunpack.c.h.b16 %v779
    %v993 = vunpack.c.l.b16 %v780
    %v994 = vunpack.c.h.b16 %v780
    %v995 = vunpack.c.l.b16 %v781
    %v996 = vunpack.c.h.b16 %v781
    %v997 = vunpack.c.l.b16 %v782
    %v998 = vunpack.c.h.b16 %v782
    %v999 = vunpack.c.l.b16 %v783
    %v1000 = vunpack.c.h.b16 %v783
    %v1001 = vunpack.c.l.b16 %v784
    %v1002 = vunpack.c.h.b16 %v784
    %v1003 = vunpack.c.l.b16 %v785
    %v1004 = vunpack.c.h.b16 %v785
    %v1005 = vunpack.c.l.b16 %v786
    %v1006 = vunpack.c.h.b16 %v786
    %v1007 = vunpack.c.l.b16 %v787
    %v1008 = vunpack.c.h.b16 %v787
    %v1009 = vunpack.c.l.b16 %v788
    %v1010 = vunpack.c.h.b16 %v788
    %v1011 = vunpack.c.l.b16 %v789
    %v1012 = vunpack.c.h.b16 %v789
    %v1013 = vunpack.c.l.b16 %v790
    %v1014 = vunpack.c.h.b16 %v790
    %v1015 = vunpack.c.l.b16 %v791
    %v1016 = vunpack.c.h.b16 %v791
    %v1017 = vunpack.c.l.b16 %v792
    %v1018 = vunpack.c.h.b16 %v792
    %v1019 = vunpack.c.l.b16 %v793
    %v1020 = vunpack.c.h.b16 %v793
    %v1021 = vunpack.c.l.b16 %v794
    %v1022 = vunpack.c.h.b16 %v794
    %v1023 = vunpack.c.l.b16 %v795
    %v1024 = vunpack.c.h.b16 %v795
    %v1025 = vunpack.c.l.b16 %v796
    %v1026 = vunpack.c.h.b16 %v796
    %v1027 = vunpack.c.l.b16 %v797
    %v1028 = vunpack.c.h.b16 %v797
    %v1029 = vunpack.c.l.b16 %v798
    %v1030 = vunpack.c.h.b16 %v798
    %v1031 = vunpack.c.l.b16 %v799
    %v1032 = vunpack.c.h.b16 %v799
    %v1033 = vunpack.c.l.b16 %v800
    %v1034 = vunpack.c.h.b16 %v800
    %v1035 = vunpack.c.l.b16 %v801
    %v1036 = vunpack.c.h.b16 %v801
    %v1037 = vunpack.c.l.b16 %v802
    %v1038 = vunpack.c.h.b16 %v802
    %v1039 = vunpack.c.l.b16 %v803
    %v1040 = vunpack.c.h.b16 %v803
    %v1041 = vunpack.c.l.b16 %v804
    %v1042 = vunpack.c.h.b16 %v804
    %v1043 = vunpack.c.l.b16 %v805
    %v1044 = vunpack.c.h.b16 %v805
    %v1045 = vunpack.c.l.b16 %v806
    %v1046 = vunpack.c.h.b16 %v806
    %v1047 = vunpack.c.l.b16 %v807
    %v1048 = vunpack.c.h.b16 %v807
    %v1049 = vunpack.c.l.b16 %v808
    %v1050 = vunpack.c.h.b16 %v808
    %v1051 = vunpack.c.l.b16 %v809
    %v1052 = vunpack.c.h.b16 %v809
    %v1053 = vunpack.c.l.b16 %v810
    %v1054 = vunpack.c.h.b16 %v810
    %v1055 = vunpack.c.l.b16 %v811
    %v1056 = vunpack.c.h.b16 %v811
    %v1057 = vunpack.c.l.b16 %v812
    %v1058 = vunpack.c.h.b16 %v812
    %v1059 = vunpack.c.l.b16 %v813
    %v1060 = vunpack.c.h.b16 %v813
    %v1061 = vunpack.c.l.b16 %v814
    %v1062 = vunpack.c.h.b16 %v814
    %v1063 = vunpack.c.l.b16 %v815
    %v1064 = vunpack.c.h.b16 %v815
    %v1065 = vunpack.c.l.b16 %v816
    %v1066 = vunpack.c.h.b16 %v816
    %v1067 = vunpack.c.l.b16 %v817
    %v1068 = vunpack.c.h.b16 %v817
    %v1069 = vunpack.c.l.b16 %v818
    %v1070 = vunpack.c.h.b16 %v818
    %v1071 = vunpack.c.l.b16 %v819
    %v1072 = vunpack.c.h.b16 %v819
    %v1073 = vunpack.c.l.b16 %v820
    %v1074 = vunpack.c.h.b16 %v820
    %v1075 = vunpack.c.l.b16 %v821
    %v1076 = vunpack.c.h.b16 %v821
    %v1077 = vunpack.c.l.b16 %v822
    %v1078 = vunpack.c.h.b16 %v822
    %v1079 = vpack.c.b16 %v967, %v951
    %v1080 = vpack.c.b16 %v968, %v952
    %v1081 = vpack.c.b16 %v969, %v953
    %v1082 = vpack.c.b16 %v970, %v954
    %v1083 = vpack.c.b16 %v971, %v955
    %v1084 = vpack.c.b16 %v972, %v956
    %v1085 = vpack.c.b16 %v973, %v957
    %v1086 = vpack.c.b16 %v974, %v958
    %v1087 = vpack.c.b16 %v975, %v959
    %v1088 = vpack.c.b16 %v976, %v960
    %v1089 = vpack.c.b16 %v977, %v961
    %v1090 = vpack.c.b16 %v978, %v962
    %v1091 = vpack.c.b16 %v979, %v963
    %v1092 = vpack.c.b16 %v980, %v964
    %v1093 = vpack.c.b16 %v981, %v965
    %v1094 = vpack.c.b16 %v982, %v966
    %v1095 = vpack.c.b16 %v999, %v983
    %v1096 = vpack.c.b16 %v1000, %v984
    %v1097 = vpack.c.b16 %v1001, %v985
    %v1098 = vpack.c.b16 %v1002, %v986
    %v1099 = vpack.c.b16 %v1003, %v987
    %v1100 = vpack.c.b16 %v1004, %v988
    %v1101 = vpack.c.b16 %v1005, %v989
    %v1102 = vpack.c.b16 %v1006, %v990
    %v1103 = vpack.c.b16 %v1007, %v991
    %v1104 = vpack.c.b16 %v1008, %v992
    %v1105 = vpack.c.b16 %v1009, %v993
    %v1106 = vpack.c.b16 %v1010, %v994
    %v1107 = vpack.c.b16 %v1011, %v995
    %v1108 = vpack.c.b16 %v1012, %v996
    %v1109 = vpack.c.b16 %v1013, %v997
    %v1110 = vpack.c.b16 %v1014, %v998
    %v1111 = vpack.c.b16 %v1031, %v1015
    %v1112 = vpack.c.b16 %v1032, %v1016
    %v1113 = vpack.c.b16 %v1033, %v1017
    %v1114 = vpack.c.b16 %v1034, %v1018
    %v1115 = vpack.c.b16 %v1035, %v1019
    %v1116 = vpack.c.b16 %v1036, %v1020
    %v1117 = vpack.c.b16 %v1037, %v1021
    %v1118 = vpack.c.b16 %v1038, %v1022
    %v1119 = vpack.c.b16 %v1039, %v1023
    %v1120 = vpack.c.b16 %v1040, %v1024
    %v1121 = vpack.c.b16 %v1041, %v1025
    %v1122 = vpack.c.b16 %v1042, %v1026
    %v1123 = vpack.c.b16 %v1043, %v1027
    %v1124 = vpack.c.b16 %v1044, %v1028
    %v1125 = vpack.c.b16 %v1045, %v1029
    %v1126 = vpack.c.b16 %v1046, %v1030
    %v1127 = vpack.c.b16 %v1063, %v1047
    %v1128 = vpack.c.b16 %v1064, %v1048
    %v1129 = vpack.c.b16 %v1065, %v1049
    %v1130 = vpack.c.b16 %v1066, %v1050
    %v1131 = vpack.c.b16 %v1067, %v1051
    %v1132 = vpack.c.b16 %v1068, %v1052
    %v1133 = vpack.c.b16 %v1069, %v1053
    %v1134 = vpack.c.b16 %v1070, %v1054
    %v1135 = vpack.c.b16 %v1071, %v1055
    %v1136 = vpack.c.b16 %v1072, %v1056
    %v1137 = vpack.c.b16 %v1073, %v1057
    %v1138 = vpack.c.b16 %v1074, %v1058
    %v1139 = vpack.c.b16 %v1075, %v1059
    %v1140 = vpack.c.b16 %v1076, %v1060
    %v1141 = vpack.c.b16 %v1077, %v1061
    %v1142 = vpack.c.b16 %v1078, %v1062
    %v1208 = vsel %vm124, %v758, 0
    %1210 = vmatprep.subr.bf16.mxu0 %v1080
    %1211 = vmatpush1.bf16.msra.mxu0 %v1079
    %1212 = vmatprep.subr.bf16.mxu0 %v1096
    %1213 = vmatpush1.bf16.msra.mxu0 %v1095
    %1214 = vmatprep.subr.bf16.mxu0 %v1112
    %1215 = vmatpush1.bf16.msra.mxu0 %v1111
    %1216 = vmatprep.subr.bf16.mxu0 %v1128
    %1217 = vmatpush1.bf16.msra.mxu0 %v1127
    %1218 = vmatprep.subr.bf16.mxu0 0
    %1219 = vmatpush1.bf16.msra.mxu0 0
    %1220 = vmatprep.subr.bf16.mxu0 0
    %1221 = vmatpush1.bf16.msra.mxu0 0
    %1222 = vmatprep.subr.bf16.mxu0 0
    %1223 = vmatpush1.bf16.msra.mxu0 0
    %1224 = vmatprep.subr.bf16.mxu0 0
    %1225 = vmatpush1.bf16.msra.mxu0 0
    %1226 = vmatprep.subr.bf16.mxu0 0
    %1227 = vmatpush1.bf16.msra.mxu0 0
    %1228 = vmatprep.subr.bf16.mxu0 0
    %1229 = vmatpush1.bf16.msra.mxu0 0
    %1230 = vmatprep.subr.bf16.mxu0 0
    %1231 = vmatpush1.bf16.msra.mxu0 0
    %1232 = vmatprep.subr.bf16.mxu0 0
    %1233 = vmatpush1.bf16.msra.mxu0 0
    %1234 = vmatprep.subr.bf16.mxu0 0
    %1235 = vmatpush1.bf16.msra.mxu0 0
    %1236 = vmatprep.subr.bf16.mxu0 0
    %1237 = vmatpush1.bf16.msra.mxu0 0
    %1238 = vmatprep.subr.bf16.mxu0 0
    %1239 = vmatpush1.bf16.msra.mxu0 0
    %1240 = vmatprep.subr.bf16.mxu0 0
    %1241 = vmatpush1.bf16.msra.mxu0 0
    %1242 = vmatprep.mubr.bf16.mxu0 0
    %1243 = vmatmul.mubr.bf16.gmra.mrb[0].mxu0 %v1208
    %v1244 = vpop.f32.mrb[0].mxu0
    %v1245 = vadd.f32 %v826, %v1244
    %v1246 = vpop.f32.mrb[0].mxu0
    %v1247 = vadd.f32 %v830, %v1246
    %v1248 = vpop.f32.mrb[0].mxu0
    %v1249 = vadd.f32 %v826, %v1248
    %v1250 = vpop.f32.mrb[0].mxu0
    %v1251 = vadd.f32 %v830, %v1250
    %1252 = vdwg.mxu0
    %1253 = vmatprep.subr.bf16.mxu0 %v1082
    %1254 = vmatpush1.bf16.msra.mxu0 %v1081
    %1255 = vmatprep.subr.bf16.mxu0 %v1098
    %1256 = vmatpush1.bf16.msra.mxu0 %v1097
    %1257 = vmatprep.subr.bf16.mxu0 %v1114
    %1258 = vmatpush1.bf16.msra.mxu0 %v1113
    %1259 = vmatprep.subr.bf16.mxu0 %v1130
    %1260 = vmatpush1.bf16.msra.mxu0 %v1129
    %1261 = vmatprep.subr.bf16.mxu0 0
    %1262 = vmatpush1.bf16.msra.mxu0 0
    %1263 = vmatprep.subr.bf16.mxu0 0
    %1264 = vmatpush1.bf16.msra.mxu0 0
    %1265 = vmatprep.subr.bf16.mxu0 0
    %1266 = vmatpush1.bf16.msra.mxu0 0
    %1267 = vmatprep.subr.bf16.mxu0 0
    %1268 = vmatpush1.bf16.msra.mxu0 0
    %1269 = vmatprep.subr.bf16.mxu0 0
    %1270 = vmatpush1.bf16.msra.mxu0 0
    %1271 = vmatprep.subr.bf16.mxu0 0
    %1272 = vmatpush1.bf16.msra.mxu0 0
    %1273 = vmatprep.subr.bf16.mxu0 0
    %1274 = vmatpush1.bf16.msra.mxu0 0
    %1275 = vmatprep.subr.bf16.mxu0 0
    %1276 = vmatpush1.bf16.msra.mxu0 0
    %1277 = vmatprep.subr.bf16.mxu0 0
    %1278 = vmatpush1.bf16.msra.mxu0 0
    %1279 = vmatprep.subr.bf16.mxu0 0
    %1280 = vmatpush1.bf16.msra.mxu0 0
    %1281 = vmatprep.subr.bf16.mxu0 0
    %1282 = vmatpush1.bf16.msra.mxu0 0
    %1283 = vmatprep.subr.bf16.mxu0 0
    %1284 = vmatpush1.bf16.msra.mxu0 0
    %1285 = vmatprep.mubr.bf16.mxu0 0
    %1286 = vmatmul.mubr.bf16.gmra.mrb[0].mxu0 %v1208
    %v1287 = vpop.f32.mrb[0].mxu0
    %v1288 = vadd.f32 %v834, %v1287
    %v1289 = vpop.f32.mrb[0].mxu0
    %v1290 = vadd.f32 %v838, %v1289
    %v1291 = vpop.f32.mrb[0].mxu0
    %v1292 = vadd.f32 %v834, %v1291
    %v1293 = vpop.f32.mrb[0].mxu0
    %v1294 = vadd.f32 %v838, %v1293
    %1295 = vdwg.mxu0
    %1296 = vmatprep.subr.bf16.mxu0 %v1084
    %1297 = vmatpush1.bf16.msra.mxu0 %v1083
    %1298 = vmatprep.subr.bf16.mxu0 %v1100
    %1299 = vmatpush1.bf16.msra.mxu0 %v1099
    %1300 = vmatprep.subr.bf16.mxu0 %v1116
    %1301 = vmatpush1.bf16.msra.mxu0 %v1115
    %1302 = vmatprep.subr.bf16.mxu0 %v1132
    %1303 = vmatpush1.bf16.msra.mxu0 %v1131
    %1304 = vmatprep.subr.bf16.mxu0 0
    %1305 = vmatpush1.bf16.msra.mxu0 0
    %1306 = vmatprep.subr.bf16.mxu0 0
    %1307 = vmatpush1.bf16.msra.mxu0 0
    %1308 = vmatprep.subr.bf16.mxu0 0
    %1309 = vmatpush1.bf16.msra.mxu0 0
    %1310 = vmatprep.subr.bf16.mxu0 0
    %1311 = vmatpush1.bf16.msra.mxu0 0
    %1312 = vmatprep.subr.bf16.mxu0 0
    %1313 = vmatpush1.bf16.msra.mxu0 0
    %1314 = vmatprep.subr.bf16.mxu0 0
    %1315 = vmatpush1.bf16.msra.mxu0 0
    %1316 = vmatprep.subr.bf16.mxu0 0
    %1317 = vmatpush1.bf16.msra.mxu0 0
    %1318 = vmatprep.subr.bf16.mxu0 0
    %1319 = vmatpush1.bf16.msra.mxu0 0
    %1320 = vmatprep.subr.bf16.mxu0 0
    %1321 = vmatpush1.bf16.msra.mxu0 0
    %1322 = vmatprep.subr.bf16.mxu0 0
    %1323 = vmatpush1.bf16.msra.mxu0 0
    %1324 = vmatprep.subr.bf16.mxu0 0
    %1325 = vmatpush1.bf16.msra.mxu0 0
    %1326 = vmatprep.subr.bf16.mxu0 0
    %1327 = vmatpush1.bf16.msra.mxu0 0
    %1328 = vmatprep.mubr.bf16.mxu0 0
    %1329 = vmatmul.mubr.bf16.gmra.mrb[0].mxu0 %v1208
    %v1330 = vpop.f32.mrb[0].mxu0
    %v1331 = vadd.f32 %v842, %v1330
    %v1332 = vpop.f32.mrb[0].mxu0
    %v1333 = vadd.f32 %v846, %v1332
    %v1334 = vpop.f32.mrb[0].mxu0
    %v1335 = vadd.f32 %v842, %v1334
    %v1336 = vpop.f32.mrb[0].mxu0
    %v1337 = vadd.f32 %v846, %v1336
    %1338 = vdwg.mxu0
    %1339 = vmatprep.subr.bf16.mxu0 %v1086
    %1340 = vmatpush1.bf16.msra.mxu0 %v1085
    %1341 = vmatprep.subr.bf16.mxu0 %v1102
    %1342 = vmatpush1.bf16.msra.mxu0 %v1101
    %1343 = vmatprep.subr.bf16.mxu0 %v1118
    %1344 = vmatpush1.bf16.msra.mxu0 %v1117
    %1345 = vmatprep.subr.bf16.mxu0 %v1134
    %1346 = vmatpush1.bf16.msra.mxu0 %v1133
    %1347 = vmatprep.subr.bf16.mxu0 0
    %1348 = vmatpush1.bf16.msra.mxu0 0
    %1349 = vmatprep.subr.bf16.mxu0 0
    %1350 = vmatpush1.bf16.msra.mxu0 0
    %1351 = vmatprep.subr.bf16.mxu0 0
    %1352 = vmatpush1.bf16.msra.mxu0 0
    %1353 = vmatprep.subr.bf16.mxu0 0
    %1354 = vmatpush1.bf16.msra.mxu0 0
    %1355 = vmatprep.subr.bf16.mxu0 0
    %1356 = vmatpush1.bf16.msra.mxu0 0
    %1357 = vmatprep.subr.bf16.mxu0 0
    %1358 = vmatpush1.bf16.msra.mxu0 0
    %1359 = vmatprep.subr.bf16.mxu0 0
    %1360 = vmatpush1.bf16.msra.mxu0 0
    %1361 = vmatprep.subr.bf16.mxu0 0
    %1362 = vmatpush1.bf16.msra.mxu0 0
    %1363 = vmatprep.subr.bf16.mxu0 0
    %1364 = vmatpush1.bf16.msra.mxu0 0
    %1365 = vmatprep.subr.bf16.mxu0 0
    %1366 = vmatpush1.bf16.msra.mxu0 0
    %1367 = vmatprep.subr.bf16.mxu0 0
    %1368 = vmatpush1.bf16.msra.mxu0 0
    %1369 = vmatprep.subr.bf16.mxu0 0
    %1370 = vmatpush1.bf16.msra.mxu0 0
    %1371 = vmatprep.mubr.bf16.mxu0 0
    %1372 = vmatmul.mubr.bf16.gmra.mrb[0].mxu0 %v1208
    %v1373 = vpop.f32.mrb[0].mxu0
    %v1374 = vadd.f32 %v850, %v1373
    %v1375 = vpop.f32.mrb[0].mxu0
    %v1376 = vadd.f32 %v854, %v1375
    %v1377 = vpop.f32.mrb[0].mxu0
    %v1378 = vadd.f32 %v850, %v1377
    %v1379 = vpop.f32.mrb[0].mxu0
    %v1380 = vadd.f32 %v854, %v1379
    %1381 = vdwg.mxu0
    %1382 = vmatprep.subr.bf16.mxu0 %v1088
    %1383 = vmatpush1.bf16.msra.mxu0 %v1087
    %1384 = vmatprep.subr.bf16.mxu0 %v1104
    %1385 = vmatpush1.bf16.msra.mxu0 %v1103
    %1386 = vmatprep.subr.bf16.mxu0 %v1120
    %1387 = vmatpush1.bf16.msra.mxu0 %v1119
    %1388 = vmatprep.subr.bf16.mxu0 %v1136
    %1389 = vmatpush1.bf16.msra.mxu0 %v1135
    %1390 = vmatprep.subr.bf16.mxu0 0
    %1391 = vmatpush1.bf16.msra.mxu0 0
    %1392 = vmatprep.subr.bf16.mxu0 0
    %1393 = vmatpush1.bf16.msra.mxu0 0
    %1394 = vmatprep.subr.bf16.mxu0 0
    %1395 = vmatpush1.bf16.msra.mxu0 0
    %1396 = vmatprep.subr.bf16.mxu0 0
    %1397 = vmatpush1.bf16.msra.mxu0 0
    %1398 = vmatprep.subr.bf16.mxu0 0
    %1399 = vmatpush1.bf16.msra.mxu0 0
    %1400 = vmatprep.subr.bf16.mxu0 0
    %1401 = vmatpush1.bf16.msra.mxu0 0
    %1402 = vmatprep.subr.bf16.mxu0 0
    %1403 = vmatpush1.bf16.msra.mxu0 0
    %1404 = vmatprep.subr.bf16.mxu0 0
    %1405 = vmatpush1.bf16.msra.mxu0 0
    %1406 = vmatprep.subr.bf16.mxu0 0
    %1407 = vmatpush1.bf16.msra.mxu0 0
    %1408 = vmatprep.subr.bf16.mxu0 0
    %1409 = vmatpush1.bf16.msra.mxu0 0
    %1410 = vmatprep.subr.bf16.mxu0 0
    %1411 = vmatpush1.bf16.msra.mxu0 0
    %1412 = vmatprep.subr.bf16.mxu0 0
    %1413 = vmatpush1.bf16.msra.mxu0 0
    %1414 = vmatprep.mubr.bf16.mxu0 0
    %1415 = vmatmul.mubr.bf16.gmra.mrb[0].mxu0 %v1208
    %v1416 = vpop.f32.mrb[0].mxu0
    %v1417 = vadd.f32 %v858, %v1416
    %v1418 = vpop.f32.mrb[0].mxu0
    %v1419 = vadd.f32 %v862, %v1418
    %v1420 = vpop.f32.mrb[0].mxu0
    %v1421 = vadd.f32 %v858, %v1420
    %v1422 = vpop.f32.mrb[0].mxu0
    %v1423 = vadd.f32 %v862, %v1422
    %1424 = vdwg.mxu0
    %1425 = vmatprep.subr.bf16.mxu0 %v1090
    %1426 = vmatpush1.bf16.msra.mxu0 %v1089
    %1427 = vmatprep.subr.bf16.mxu0 %v1106
    %1428 = vmatpush1.bf16.msra.mxu0 %v1105
    %1429 = vmatprep.subr.bf16.mxu0 %v1122
    %1430 = vmatpush1.bf16.msra.mxu0 %v1121
    %1431 = vmatprep.subr.bf16.mxu0 %v1138
    %1432 = vmatpush1.bf16.msra.mxu0 %v1137
    %1433 = vmatprep.subr.bf16.mxu0 0
    %1434 = vmatpush1.bf16.msra.mxu0 0
    %1435 = vmatprep.subr.bf16.mxu0 0
    %1436 = vmatpush1.bf16.msra.mxu0 0
    %1437 = vmatprep.subr.bf16.mxu0 0
    %1438 = vmatpush1.bf16.msra.mxu0 0
    %1439 = vmatprep.subr.bf16.mxu0 0
    %1440 = vmatpush1.bf16.msra.mxu0 0
    %1441 = vmatprep.subr.bf16.mxu0 0
    %1442 = vmatpush1.bf16.msra.mxu0 0
    %1443 = vmatprep.subr.bf16.mxu0 0
    %1444 = vmatpush1.bf16.msra.mxu0 0
    %1445 = vmatprep.subr.bf16.mxu0 0
    %1446 = vmatpush1.bf16.msra.mxu0 0
    %1447 = vmatprep.subr.bf16.mxu0 0
    %1448 = vmatpush1.bf16.msra.mxu0 0
    %1449 = vmatprep.subr.bf16.mxu0 0
    %1450 = vmatpush1.bf16.msra.mxu0 0
    %1451 = vmatprep.subr.bf16.mxu0 0
    %1452 = vmatpush1.bf16.msra.mxu0 0
    %1453 = vmatprep.subr.bf16.mxu0 0
    %1454 = vmatpush1.bf16.msra.mxu0 0
    %1455 = vmatprep.subr.bf16.mxu0 0
    %1456 = vmatpush1.bf16.msra.mxu0 0
    %1457 = vmatprep.mubr.bf16.mxu0 0
    %1458 = vmatmul.mubr.bf16.gmra.mrb[0].mxu0 %v1208
    %v1459 = vpop.f32.mrb[0].mxu0
    %v1460 = vadd.f32 %v866, %v1459
    %v1461 = vpop.f32.mrb[0].mxu0
    %v1462 = vadd.f32 %v870, %v1461
    %v1463 = vpop.f32.mrb[0].mxu0
    %v1464 = vadd.f32 %v866, %v1463
    %v1465 = vpop.f32.mrb[0].mxu0
    %v1466 = vadd.f32 %v870, %v1465
    %1467 = vdwg.mxu0
    %1468 = vmatprep.subr.bf16.mxu0 %v1092
    %1469 = vmatpush1.bf16.msra.mxu0 %v1091
    %1470 = vmatprep.subr.bf16.mxu0 %v1108
    %1471 = vmatpush1.bf16.msra.mxu0 %v1107
    %1472 = vmatprep.subr.bf16.mxu0 %v1124
    %1473 = vmatpush1.bf16.msra.mxu0 %v1123
    %1474 = vmatprep.subr.bf16.mxu0 %v1140
    %1475 = vmatpush1.bf16.msra.mxu0 %v1139
    %1476 = vmatprep.subr.bf16.mxu0 0
    %1477 = vmatpush1.bf16.msra.mxu0 0
    %1478 = vmatprep.subr.bf16.mxu0 0
    %1479 = vmatpush1.bf16.msra.mxu0 0
    %1480 = vmatprep.subr.bf16.mxu0 0
    %1481 = vmatpush1.bf16.msra.mxu0 0
    %1482 = vmatprep.subr.bf16.mxu0 0
    %1483 = vmatpush1.bf16.msra.mxu0 0
    %1484 = vmatprep.subr.bf16.mxu0 0
    %1485 = vmatpush1.bf16.msra.mxu0 0
    %1486 = vmatprep.subr.bf16.mxu0 0
    %1487 = vmatpush1.bf16.msra.mxu0 0
    %1488 = vmatprep.subr.bf16.mxu0 0
    %1489 = vmatpush1.bf16.msra.mxu0 0
    %1490 = vmatprep.subr.bf16.mxu0 0
    %1491 = vmatpush1.bf16.msra.mxu0 0
    %1492 = vmatprep.subr.bf16.mxu0 0
    %1493 = vmatpush1.bf16.msra.mxu0 0
    %1494 = vmatprep.subr.bf16.mxu0 0
    %1495 = vmatpush1.bf16.msra.mxu0 0
    %1496 = vmatprep.subr.bf16.mxu0 0
    %1497 = vmatpush1.bf16.msra.mxu0 0
    %1498 = vmatprep.subr.bf16.mxu0 0
    %1499 = vmatpush1.bf16.msra.mxu0 0
    %1500 = vmatprep.mubr.bf16.mxu0 0
    %1501 = vmatmul.mubr.bf16.gmra.mrb[0].mxu0 %v1208
    %v1502 = vpop.f32.mrb[0].mxu0
    %v1503 = vadd.f32 %v874, %v1502
    %v1504 = vpop.f32.mrb[0].mxu0
    %v1505 = vadd.f32 %v878, %v1504
    %v1506 = vpop.f32.mrb[0].mxu0
    %v1507 = vadd.f32 %v874, %v1506
    %v1508 = vpop.f32.mrb[0].mxu0
    %v1509 = vadd.f32 %v878, %v1508
    %1510 = vdwg.mxu0
    %1511 = vmatprep.subr.bf16.mxu0 %v1094
    %1512 = vmatpush1.bf16.msra.mxu0 %v1093
    %1513 = vmatprep.subr.bf16.mxu0 %v1110
    %1514 = vmatpush1.bf16.msra.mxu0 %v1109
    %1515 = vmatprep.subr.bf16.mxu0 %v1126
    %1516 = vmatpush1.bf16.msra.mxu0 %v1125
    %1517 = vmatprep.subr.bf16.mxu0 %v1142
    %1518 = vmatpush1.bf16.msra.mxu0 %v1141
    %1519 = vmatprep.subr.bf16.mxu0 0
    %1520 = vmatpush1.bf16.msra.mxu0 0
    %1521 = vmatprep.subr.bf16.mxu0 0
    %1522 = vmatpush1.bf16.msra.mxu0 0
    %1523 = vmatprep.subr.bf16.mxu0 0
    %1524 = vmatpush1.bf16.msra.mxu0 0
    %1525 = vmatprep.subr.bf16.mxu0 0
    %1526 = vmatpush1.bf16.msra.mxu0 0
    %1527 = vmatprep.subr.bf16.mxu0 0
    %1528 = vmatpush1.bf16.msra.mxu0 0
    %1529 = vmatprep.subr.bf16.mxu0 0
    %1530 = vmatpush1.bf16.msra.mxu0 0
    %1531 = vmatprep.subr.bf16.mxu0 0
    %1532 = vmatpush1.bf16.msra.mxu0 0
    %1533 = vmatprep.subr.bf16.mxu0 0
    %1534 = vmatpush1.bf16.msra.mxu0 0
    %1535 = vmatprep.subr.bf16.mxu0 0
    %1536 = vmatpush1.bf16.msra.mxu0 0
    %1537 = vmatprep.subr.bf16.mxu0 0
    %1538 = vmatpush1.bf16.msra.mxu0 0
    %1539 = vmatprep.subr.bf16.mxu0 0
    %1540 = vmatpush1.bf16.msra.mxu0 0
    %1541 = vmatprep.subr.bf16.mxu0 0
    %1542 = vmatpush1.bf16.msra.mxu0 0
    %1543 = vmatprep.mubr.bf16.mxu0 0
    %1544 = vmatmul.mubr.bf16.gmra.mrb[0].mxu0 %v1208
    %v1545 = vpop.f32.mrb[0].mxu0
    %v1546 = vadd.f32 %v882, %v1545
    %v1547 = vpop.f32.mrb[0].mxu0
    %v1548 = vadd.f32 %v886, %v1547
    %v1549 = vpop.f32.mrb[0].mxu0
    %v1550 = vadd.f32 %v882, %v1549
    %v1551 = vpop.f32.mrb[0].mxu0
    %v1552 = vadd.f32 %v886, %v1551
    %1553 = vdwg.mxu0
    %v1554 = vmax.f32 %v1245, 0.0
    %v1555 = vmax.f32 %v1247, 0.0
    %v1556 = vmax.f32 %v1288, 0.0
    %v1557 = vmax.f32 %v1290, 0.0
    %v1558 = vmax.f32 %v1331, 0.0
    %v1559 = vmax.f32 %v1333, 0.0
    %v1560 = vmax.f32 %v1374, 0.0
    %v1561 = vmax.f32 %v1376, 0.0
    %v1562 = vmax.f32 %v1417, 0.0
    %v1563 = vmax.f32 %v1419, 0.0
    %v1564 = vmax.f32 %v1460, 0.0
    %v1565 = vmax.f32 %v1462, 0.0
    %v1566 = vmax.f32 %v1503, 0.0
    %v1567 = vmax.f32 %v1505, 0.0
    %v1568 = vmax.f32 %v1546, 0.0
    %v1569 = vmax.f32 %v1548, 0.0
    %v1570 = vmax.f32 %v1249, 0.0
    %v1571 = vmax.f32 %v1251, 0.0
    %v1572 = vmax.f32 %v1292, 0.0
    %v1573 = vmax.f32 %v1294, 0.0
    %v1574 = vmax.f32 %v1335, 0.0
    %v1575 = vmax.f32 %v1337, 0.0
    %v1576 = vmax.f32 %v1378, 0.0
    %v1577 = vmax.f32 %v1380, 0.0
    %v1578 = vmax.f32 %v1421, 0.0
    %v1579 = vmax.f32 %v1423, 0.0
    %v1580 = vmax.f32 %v1464, 0.0
    %v1581 = vmax.f32 %v1466, 0.0
    %v1582 = vmax.f32 %v1507, 0.0
    %v1583 = vmax.f32 %v1509, 0.0
    %v1584 = vmax.f32 %v1550, 0.0
    %v1585 = vmax.f32 %v1552, 0.0
    %v1586 = vpack.c.bf16 %v1570, %v1554
    %v1587 = vpack.c.bf16 %v1571, %v1555
    %v1588 = vpack.c.bf16 %v1572, %v1556
    %v1589 = vpack.c.bf16 %v1573, %v1557
    %v1590 = vpack.c.bf16 %v1574, %v1558
    %v1591 = vpack.c.bf16 %v1575, %v1559
    %v1592 = vpack.c.bf16 %v1576, %v1560
    %v1593 = vpack.c.bf16 %v1577, %v1561
    %v1594 = vpack.c.bf16 %v1578, %v1562
    %v1595 = vpack.c.bf16 %v1579, %v1563
    %v1596 = vpack.c.bf16 %v1580, %v1564
    %v1597 = vpack.c.bf16 %v1581, %v1565
    %v1598 = vpack.c.bf16 %v1582, %v1566
    %v1599 = vpack.c.bf16 %v1583, %v1567
    %v1600 = vpack.c.bf16 %v1584, %v1568
    %v1601 = vpack.c.bf16 %v1585, %v1569
    %v1602 = vld [vmem:[%s4] sm:$0xf]
    %v1603 = vld [vmem:[%s4 + $0x4] sm:$0xf]
    %v1604 = vld [vmem:[%s4 + $0x8] sm:$0xf]
    %v1605 = vld [vmem:[%s4 + $0xc] sm:$0xf]
    %v1606 = vld [vmem:[%s4 + $0x10] sm:$0xf]
    %v1607 = vld [vmem:[%s4 + $0x14] sm:$0xf]
    %v1608 = vld [vmem:[%s4 + $0x18] sm:$0xf]
    %v1609 = vld [vmem:[%s4 + $0x1c] sm:$0xf]
    %v1610 = vld [vmem:[%s4 + $0x20] sm:$0xf]
    %v1611 = vld [vmem:[%s4 + $0x24] sm:$0xf]
    %v1612 = vld [vmem:[%s4 + $0x28] sm:$0xf]
    %v1613 = vld [vmem:[%s4 + $0x2c] sm:$0xf]
    %v1614 = vld [vmem:[%s4 + $0x30] sm:$0xf]
    %v1615 = vld [vmem:[%s4 + $0x34] sm:$0xf]
    %v1616 = vld [vmem:[%s4 + $0x38] sm:$0xf]
    %v1617 = vld [vmem:[%s4 + $0x3c] sm:$0xf]
    %v1618 = vld [vmem:[%s4 + $0x40] sm:$0xf]
    %v1619 = vld [vmem:[%s4 + $0x44] sm:$0xf]
    %v1620 = vld [vmem:[%s4 + $0x48] sm:$0xf]
    %v1621 = vld [vmem:[%s4 + $0x4c] sm:$0xf]
    %v1622 = vld [vmem:[%s4 + $0x50] sm:$0xf]
    %v1623 = vld [vmem:[%s4 + $0x54] sm:$0xf]
    %v1624 = vld [vmem:[%s4 + $0x58] sm:$0xf]
    %v1625 = vld [vmem:[%s4 + $0x5c] sm:$0xf]
    %v1626 = vld [vmem:[%s4 + $0x60] sm:$0xf]
    %v1627 = vld [vmem:[%s4 + $0x64] sm:$0xf]
    %v1628 = vld [vmem:[%s4 + $0x68] sm:$0xf]
    %v1629 = vld [vmem:[%s4 + $0x6c] sm:$0xf]
    %v1630 = vld [vmem:[%s4 + $0x70] sm:$0xf]
    %v1631 = vld [vmem:[%s4 + $0x74] sm:$0xf]
    %v1632 = vld [vmem:[%s4 + $0x78] sm:$0xf]
    %v1633 = vld [vmem:[%s4 + $0x7c] sm:$0xf]
    %v1634 = vld [vmem:[%s4 + $0x80] sm:$0xf]
    %v1635 = vld [vmem:[%s4 + $0x84] sm:$0xf]
    %v1636 = vld [vmem:[%s4 + $0x88] sm:$0xf]
    %v1637 = vld [vmem:[%s4 + $0x8c] sm:$0xf]
    %v1638 = vld [vmem:[%s4 + $0x90] sm:$0xf]
    %v1639 = vld [vmem:[%s4 + $0x94] sm:$0xf]
    %v1640 = vld [vmem:[%s4 + $0x98] sm:$0xf]
    %v1641 = vld [vmem:[%s4 + $0x9c] sm:$0xf]
    %v1642 = vld [vmem:[%s4 + $0xa0] sm:$0xf]
    %v1643 = vld [vmem:[%s4 + $0xa4] sm:$0xf]
    %v1644 = vld [vmem:[%s4 + $0xa8] sm:$0xf]
    %v1645 = vld [vmem:[%s4 + $0xac] sm:$0xf]
    %v1646 = vld [vmem:[%s4 + $0xb0] sm:$0xf]
    %v1647 = vld [vmem:[%s4 + $0xb4] sm:$0xf]
    %v1648 = vld [vmem:[%s4 + $0xb8] sm:$0xf]
    %v1649 = vld [vmem:[%s4 + $0xbc] sm:$0xf]
    %v1650 = vld [vmem:[%s4 + $0xc0] sm:$0xf]
    %v1651 = vld [vmem:[%s4 + $0xc4] sm:$0xf]
    %v1652 = vld [vmem:[%s4 + $0xc8] sm:$0xf]
    %v1653 = vld [vmem:[%s4 + $0xcc] sm:$0xf]
    %v1654 = vld [vmem:[%s4 + $0xd0] sm:$0xf]
    %v1655 = vld [vmem:[%s4 + $0xd4] sm:$0xf]
    %v1656 = vld [vmem:[%s4 + $0xd8] sm:$0xf]
    %v1657 = vld [vmem:[%s4 + $0xdc] sm:$0xf]
    %v1658 = vld [vmem:[%s4 + $0xe0] sm:$0xf]
    %v1659 = vld [vmem:[%s4 + $0xe4] sm:$0xf]
    %v1660 = vld [vmem:[%s4 + $0xe8] sm:$0xf]
    %v1661 = vld [vmem:[%s4 + $0xec] sm:$0xf]
    %v1662 = vld [vmem:[%s4 + $0xf0] sm:$0xf]
    %v1663 = vld [vmem:[%s4 + $0xf4] sm:$0xf]
    %v1664 = vld [vmem:[%s4 + $0xf8] sm:$0xf]
    %v1665 = vld [vmem:[%s4 + $0xfc] sm:$0xf]
    %v1666 = vld [vmem:[%s4 + $0x100] sm:$0xf]
    %v1667 = vld [vmem:[%s4 + $0x104] sm:$0xf]
    %v1668 = vld [vmem:[%s4 + $0x108] sm:$0xf]
    %v1669 = vld [vmem:[%s4 + $0x10c] sm:$0xf]
    %v1670 = vld [vmem:[%s4 + $0x110] sm:$0xf]
    %v1671 = vld [vmem:[%s4 + $0x114] sm:$0xf]
    %v1672 = vld [vmem:[%s4 + $0x118] sm:$0xf]
    %v1673 = vld [vmem:[%s4 + $0x11c] sm:$0xf]
    %v1674 = vld [vmem:[%s4 + $0x120] sm:$0xf]
    %v1675 = vld [vmem:[%s4 + $0x124] sm:$0xf]
    %v1676 = vld [vmem:[%s4 + $0x128] sm:$0xf]
    %v1677 = vld [vmem:[%s4 + $0x12c] sm:$0xf]
    %v1678 = vld [vmem:[%s4 + $0x130] sm:$0xf]
    %v1679 = vld [vmem:[%s4 + $0x134] sm:$0xf]
    %v1680 = vld [vmem:[%s4 + $0x138] sm:$0xf]
    %v1681 = vld [vmem:[%s4 + $0x13c] sm:$0xf]
    %v1682 = vld [vmem:[%s4 + $0x140] sm:$0xf]
    %v1683 = vld [vmem:[%s4 + $0x144] sm:$0xf]
    %v1684 = vld [vmem:[%s4 + $0x148] sm:$0xf]
    %v1685 = vld [vmem:[%s4 + $0x14c] sm:$0xf]
    %v1686 = vld [vmem:[%s4 + $0x150] sm:$0xf]
    %v1687 = vld [vmem:[%s4 + $0x154] sm:$0xf]
    %v1688 = vld [vmem:[%s4 + $0x158] sm:$0xf]
    %v1689 = vld [vmem:[%s4 + $0x15c] sm:$0xf]
    %v1690 = vld [vmem:[%s4 + $0x160] sm:$0xf]
    %v1691 = vld [vmem:[%s4 + $0x164] sm:$0xf]
    %v1692 = vld [vmem:[%s4 + $0x168] sm:$0xf]
    %v1693 = vld [vmem:[%s4 + $0x16c] sm:$0xf]
    %v1694 = vld [vmem:[%s4 + $0x170] sm:$0xf]
    %v1695 = vld [vmem:[%s4 + $0x174] sm:$0xf]
    %v1696 = vld [vmem:[%s4 + $0x178] sm:$0xf]
    %v1697 = vld [vmem:[%s4 + $0x17c] sm:$0xf]
    %v1698 = vld [vmem:[%s4 + $0x180] sm:$0xf]
    %v1699 = vld [vmem:[%s4 + $0x184] sm:$0xf]
    %v1700 = vld [vmem:[%s4 + $0x188] sm:$0xf]
    %v1701 = vld [vmem:[%s4 + $0x18c] sm:$0xf]
    %v1702 = vld [vmem:[%s4 + $0x190] sm:$0xf]
    %v1703 = vld [vmem:[%s4 + $0x194] sm:$0xf]
    %v1704 = vld [vmem:[%s4 + $0x198] sm:$0xf]
    %v1705 = vld [vmem:[%s4 + $0x19c] sm:$0xf]
    %v1706 = vld [vmem:[%s4 + $0x1a0] sm:$0xf]
    %v1707 = vld [vmem:[%s4 + $0x1a4] sm:$0xf]
    %v1708 = vld [vmem:[%s4 + $0x1a8] sm:$0xf]
    %v1709 = vld [vmem:[%s4 + $0x1ac] sm:$0xf]
    %v1710 = vld [vmem:[%s4 + $0x1b0] sm:$0xf]
    %v1711 = vld [vmem:[%s4 + $0x1b4] sm:$0xf]
    %v1712 = vld [vmem:[%s4 + $0x1b8] sm:$0xf]
    %v1713 = vld [vmem:[%s4 + $0x1bc] sm:$0xf]
    %v1714 = vld [vmem:[%s4 + $0x1c0] sm:$0xf]
    %v1715 = vld [vmem:[%s4 + $0x1c4] sm:$0xf]
    %v1716 = vld [vmem:[%s4 + $0x1c8] sm:$0xf]
    %v1717 = vld [vmem:[%s4 + $0x1cc] sm:$0xf]
    %v1718 = vld [vmem:[%s4 + $0x1d0] sm:$0xf]
    %v1719 = vld [vmem:[%s4 + $0x1d4] sm:$0xf]
    %v1720 = vld [vmem:[%s4 + $0x1d8] sm:$0xf]
    %v1721 = vld [vmem:[%s4 + $0x1dc] sm:$0xf]
    %v1722 = vld [vmem:[%s4 + $0x1e0] sm:$0xf]
    %v1723 = vld [vmem:[%s4 + $0x1e4] sm:$0xf]
    %v1724 = vld [vmem:[%s4 + $0x1e8] sm:$0xf]
    %v1725 = vld [vmem:[%s4 + $0x1ec] sm:$0xf]
    %v1726 = vld [vmem:[%s4 + $0x1f0] sm:$0xf]
    %v1727 = vld [vmem:[%s4 + $0x1f4] sm:$0xf]
    %v1728 = vld [vmem:[%s4 + $0x1f8] sm:$0xf]
    %v1729 = vld [vmem:[%s4 + $0x1fc] sm:$0xf]
    %v1730 = vld [vmem:[%s4 + $0x200] sm:$0xf]
    %v1731 = vld [vmem:[%s4 + $0x204] sm:$0xf]
    %v1732 = vld [vmem:[%s4 + $0x208] sm:$0xf]
    %v1733 = vld [vmem:[%s4 + $0x20c] sm:$0xf]
    %v1734 = vld [vmem:[%s4 + $0x210] sm:$0xf]
    %v1735 = vld [vmem:[%s4 + $0x214] sm:$0xf]
    %v1736 = vld [vmem:[%s4 + $0x218] sm:$0xf]
    %v1737 = vld [vmem:[%s4 + $0x21c] sm:$0xf]
    %v1738 = vld [vmem:[%s4 + $0x220] sm:$0xf]
    %v1739 = vld [vmem:[%s4 + $0x224] sm:$0xf]
    %v1740 = vld [vmem:[%s4 + $0x228] sm:$0xf]
    %v1741 = vld [vmem:[%s4 + $0x22c] sm:$0xf]
    %v1742 = vld [vmem:[%s4 + $0x230] sm:$0xf]
    %v1743 = vld [vmem:[%s4 + $0x234] sm:$0xf]
    %v1744 = vld [vmem:[%s4 + $0x238] sm:$0xf]
    %v1745 = vld [vmem:[%s4 + $0x23c] sm:$0xf]
    %v1746 = vld [vmem:[%s4 + $0x240] sm:$0xf]
    %v1747 = vld [vmem:[%s4 + $0x244] sm:$0xf]
    %v1748 = vld [vmem:[%s4 + $0x248] sm:$0xf]
    %v1749 = vld [vmem:[%s4 + $0x24c] sm:$0xf]
    %v1750 = vld [vmem:[%s4 + $0x250] sm:$0xf]
    %v1751 = vld [vmem:[%s4 + $0x254] sm:$0xf]
    %v1752 = vld [vmem:[%s4 + $0x258] sm:$0xf]
    %v1753 = vld [vmem:[%s4 + $0x25c] sm:$0xf]
    %v1754 = vld [vmem:[%s4 + $0x260] sm:$0xf]
    %v1755 = vld [vmem:[%s4 + $0x264] sm:$0xf]
    %v1756 = vld [vmem:[%s4 + $0x268] sm:$0xf]
    %v1757 = vld [vmem:[%s4 + $0x26c] sm:$0xf]
    %v1758 = vld [vmem:[%s4 + $0x270] sm:$0xf]
    %v1759 = vld [vmem:[%s4 + $0x274] sm:$0xf]
    %v1760 = vld [vmem:[%s4 + $0x278] sm:$0xf]
    %v1761 = vld [vmem:[%s4 + $0x27c] sm:$0xf]
    %v1762 = vld [vmem:[%s4 + $0x280] sm:$0xf]
    %v1763 = vld [vmem:[%s4 + $0x284] sm:$0xf]
    %v1764 = vld [vmem:[%s4 + $0x288] sm:$0xf]
    %v1765 = vld [vmem:[%s4 + $0x28c] sm:$0xf]
    %v1766 = vld [vmem:[%s4 + $0x290] sm:$0xf]
    %v1767 = vld [vmem:[%s4 + $0x294] sm:$0xf]
    %v1768 = vld [vmem:[%s4 + $0x298] sm:$0xf]
    %v1769 = vld [vmem:[%s4 + $0x29c] sm:$0xf]
    %v1770 = vld [vmem:[%s4 + $0x2a0] sm:$0xf]
    %v1771 = vld [vmem:[%s4 + $0x2a4] sm:$0xf]
    %v1772 = vld [vmem:[%s4 + $0x2a8] sm:$0xf]
    %v1773 = vld [vmem:[%s4 + $0x2ac] sm:$0xf]
    %v1774 = vld [vmem:[%s4 + $0x2b0] sm:$0xf]
    %v1775 = vld [vmem:[%s4 + $0x2b4] sm:$0xf]
    %v1776 = vld [vmem:[%s4 + $0x2b8] sm:$0xf]
    %v1777 = vld [vmem:[%s4 + $0x2bc] sm:$0xf]
    %v1778 = vld [vmem:[%s4 + $0x2c0] sm:$0xf]
    %v1779 = vld [vmem:[%s4 + $0x2c4] sm:$0xf]
    %v1780 = vld [vmem:[%s4 + $0x2c8] sm:$0xf]
    %v1781 = vld [vmem:[%s4 + $0x2cc] sm:$0xf]
    %v1782 = vld [vmem:[%s4 + $0x2d0] sm:$0xf]
    %v1783 = vld [vmem:[%s4 + $0x2d4] sm:$0xf]
    %v1784 = vld [vmem:[%s4 + $0x2d8] sm:$0xf]
    %v1785 = vld [vmem:[%s4 + $0x2dc] sm:$0xf]
    %v1786 = vld [vmem:[%s4 + $0x2e0] sm:$0xf]
    %v1787 = vld [vmem:[%s4 + $0x2e4] sm:$0xf]
    %v1788 = vld [vmem:[%s4 + $0x2e8] sm:$0xf]
    %v1789 = vld [vmem:[%s4 + $0x2ec] sm:$0xf]
    %v1790 = vld [vmem:[%s4 + $0x2f0] sm:$0xf]
    %v1791 = vld [vmem:[%s4 + $0x2f4] sm:$0xf]
    %v1792 = vld [vmem:[%s4 + $0x2f8] sm:$0xf]
    %v1793 = vld [vmem:[%s4 + $0x2fc] sm:$0xf]
    %v1794 = vld [vmem:[%s4 + $0x300] sm:$0xf]
    %v1795 = vld [vmem:[%s4 + $0x304] sm:$0xf]
    %v1796 = vld [vmem:[%s4 + $0x308] sm:$0xf]
    %v1797 = vld [vmem:[%s4 + $0x30c] sm:$0xf]
    %v1798 = vld [vmem:[%s4 + $0x310] sm:$0xf]
    %v1799 = vld [vmem:[%s4 + $0x314] sm:$0xf]
    %v1800 = vld [vmem:[%s4 + $0x318] sm:$0xf]
    %v1801 = vld [vmem:[%s4 + $0x31c] sm:$0xf]
    %v1802 = vld [vmem:[%s4 + $0x320] sm:$0xf]
    %v1803 = vld [vmem:[%s4 + $0x324] sm:$0xf]
    %v1804 = vld [vmem:[%s4 + $0x328] sm:$0xf]
    %v1805 = vld [vmem:[%s4 + $0x32c] sm:$0xf]
    %v1806 = vld [vmem:[%s4 + $0x330] sm:$0xf]
    %v1807 = vld [vmem:[%s4 + $0x334] sm:$0xf]
    %v1808 = vld [vmem:[%s4 + $0x338] sm:$0xf]
    %v1809 = vld [vmem:[%s4 + $0x33c] sm:$0xf]
    %v1810 = vld [vmem:[%s4 + $0x340] sm:$0xf]
    %v1811 = vld [vmem:[%s4 + $0x344] sm:$0xf]
    %v1812 = vld [vmem:[%s4 + $0x348] sm:$0xf]
    %v1813 = vld [vmem:[%s4 + $0x34c] sm:$0xf]
    %v1814 = vld [vmem:[%s4 + $0x350] sm:$0xf]
    %v1815 = vld [vmem:[%s4 + $0x354] sm:$0xf]
    %v1816 = vld [vmem:[%s4 + $0x358] sm:$0xf]
    %v1817 = vld [vmem:[%s4 + $0x35c] sm:$0xf]
    %v1818 = vld [vmem:[%s4 + $0x360] sm:$0xf]
    %v1819 = vld [vmem:[%s4 + $0x364] sm:$0xf]
    %v1820 = vld [vmem:[%s4 + $0x368] sm:$0xf]
    %v1821 = vld [vmem:[%s4 + $0x36c] sm:$0xf]
    %v1822 = vld [vmem:[%s4 + $0x370] sm:$0xf]
    %v1823 = vld [vmem:[%s4 + $0x374] sm:$0xf]
    %v1824 = vld [vmem:[%s4 + $0x378] sm:$0xf]
    %v1825 = vld [vmem:[%s4 + $0x37c] sm:$0xf]
    %v1826 = vld [vmem:[%s4 + $0x380] sm:$0xf]
    %v1827 = vld [vmem:[%s4 + $0x384] sm:$0xf]
    %v1828 = vld [vmem:[%s4 + $0x388] sm:$0xf]
    %v1829 = vld [vmem:[%s4 + $0x38c] sm:$0xf]
    %v1830 = vld [vmem:[%s4 + $0x390] sm:$0xf]
    %v1831 = vld [vmem:[%s4 + $0x394] sm:$0xf]
    %v1832 = vld [vmem:[%s4 + $0x398] sm:$0xf]
    %v1833 = vld [vmem:[%s4 + $0x39c] sm:$0xf]
    %v1834 = vld [vmem:[%s4 + $0x3a0] sm:$0xf]
    %v1835 = vld [vmem:[%s4 + $0x3a4] sm:$0xf]
    %v1836 = vld [vmem:[%s4 + $0x3a8] sm:$0xf]
    %v1837 = vld [vmem:[%s4 + $0x3ac] sm:$0xf]
    %v1838 = vld [vmem:[%s4 + $0x3b0] sm:$0xf]
    %v1839 = vld [vmem:[%s4 + $0x3b4] sm:$0xf]
    %v1840 = vld [vmem:[%s4 + $0x3b8] sm:$0xf]
    %v1841 = vld [vmem:[%s4 + $0x3bc] sm:$0xf]
    %v1842 = vld [vmem:[%s4 + $0x3c0] sm:$0xf]
    %v1843 = vld [vmem:[%s4 + $0x3c4] sm:$0xf]
    %v1844 = vld [vmem:[%s4 + $0x3c8] sm:$0xf]
    %v1845 = vld [vmem:[%s4 + $0x3cc] sm:$0xf]
    %v1846 = vld [vmem:[%s4 + $0x3d0] sm:$0xf]
    %v1847 = vld [vmem:[%s4 + $0x3d4] sm:$0xf]
    %v1848 = vld [vmem:[%s4 + $0x3d8] sm:$0xf]
    %v1849 = vld [vmem:[%s4 + $0x3dc] sm:$0xf]
    %v1850 = vld [vmem:[%s4 + $0x3e0] sm:$0xf]
    %v1851 = vld [vmem:[%s4 + $0x3e4] sm:$0xf]
    %v1852 = vld [vmem:[%s4 + $0x3e8] sm:$0xf]
    %v1853 = vld [vmem:[%s4 + $0x3ec] sm:$0xf]
    %v1854 = vld [vmem:[%s4 + $0x3f0] sm:$0xf]
    %v1855 = vld [vmem:[%s4 + $0x3f4] sm:$0xf]
    %v1856 = vld [vmem:[%s4 + $0x3f8] sm:$0xf]
    %v1857 = vld [vmem:[%s4 + $0x3fc] sm:$0xf]
    %v1858 = vlaneseq
    %v1859 = vshrl.u32 %v1858, 7
    %v1860 = vsub.s32 5, %v1859
    %v1861 = vrot.slane %v51, %v1860
    %v2118 = vunpack.c.l.b16 %v1602
    %v2119 = vunpack.c.l.b16 %v1603
    %v2120 = vunpack.c.l.b16 %v1604
    %v2121 = vunpack.c.l.b16 %v1605
    %v2122 = vunpack.c.l.b16 %v1606
    %v2123 = vunpack.c.l.b16 %v1607
    %v2124 = vunpack.c.l.b16 %v1608
    %v2125 = vunpack.c.l.b16 %v1609
    %v2126 = vunpack.c.l.b16 %v1610
    %v2127 = vunpack.c.l.b16 %v1611
    %v2128 = vunpack.c.l.b16 %v1612
    %v2129 = vunpack.c.l.b16 %v1613
    %v2130 = vunpack.c.l.b16 %v1614
    %v2131 = vunpack.c.l.b16 %v1615
    %v2132 = vunpack.c.l.b16 %v1616
    %v2133 = vunpack.c.l.b16 %v1617
    %v2134 = vunpack.c.l.b16 %v1618
    %v2135 = vunpack.c.l.b16 %v1619
    %v2136 = vunpack.c.l.b16 %v1620
    %v2137 = vunpack.c.l.b16 %v1621
    %v2138 = vunpack.c.l.b16 %v1622
    %v2139 = vunpack.c.l.b16 %v1623
    %v2140 = vunpack.c.l.b16 %v1624
    %v2141 = vunpack.c.l.b16 %v1625
    %v2142 = vunpack.c.l.b16 %v1626
    %v2143 = vunpack.c.l.b16 %v1627
    %v2144 = vunpack.c.l.b16 %v1628
    %v2145 = vunpack.c.l.b16 %v1629
    %v2146 = vunpack.c.l.b16 %v1630
    %v2147 = vunpack.c.l.b16 %v1631
    %v2148 = vunpack.c.l.b16 %v1632
    %v2149 = vunpack.c.l.b16 %v1633
    %v2150 = vunpack.c.l.b16 %v1634
    %v2151 = vunpack.c.l.b16 %v1635
    %v2152 = vunpack.c.l.b16 %v1636
    %v2153 = vunpack.c.l.b16 %v1637
    %v2154 = vunpack.c.l.b16 %v1638
    %v2155 = vunpack.c.l.b16 %v1639
    %v2156 = vunpack.c.l.b16 %v1640
    %v2157 = vunpack.c.l.b16 %v1641
    %v2158 = vunpack.c.l.b16 %v1642
    %v2159 = vunpack.c.l.b16 %v1643
    %v2160 = vunpack.c.l.b16 %v1644
    %v2161 = vunpack.c.l.b16 %v1645
    %v2162 = vunpack.c.l.b16 %v1646
    %v2163 = vunpack.c.l.b16 %v1647
    %v2164 = vunpack.c.l.b16 %v1648
    %v2165 = vunpack.c.l.b16 %v1649
    %v2166 = vunpack.c.l.b16 %v1650
    %v2167 = vunpack.c.l.b16 %v1651
    %v2168 = vunpack.c.l.b16 %v1652
    %v2169 = vunpack.c.l.b16 %v1653
    %v2170 = vunpack.c.l.b16 %v1654
    %v2171 = vunpack.c.l.b16 %v1655
    %v2172 = vunpack.c.l.b16 %v1656
    %v2173 = vunpack.c.l.b16 %v1657
    %v2174 = vunpack.c.l.b16 %v1658
    %v2175 = vunpack.c.l.b16 %v1659
    %v2176 = vunpack.c.l.b16 %v1660
    %v2177 = vunpack.c.l.b16 %v1661
    %v2178 = vunpack.c.l.b16 %v1662
    %v2179 = vunpack.c.l.b16 %v1663
    %v2180 = vunpack.c.l.b16 %v1664
    %v2181 = vunpack.c.l.b16 %v1665
    %v2182 = vunpack.c.l.b16 %v1666
    %v2183 = vunpack.c.l.b16 %v1667
    %v2184 = vunpack.c.l.b16 %v1668
    %v2185 = vunpack.c.l.b16 %v1669
    %v2186 = vunpack.c.l.b16 %v1670
    %v2187 = vunpack.c.l.b16 %v1671
    %v2188 = vunpack.c.l.b16 %v1672
    %v2189 = vunpack.c.l.b16 %v1673
    %v2190 = vunpack.c.l.b16 %v1674
    %v2191 = vunpack.c.l.b16 %v1675
    %v2192 = vunpack.c.l.b16 %v1676
    %v2193 = vunpack.c.l.b16 %v1677
    %v2194 = vunpack.c.l.b16 %v1678
    %v2195 = vunpack.c.l.b16 %v1679
    %v2196 = vunpack.c.l.b16 %v1680
    %v2197 = vunpack.c.l.b16 %v1681
    %v2198 = vunpack.c.l.b16 %v1682
    %v2199 = vunpack.c.l.b16 %v1683
    %v2200 = vunpack.c.l.b16 %v1684
    %v2201 = vunpack.c.l.b16 %v1685
    %v2202 = vunpack.c.l.b16 %v1686
    %v2203 = vunpack.c.l.b16 %v1687
    %v2204 = vunpack.c.l.b16 %v1688
    %v2205 = vunpack.c.l.b16 %v1689
    %v2206 = vunpack.c.l.b16 %v1690
    %v2207 = vunpack.c.l.b16 %v1691
    %v2208 = vunpack.c.l.b16 %v1692
    %v2209 = vunpack.c.l.b16 %v1693
    %v2210 = vunpack.c.l.b16 %v1694
    %v2211 = vunpack.c.l.b16 %v1695
    %v2212 = vunpack.c.l.b16 %v1696
    %v2213 = vunpack.c.l.b16 %v1697
    %v2214 = vunpack.c.l.b16 %v1698
    %v2215 = vunpack.c.l.b16 %v1699
    %v2216 = vunpack.c.l.b16 %v1700
    %v2217 = vunpack.c.l.b16 %v1701
    %v2218 = vunpack.c.l.b16 %v1702
    %v2219 = vunpack.c.l.b16 %v1703
    %v2220 = vunpack.c.l.b16 %v1704
    %v2221 = vunpack.c.l.b16 %v1705
    %v2222 = vunpack.c.l.b16 %v1706
    %v2223 = vunpack.c.l.b16 %v1707
    %v2224 = vunpack.c.l.b16 %v1708
    %v2225 = vunpack.c.l.b16 %v1709
    %v2226 = vunpack.c.l.b16 %v1710
    %v2227 = vunpack.c.l.b16 %v1711
    %v2228 = vunpack.c.l.b16 %v1712
    %v2229 = vunpack.c.l.b16 %v1713
    %v2230 = vunpack.c.l.b16 %v1714
    %v2231 = vunpack.c.l.b16 %v1715
    %v2232 = vunpack.c.l.b16 %v1716
    %v2233 = vunpack.c.l.b16 %v1717
    %v2234 = vunpack.c.l.b16 %v1718
    %v2235 = vunpack.c.l.b16 %v1719
    %v2236 = vunpack.c.l.b16 %v1720
    %v2237 = vunpack.c.l.b16 %v1721
    %v2238 = vunpack.c.l.b16 %v1722
    %v2239 = vunpack.c.l.b16 %v1723
    %v2240 = vunpack.c.l.b16 %v1724
    %v2241 = vunpack.c.l.b16 %v1725
    %v2242 = vunpack.c.l.b16 %v1726
    %v2243 = vunpack.c.l.b16 %v1727
    %v2244 = vunpack.c.l.b16 %v1728
    %v2245 = vunpack.c.l.b16 %v1729
    %v2246 = vunpack.c.l.b16 %v1730
    %v2247 = vunpack.c.l.b16 %v1731
    %v2248 = vunpack.c.l.b16 %v1732
    %v2249 = vunpack.c.l.b16 %v1733
    %v2250 = vunpack.c.l.b16 %v1734
    %v2251 = vunpack.c.l.b16 %v1735
    %v2252 = vunpack.c.l.b16 %v1736
    %v2253 = vunpack.c.l.b16 %v1737
    %v2254 = vunpack.c.l.b16 %v1738
    %v2255 = vunpack.c.l.b16 %v1739
    %v2256 = vunpack.c.l.b16 %v1740
    %v2257 = vunpack.c.l.b16 %v1741
    %v2258 = vunpack.c.l.b16 %v1742
    %v2259 = vunpack.c.l.b16 %v1743
    %v2260 = vunpack.c.l.b16 %v1744
    %v2261 = vunpack.c.l.b16 %v1745
    %v2262 = vunpack.c.l.b16 %v1746
    %v2263 = vunpack.c.l.b16 %v1747
    %v2264 = vunpack.c.l.b16 %v1748
    %v2265 = vunpack.c.l.b16 %v1749
    %v2266 = vunpack.c.l.b16 %v1750
    %v2267 = vunpack.c.l.b16 %v1751
    %v2268 = vunpack.c.l.b16 %v1752
    %v2269 = vunpack.c.l.b16 %v1753
    %v2270 = vunpack.c.l.b16 %v1754
    %v2271 = vunpack.c.l.b16 %v1755
    %v2272 = vunpack.c.l.b16 %v1756
    %v2273 = vunpack.c.l.b16 %v1757
    %v2274 = vunpack.c.l.b16 %v1758
    %v2275 = vunpack.c.l.b16 %v1759
    %v2276 = vunpack.c.l.b16 %v1760
    %v2277 = vunpack.c.l.b16 %v1761
    %v2278 = vunpack.c.l.b16 %v1762
    %v2279 = vunpack.c.l.b16 %v1763
    %v2280 = vunpack.c.l.b16 %v1764
    %v2281 = vunpack.c.l.b16 %v1765
    %v2282 = vunpack.c.l.b16 %v1766
    %v2283 = vunpack.c.l.b16 %v1767
    %v2284 = vunpack.c.l.b16 %v1768
    %v2285 = vunpack.c.l.b16 %v1769
    %v2286 = vunpack.c.l.b16 %v1770
    %v2287 = vunpack.c.l.b16 %v1771
    %v2288 = vunpack.c.l.b16 %v1772
    %v2289 = vunpack.c.l.b16 %v1773
    %v2290 = vunpack.c.l.b16 %v1774
    %v2291 = vunpack.c.l.b16 %v1775
    %v2292 = vunpack.c.l.b16 %v1776
    %v2293 = vunpack.c.l.b16 %v1777
    %v2294 = vunpack.c.l.b16 %v1778
    %v2295 = vunpack.c.l.b16 %v1779
    %v2296 = vunpack.c.l.b16 %v1780
    %v2297 = vunpack.c.l.b16 %v1781
    %v2298 = vunpack.c.l.b16 %v1782
    %v2299 = vunpack.c.l.b16 %v1783
    %v2300 = vunpack.c.l.b16 %v1784
    %v2301 = vunpack.c.l.b16 %v1785
    %v2302 = vunpack.c.l.b16 %v1786
    %v2303 = vunpack.c.l.b16 %v1787
    %v2304 = vunpack.c.l.b16 %v1788
    %v2305 = vunpack.c.l.b16 %v1789
    %v2306 = vunpack.c.l.b16 %v1790
    %v2307 = vunpack.c.l.b16 %v1791
    %v2308 = vunpack.c.l.b16 %v1792
    %v2309 = vunpack.c.l.b16 %v1793
    %v2310 = vunpack.c.l.b16 %v1794
    %v2311 = vunpack.c.l.b16 %v1795
    %v2312 = vunpack.c.l.b16 %v1796
    %v2313 = vunpack.c.l.b16 %v1797
    %v2314 = vunpack.c.l.b16 %v1798
    %v2315 = vunpack.c.l.b16 %v1799
    %v2316 = vunpack.c.l.b16 %v1800
    %v2317 = vunpack.c.l.b16 %v1801
    %v2318 = vunpack.c.l.b16 %v1802
    %v2319 = vunpack.c.l.b16 %v1803
    %v2320 = vunpack.c.l.b16 %v1804
    %v2321 = vunpack.c.l.b16 %v1805
    %v2322 = vunpack.c.l.b16 %v1806
    %v2323 = vunpack.c.l.b16 %v1807
    %v2324 = vunpack.c.l.b16 %v1808
    %v2325 = vunpack.c.l.b16 %v1809
    %v2326 = vunpack.c.l.b16 %v1810
    %v2327 = vunpack.c.l.b16 %v1811
    %v2328 = vunpack.c.l.b16 %v1812
    %v2329 = vunpack.c.l.b16 %v1813
    %v2330 = vunpack.c.l.b16 %v1814
    %v2331 = vunpack.c.l.b16 %v1815
    %v2332 = vunpack.c.l.b16 %v1816
    %v2333 = vunpack.c.l.b16 %v1817
    %v2334 = vunpack.c.l.b16 %v1818
    %v2335 = vunpack.c.l.b16 %v1819
    %v2336 = vunpack.c.l.b16 %v1820
    %v2337 = vunpack.c.l.b16 %v1821
    %v2338 = vunpack.c.l.b16 %v1822
    %v2339 = vunpack.c.l.b16 %v1823
    %v2340 = vunpack.c.l.b16 %v1824
    %v2341 = vunpack.c.l.b16 %v1825
    %v2342 = vunpack.c.l.b16 %v1826
    %v2343 = vunpack.c.l.b16 %v1827
    %v2344 = vunpack.c.l.b16 %v1828
    %v2345 = vunpack.c.l.b16 %v1829
    %v2346 = vunpack.c.l.b16 %v1830
    %v2347 = vunpack.c.l.b16 %v1831
    %v2348 = vunpack.c.l.b16 %v1832
    %v2349 = vunpack.c.l.b16 %v1833
    %v2350 = vunpack.c.l.b16 %v1834
    %v2351 = vunpack.c.l.b16 %v1835
    %v2352 = vunpack.c.l.b16 %v1836
    %v2353 = vunpack.c.l.b16 %v1837
    %v2354 = vunpack.c.l.b16 %v1838
    %v2355 = vunpack.c.l.b16 %v1839
    %v2356 = vunpack.c.l.b16 %v1840
    %v2357 = vunpack.c.l.b16 %v1841
    %v2358 = vunpack.c.l.b16 %v1842
    %v2359 = vunpack.c.l.b16 %v1843
    %v2360 = vunpack.c.l.b16 %v1844
    %v2361 = vunpack.c.l.b16 %v1845
    %v2362 = vunpack.c.l.b16 %v1846
    %v2363 = vunpack.c.l.b16 %v1847
    %v2364 = vunpack.c.l.b16 %v1848
    %v2365 = vunpack.c.l.b16 %v1849
    %v2366 = vunpack.c.l.b16 %v1850
    %v2367 = vunpack.c.l.b16 %v1851
    %v2368 = vunpack.c.l.b16 %v1852
    %v2369 = vunpack.c.l.b16 %v1853
    %v2370 = vunpack.c.l.b16 %v1854
    %v2371 = vunpack.c.l.b16 %v1855
    %v2372 = vunpack.c.l.b16 %v1856
    %v2373 = vunpack.c.l.b16 %v1857
    %v2374 = vpack.c.b16 %v2119, %v2118
    %v2375 = vpack.c.b16 %v2121, %v2120
    %v2376 = vpack.c.b16 %v2123, %v2122
    %v2377 = vpack.c.b16 %v2125, %v2124
    %v2378 = vpack.c.b16 %v2127, %v2126
    %v2379 = vpack.c.b16 %v2129, %v2128
    %v2380 = vpack.c.b16 %v2131, %v2130
    %v2381 = vpack.c.b16 %v2133, %v2132
    %v2382 = vpack.c.b16 %v2135, %v2134
    %v2383 = vpack.c.b16 %v2137, %v2136
    %v2384 = vpack.c.b16 %v2139, %v2138
    %v2385 = vpack.c.b16 %v2141, %v2140
    %v2386 = vpack.c.b16 %v2143, %v2142
    %v2387 = vpack.c.b16 %v2145, %v2144
    %v2388 = vpack.c.b16 %v2147, %v2146
    %v2389 = vpack.c.b16 %v2149, %v2148
    %v2390 = vpack.c.b16 %v2151, %v2150
    %v2391 = vpack.c.b16 %v2153, %v2152
    %v2392 = vpack.c.b16 %v2155, %v2154
    %v2393 = vpack.c.b16 %v2157, %v2156
    %v2394 = vpack.c.b16 %v2159, %v2158
    %v2395 = vpack.c.b16 %v2161, %v2160
    %v2396 = vpack.c.b16 %v2163, %v2162
    %v2397 = vpack.c.b16 %v2165, %v2164
    %v2398 = vpack.c.b16 %v2167, %v2166
    %v2399 = vpack.c.b16 %v2169, %v2168
    %v2400 = vpack.c.b16 %v2171, %v2170
    %v2401 = vpack.c.b16 %v2173, %v2172
    %v2402 = vpack.c.b16 %v2175, %v2174
    %v2403 = vpack.c.b16 %v2177, %v2176
    %v2404 = vpack.c.b16 %v2179, %v2178
    %v2405 = vpack.c.b16 %v2181, %v2180
    %v2406 = vpack.c.b16 %v2183, %v2182
    %v2407 = vpack.c.b16 %v2185, %v2184
    %v2408 = vpack.c.b16 %v2187, %v2186
    %v2409 = vpack.c.b16 %v2189, %v2188
    %v2410 = vpack.c.b16 %v2191, %v2190
    %v2411 = vpack.c.b16 %v2193, %v2192
    %v2412 = vpack.c.b16 %v2195, %v2194
    %v2413 = vpack.c.b16 %v2197, %v2196
    %v2414 = vpack.c.b16 %v2199, %v2198
    %v2415 = vpack.c.b16 %v2201, %v2200
    %v2416 = vpack.c.b16 %v2203, %v2202
    %v2417 = vpack.c.b16 %v2205, %v2204
    %v2418 = vpack.c.b16 %v2207, %v2206
    %v2419 = vpack.c.b16 %v2209, %v2208
    %v2420 = vpack.c.b16 %v2211, %v2210
    %v2421 = vpack.c.b16 %v2213, %v2212
    %v2422 = vpack.c.b16 %v2215, %v2214
    %v2423 = vpack.c.b16 %v2217, %v2216
    %v2424 = vpack.c.b16 %v2219, %v2218
    %v2425 = vpack.c.b16 %v2221, %v2220
    %v2426 = vpack.c.b16 %v2223, %v2222
    %v2427 = vpack.c.b16 %v2225, %v2224
    %v2428 = vpack.c.b16 %v2227, %v2226
    %v2429 = vpack.c.b16 %v2229, %v2228
    %v2430 = vpack.c.b16 %v2231, %v2230
    %v2431 = vpack.c.b16 %v2233, %v2232
    %v2432 = vpack.c.b16 %v2235, %v2234
    %v2433 = vpack.c.b16 %v2237, %v2236
    %v2434 = vpack.c.b16 %v2239, %v2238
    %v2435 = vpack.c.b16 %v2241, %v2240
    %v2436 = vpack.c.b16 %v2243, %v2242
    %v2437 = vpack.c.b16 %v2245, %v2244
    %v2438 = vpack.c.b16 %v2247, %v2246
    %v2439 = vpack.c.b16 %v2249, %v2248
    %v2440 = vpack.c.b16 %v2251, %v2250
    %v2441 = vpack.c.b16 %v2253, %v2252
    %v2442 = vpack.c.b16 %v2255, %v2254
    %v2443 = vpack.c.b16 %v2257, %v2256
    %v2444 = vpack.c.b16 %v2259, %v2258
    %v2445 = vpack.c.b16 %v2261, %v2260
    %v2446 = vpack.c.b16 %v2263, %v2262
    %v2447 = vpack.c.b16 %v2265, %v2264
    %v2448 = vpack.c.b16 %v2267, %v2266
    %v2449 = vpack.c.b16 %v2269, %v2268
    %v2450 = vpack.c.b16 %v2271, %v2270
    %v2451 = vpack.c.b16 %v2273, %v2272
    %v2452 = vpack.c.b16 %v2275, %v2274
    %v2453 = vpack.c.b16 %v2277, %v2276
    %v2454 = vpack.c.b16 %v2279, %v2278
    %v2455 = vpack.c.b16 %v2281, %v2280
    %v2456 = vpack.c.b16 %v2283, %v2282
    %v2457 = vpack.c.b16 %v2285, %v2284
    %v2458 = vpack.c.b16 %v2287, %v2286
    %v2459 = vpack.c.b16 %v2289, %v2288
    %v2460 = vpack.c.b16 %v2291, %v2290
    %v2461 = vpack.c.b16 %v2293, %v2292
    %v2462 = vpack.c.b16 %v2295, %v2294
    %v2463 = vpack.c.b16 %v2297, %v2296
    %v2464 = vpack.c.b16 %v2299, %v2298
    %v2465 = vpack.c.b16 %v2301, %v2300
    %v2466 = vpack.c.b16 %v2303, %v2302
    %v2467 = vpack.c.b16 %v2305, %v2304
    %v2468 = vpack.c.b16 %v2307, %v2306
    %v2469 = vpack.c.b16 %v2309, %v2308
    %v2470 = vpack.c.b16 %v2311, %v2310
    %v2471 = vpack.c.b16 %v2313, %v2312
    %v2472 = vpack.c.b16 %v2315, %v2314
    %v2473 = vpack.c.b16 %v2317, %v2316
    %v2474 = vpack.c.b16 %v2319, %v2318
    %v2475 = vpack.c.b16 %v2321, %v2320
    %v2476 = vpack.c.b16 %v2323, %v2322
    %v2477 = vpack.c.b16 %v2325, %v2324
    %v2478 = vpack.c.b16 %v2327, %v2326
    %v2479 = vpack.c.b16 %v2329, %v2328
    %v2480 = vpack.c.b16 %v2331, %v2330
    %v2481 = vpack.c.b16 %v2333, %v2332
    %v2482 = vpack.c.b16 %v2335, %v2334
    %v2483 = vpack.c.b16 %v2337, %v2336
    %v2484 = vpack.c.b16 %v2339, %v2338
    %v2485 = vpack.c.b16 %v2341, %v2340
    %v2486 = vpack.c.b16 %v2343, %v2342
    %v2487 = vpack.c.b16 %v2345, %v2344
    %v2488 = vpack.c.b16 %v2347, %v2346
    %v2489 = vpack.c.b16 %v2349, %v2348
    %v2490 = vpack.c.b16 %v2351, %v2350
    %v2491 = vpack.c.b16 %v2353, %v2352
    %v2492 = vpack.c.b16 %v2355, %v2354
    %v2493 = vpack.c.b16 %v2357, %v2356
    %v2494 = vpack.c.b16 %v2359, %v2358
    %v2495 = vpack.c.b16 %v2361, %v2360
    %v2496 = vpack.c.b16 %v2363, %v2362
    %v2497 = vpack.c.b16 %v2365, %v2364
    %v2498 = vpack.c.b16 %v2367, %v2366
    %v2499 = vpack.c.b16 %v2369, %v2368
    %v2500 = vpack.c.b16 %v2371, %v2370
    %v2501 = vpack.c.b16 %v2373, %v2372
    %2630 = vmatprep.subr.bf16.mxu0 0
    %2631 = vmatpush1.bf16.msra.mxu0 %v2374
    %2632 = vmatprep.subr.bf16.mxu0 0
    %2633 = vmatpush1.bf16.msra.mxu0 %v2375
    %2634 = vmatprep.subr.bf16.mxu0 0
    %2635 = vmatpush1.bf16.msra.mxu0 %v2376
    %2636 = vmatprep.subr.bf16.mxu0 0
    %2637 = vmatpush1.bf16.msra.mxu0 %v2377
    %2638 = vmatprep.subr.bf16.mxu0 0
    %2639 = vmatpush1.bf16.msra.mxu0 %v2378
    %2640 = vmatprep.subr.bf16.mxu0 0
    %2641 = vmatpush1.bf16.msra.mxu0 %v2379
    %2642 = vmatprep.subr.bf16.mxu0 0
    %2643 = vmatpush1.bf16.msra.mxu0 %v2380
    %2644 = vmatprep.subr.bf16.mxu0 0
    %2645 = vmatpush1.bf16.msra.mxu0 %v2381
    %2646 = vmatprep.subr.bf16.mxu0 0
    %2647 = vmatpush1.bf16.msra.mxu0 %v2382
    %2648 = vmatprep.subr.bf16.mxu0 0
    %2649 = vmatpush1.bf16.msra.mxu0 %v2383
    %2650 = vmatprep.subr.bf16.mxu0 0
    %2651 = vmatpush1.bf16.msra.mxu0 %v2384
    %2652 = vmatprep.subr.bf16.mxu0 0
    %2653 = vmatpush1.bf16.msra.mxu0 %v2385
    %2654 = vmatprep.subr.bf16.mxu0 0
    %2655 = vmatpush1.bf16.msra.mxu0 %v2386
    %2656 = vmatprep.subr.bf16.mxu0 0
    %2657 = vmatpush1.bf16.msra.mxu0 %v2387
    %2658 = vmatprep.subr.bf16.mxu0 0
    %2659 = vmatpush1.bf16.msra.mxu0 %v2388
    %2660 = vmatprep.subr.bf16.mxu0 0
    %2661 = vmatpush1.bf16.msra.mxu0 %v2389
    %2662 = vmatprep.mubr.bf16.mxu0 %v1587
    %2663 = vmatmul.mubr.bf16.gmra.mrb[0].mxu0 %v1586
    %v2664 = vpop.f32.mrb[0].mxu0
    %v2665 = vadd.f32 %v1861, %v2664
    %v2666 = vpop.f32.mrb[0].mxu0
    %v2667 = vpop.f32.mrb[0].mxu0
    %v2668 = vadd.f32 %v1861, %v2667
    %v2669 = vpop.f32.mrb[0].mxu0
    %2670 = vdwg.mxu0
    %2671 = vmatprep.subr.bf16.mxu0 0
    %2672 = vmatpush1.bf16.msra.mxu0 %v2390
    %2673 = vmatprep.subr.bf16.mxu0 0
    %2674 = vmatpush1.bf16.msra.mxu0 %v2391
    %2675 = vmatprep.subr.bf16.mxu0 0
    %2676 = vmatpush1.bf16.msra.mxu0 %v2392
    %2677 = vmatprep.subr.bf16.mxu0 0
    %2678 = vmatpush1.bf16.msra.mxu0 %v2393
    %2679 = vmatprep.subr.bf16.mxu0 0
    %2680 = vmatpush1.bf16.msra.mxu0 %v2394
    %2681 = vmatprep.subr.bf16.mxu0 0
    %2682 = vmatpush1.bf16.msra.mxu0 %v2395
    %2683 = vmatprep.subr.bf16.mxu0 0
    %2684 = vmatpush1.bf16.msra.mxu0 %v2396
    %2685 = vmatprep.subr.bf16.mxu0 0
    %2686 = vmatpush1.bf16.msra.mxu0 %v2397
    %2687 = vmatprep.subr.bf16.mxu0 0
    %2688 = vmatpush1.bf16.msra.mxu0 %v2398
    %2689 = vmatprep.subr.bf16.mxu0 0
    %2690 = vmatpush1.bf16.msra.mxu0 %v2399
    %2691 = vmatprep.subr.bf16.mxu0 0
    %2692 = vmatpush1.bf16.msra.mxu0 %v2400
    %2693 = vmatprep.subr.bf16.mxu0 0
    %2694 = vmatpush1.bf16.msra.mxu0 %v2401
    %2695 = vmatprep.subr.bf16.mxu0 0
    %2696 = vmatpush1.bf16.msra.mxu0 %v2402
    %2697 = vmatprep.subr.bf16.mxu0 0
    %2698 = vmatpush1.bf16.msra.mxu0 %v2403
    %2699 = vmatprep.subr.bf16.mxu0 0
    %2700 = vmatpush1.bf16.msra.mxu0 %v2404
    %2701 = vmatprep.subr.bf16.mxu0 0
    %2702 = vmatpush1.bf16.msra.mxu0 %v2405
    %2703 = vmatprep.mubr.bf16.mxu0 %v1589
    %2704 = vmatmul.mubr.bf16.gmra.mrb[0].mxu0 %v1588
    %v2705 = vpop.f32.mrb[0].mxu0
    %v2706 = vadd.f32 %v2665, %v2705
    %v2707 = vpop.f32.mrb[0].mxu0
    %v2708 = vpop.f32.mrb[0].mxu0
    %v2709 = vadd.f32 %v2668, %v2708
    %v2710 = vpop.f32.mrb[0].mxu0
    %2711 = vdwg.mxu0
    %2712 = vmatprep.subr.bf16.mxu0 0
    %2713 = vmatpush1.bf16.msra.mxu0 %v2406
    %2714 = vmatprep.subr.bf16.mxu0 0
    %2715 = vmatpush1.bf16.msra.mxu0 %v2407
    %2716 = vmatprep.subr.bf16.mxu0 0
    %2717 = vmatpush1.bf16.msra.mxu0 %v2408
    %2718 = vmatprep.subr.bf16.mxu0 0
    %2719 = vmatpush1.bf16.msra.mxu0 %v2409
    %2720 = vmatprep.subr.bf16.mxu0 0
    %2721 = vmatpush1.bf16.msra.mxu0 %v2410
    %2722 = vmatprep.subr.bf16.mxu0 0
    %2723 = vmatpush1.bf16.msra.mxu0 %v2411
    %2724 = vmatprep.subr.bf16.mxu0 0
    %2725 = vmatpush1.bf16.msra.mxu0 %v2412
    %2726 = vmatprep.subr.bf16.mxu0 0
    %2727 = vmatpush1.bf16.msra.mxu0 %v2413
    %2728 = vmatprep.subr.bf16.mxu0 0
    %2729 = vmatpush1.bf16.msra.mxu0 %v2414
    %2730 = vmatprep.subr.bf16.mxu0 0
    %2731 = vmatpush1.bf16.msra.mxu0 %v2415
    %2732 = vmatprep.subr.bf16.mxu0 0
    %2733 = vmatpush1.bf16.msra.mxu0 %v2416
    %2734 = vmatprep.subr.bf16.mxu0 0
    %2735 = vmatpush1.bf16.msra.mxu0 %v2417
    %2736 = vmatprep.subr.bf16.mxu0 0
    %2737 = vmatpush1.bf16.msra.mxu0 %v2418
    %2738 = vmatprep.subr.bf16.mxu0 0
    %2739 = vmatpush1.bf16.msra.mxu0 %v2419
    %2740 = vmatprep.subr.bf16.mxu0 0
    %2741 = vmatpush1.bf16.msra.mxu0 %v2420
    %2742 = vmatprep.subr.bf16.mxu0 0
    %2743 = vmatpush1.bf16.msra.mxu0 %v2421
    %2744 = vmatprep.mubr.bf16.mxu0 %v1591
    %2745 = vmatmul.mubr.bf16.gmra.mrb[0].mxu0 %v1590
    %v2746 = vpop.f32.mrb[0].mxu0
    %v2747 = vadd.f32 %v2706, %v2746
    %v2748 = vpop.f32.mrb[0].mxu0
    %v2749 = vpop.f32.mrb[0].mxu0
    %v2750 = vadd.f32 %v2709, %v2749
    %v2751 = vpop.f32.mrb[0].mxu0
    %2752 = vdwg.mxu0
    %2753 = vmatprep.subr.bf16.mxu0 0
    %2754 = vmatpush1.bf16.msra.mxu0 %v2422
    %2755 = vmatprep.subr.bf16.mxu0 0
    %2756 = vmatpush1.bf16.msra.mxu0 %v2423
    %2757 = vmatprep.subr.bf16.mxu0 0
    %2758 = vmatpush1.bf16.msra.mxu0 %v2424
    %2759 = vmatprep.subr.bf16.mxu0 0
    %2760 = vmatpush1.bf16.msra.mxu0 %v2425
    %2761 = vmatprep.subr.bf16.mxu0 0
    %2762 = vmatpush1.bf16.msra.mxu0 %v2426
    %2763 = vmatprep.subr.bf16.mxu0 0
    %2764 = vmatpush1.bf16.msra.mxu0 %v2427
    %2765 = vmatprep.subr.bf16.mxu0 0
    %2766 = vmatpush1.bf16.msra.mxu0 %v2428
    %2767 = vmatprep.subr.bf16.mxu0 0
    %2768 = vmatpush1.bf16.msra.mxu0 %v2429
    %2769 = vmatprep.subr.bf16.mxu0 0
    %2770 = vmatpush1.bf16.msra.mxu0 %v2430
    %2771 = vmatprep.subr.bf16.mxu0 0
    %2772 = vmatpush1.bf16.msra.mxu0 %v2431
    %2773 = vmatprep.subr.bf16.mxu0 0
    %2774 = vmatpush1.bf16.msra.mxu0 %v2432
    %2775 = vmatprep.subr.bf16.mxu0 0
    %2776 = vmatpush1.bf16.msra.mxu0 %v2433
    %2777 = vmatprep.subr.bf16.mxu0 0
    %2778 = vmatpush1.bf16.msra.mxu0 %v2434
    %2779 = vmatprep.subr.bf16.mxu0 0
    %2780 = vmatpush1.bf16.msra.mxu0 %v2435
    %2781 = vmatprep.subr.bf16.mxu0 0
    %2782 = vmatpush1.bf16.msra.mxu0 %v2436
    %2783 = vmatprep.subr.bf16.mxu0 0
    %2784 = vmatpush1.bf16.msra.mxu0 %v2437
    %2785 = vmatprep.mubr.bf16.mxu0 %v1593
    %2786 = vmatmul.mubr.bf16.gmra.mrb[0].mxu0 %v1592
    %v2787 = vpop.f32.mrb[0].mxu0
    %v2788 = vadd.f32 %v2747, %v2787
    %v2789 = vpop.f32.mrb[0].mxu0
    %v2790 = vpop.f32.mrb[0].mxu0
    %v2791 = vadd.f32 %v2750, %v2790
    %v2792 = vpop.f32.mrb[0].mxu0
    %2793 = vdwg.mxu0
    %2794 = vmatprep.subr.bf16.mxu0 0
    %2795 = vmatpush1.bf16.msra.mxu0 %v2438
    %2796 = vmatprep.subr.bf16.mxu0 0
    %2797 = vmatpush1.bf16.msra.mxu0 %v2439
    %2798 = vmatprep.subr.bf16.mxu0 0
    %2799 = vmatpush1.bf16.msra.mxu0 %v2440
    %2800 = vmatprep.subr.bf16.mxu0 0
    %2801 = vmatpush1.bf16.msra.mxu0 %v2441
    %2802 = vmatprep.subr.bf16.mxu0 0
    %2803 = vmatpush1.bf16.msra.mxu0 %v2442
    %2804 = vmatprep.subr.bf16.mxu0 0
    %2805 = vmatpush1.bf16.msra.mxu0 %v2443
    %2806 = vmatprep.subr.bf16.mxu0 0
    %2807 = vmatpush1.bf16.msra.mxu0 %v2444
    %2808 = vmatprep.subr.bf16.mxu0 0
    %2809 = vmatpush1.bf16.msra.mxu0 %v2445
    %2810 = vmatprep.subr.bf16.mxu0 0
    %2811 = vmatpush1.bf16.msra.mxu0 %v2446
    %2812 = vmatprep.subr.bf16.mxu0 0
    %2813 = vmatpush1.bf16.msra.mxu0 %v2447
    %2814 = vmatprep.subr.bf16.mxu0 0
    %2815 = vmatpush1.bf16.msra.mxu0 %v2448
    %2816 = vmatprep.subr.bf16.mxu0 0
    %2817 = vmatpush1.bf16.msra.mxu0 %v2449
    %2818 = vmatprep.subr.bf16.mxu0 0
    %2819 = vmatpush1.bf16.msra.mxu0 %v2450
    %2820 = vmatprep.subr.bf16.mxu0 0
    %2821 = vmatpush1.bf16.msra.mxu0 %v2451
    %2822 = vmatprep.subr.bf16.mxu0 0
    %2823 = vmatpush1.bf16.msra.mxu0 %v2452
    %2824 = vmatprep.subr.bf16.mxu0 0
    %2825 = vmatpush1.bf16.msra.mxu0 %v2453
    %2826 = vmatprep.mubr.bf16.mxu0 %v1595
    %2827 = vmatmul.mubr.bf16.gmra.mrb[0].mxu0 %v1594
    %v2828 = vpop.f32.mrb[0].mxu0
    %v2829 = vadd.f32 %v2788, %v2828
    %v2830 = vpop.f32.mrb[0].mxu0
    %v2831 = vpop.f32.mrb[0].mxu0
    %v2832 = vadd.f32 %v2791, %v2831
    %v2833 = vpop.f32.mrb[0].mxu0
    %2834 = vdwg.mxu0
    %2835 = vmatprep.subr.bf16.mxu0 0
    %2836 = vmatpush1.bf16.msra.mxu0 %v2454
    %2837 = vmatprep.subr.bf16.mxu0 0
    %2838 = vmatpush1.bf16.msra.mxu0 %v2455
    %2839 = vmatprep.subr.bf16.mxu0 0
    %2840 = vmatpush1.bf16.msra.mxu0 %v2456
    %2841 = vmatprep.subr.bf16.mxu0 0
    %2842 = vmatpush1.bf16.msra.mxu0 %v2457
    %2843 = vmatprep.subr.bf16.mxu0 0
    %2844 = vmatpush1.bf16.msra.mxu0 %v2458
    %2845 = vmatprep.subr.bf16.mxu0 0
    %2846 = vmatpush1.bf16.msra.mxu0 %v2459
    %2847 = vmatprep.subr.bf16.mxu0 0
    %2848 = vmatpush1.bf16.msra.mxu0 %v2460
    %2849 = vmatprep.subr.bf16.mxu0 0
    %2850 = vmatpush1.bf16.msra.mxu0 %v2461
    %2851 = vmatprep.subr.bf16.mxu0 0
    %2852 = vmatpush1.bf16.msra.mxu0 %v2462
    %2853 = vmatprep.subr.bf16.mxu0 0
    %2854 = vmatpush1.bf16.msra.mxu0 %v2463
    %2855 = vmatprep.subr.bf16.mxu0 0
    %2856 = vmatpush1.bf16.msra.mxu0 %v2464
    %2857 = vmatprep.subr.bf16.mxu0 0
    %2858 = vmatpush1.bf16.msra.mxu0 %v2465
    %2859 = vmatprep.subr.bf16.mxu0 0
    %2860 = vmatpush1.bf16.msra.mxu0 %v2466
    %2861 = vmatprep.subr.bf16.mxu0 0
    %2862 = vmatpush1.bf16.msra.mxu0 %v2467
    %2863 = vmatprep.subr.bf16.mxu0 0
    %2864 = vmatpush1.bf16.msra.mxu0 %v2468
    %2865 = vmatprep.subr.bf16.mxu0 0
    %2866 = vmatpush1.bf16.msra.mxu0 %v2469
    %2867 = vmatprep.mubr.bf16.mxu0 %v1597
    %2868 = vmatmul.mubr.bf16.gmra.mrb[0].mxu0 %v1596
    %v2869 = vpop.f32.mrb[0].mxu0
    %v2870 = vadd.f32 %v2829, %v2869
    %v2871 = vpop.f32.mrb[0].mxu0
    %v2872 = vpop.f32.mrb[0].mxu0
    %v2873 = vadd.f32 %v2832, %v2872
    %v2874 = vpop.f32.mrb[0].mxu0
    %2875 = vdwg.mxu0
    %2876 = vmatprep.subr.bf16.mxu0 0
    %2877 = vmatpush1.bf16.msra.mxu0 %v2470
    %2878 = vmatprep.subr.bf16.mxu0 0
    %2879 = vmatpush1.bf16.msra.mxu0 %v2471
    %2880 = vmatprep.subr.bf16.mxu0 0
    %2881 = vmatpush1.bf16.msra.mxu0 %v2472
    %2882 = vmatprep.subr.bf16.mxu0 0
    %2883 = vmatpush1.bf16.msra.mxu0 %v2473
    %2884 = vmatprep.subr.bf16.mxu0 0
    %2885 = vmatpush1.bf16.msra.mxu0 %v2474
    %2886 = vmatprep.subr.bf16.mxu0 0
    %2887 = vmatpush1.bf16.msra.mxu0 %v2475
    %2888 = vmatprep.subr.bf16.mxu0 0
    %2889 = vmatpush1.bf16.msra.mxu0 %v2476
    %2890 = vmatprep.subr.bf16.mxu0 0
    %2891 = vmatpush1.bf16.msra.mxu0 %v2477
    %2892 = vmatprep.subr.bf16.mxu0 0
    %2893 = vmatpush1.bf16.msra.mxu0 %v2478
    %2894 = vmatprep.subr.bf16.mxu0 0
    %2895 = vmatpush1.bf16.msra.mxu0 %v2479
    %2896 = vmatprep.subr.bf16.mxu0 0
    %2897 = vmatpush1.bf16.msra.mxu0 %v2480
    %2898 = vmatprep.subr.bf16.mxu0 0
    %2899 = vmatpush1.bf16.msra.mxu0 %v2481
    %2900 = vmatprep.subr.bf16.mxu0 0
    %2901 = vmatpush1.bf16.msra.mxu0 %v2482
    %2902 = vmatprep.subr.bf16.mxu0 0
    %2903 = vmatpush1.bf16.msra.mxu0 %v2483
    %2904 = vmatprep.subr.bf16.mxu0 0
    %2905 = vmatpush1.bf16.msra.mxu0 %v2484
    %2906 = vmatprep.subr.bf16.mxu0 0
    %2907 = vmatpush1.bf16.msra.mxu0 %v2485
    %2908 = vmatprep.mubr.bf16.mxu0 %v1599
    %2909 = vmatmul.mubr.bf16.gmra.mrb[0].mxu0 %v1598
    %v2910 = vpop.f32.mrb[0].mxu0
    %v2911 = vadd.f32 %v2870, %v2910
    %v2912 = vpop.f32.mrb[0].mxu0
    %v2913 = vpop.f32.mrb[0].mxu0
    %v2914 = vadd.f32 %v2873, %v2913
    %v2915 = vpop.f32.mrb[0].mxu0
    %2916 = vdwg.mxu0
    %2917 = vmatprep.subr.bf16.mxu0 0
    %2918 = vmatpush1.bf16.msra.mxu0 %v2486
    %2919 = vmatprep.subr.bf16.mxu0 0
    %2920 = vmatpush1.bf16.msra.mxu0 %v2487
    %2921 = vmatprep.subr.bf16.mxu0 0
    %2922 = vmatpush1.bf16.msra.mxu0 %v2488
    %2923 = vmatprep.subr.bf16.mxu0 0
    %2924 = vmatpush1.bf16.msra.mxu0 %v2489
    %2925 = vmatprep.subr.bf16.mxu0 0
    %2926 = vmatpush1.bf16.msra.mxu0 %v2490
    %2927 = vmatprep.subr.bf16.mxu0 0
    %2928 = vmatpush1.bf16.msra.mxu0 %v2491
    %2929 = vmatprep.subr.bf16.mxu0 0
    %2930 = vmatpush1.bf16.msra.mxu0 %v2492
    %2931 = vmatprep.subr.bf16.mxu0 0
    %2932 = vmatpush1.bf16.msra.mxu0 %v2493
    %2933 = vmatprep.subr.bf16.mxu0 0
    %2934 = vmatpush1.bf16.msra.mxu0 %v2494
    %2935 = vmatprep.subr.bf16.mxu0 0
    %2936 = vmatpush1.bf16.msra.mxu0 %v2495
    %2937 = vmatprep.subr.bf16.mxu0 0
    %2938 = vmatpush1.bf16.msra.mxu0 %v2496
    %2939 = vmatprep.subr.bf16.mxu0 0
    %2940 = vmatpush1.bf16.msra.mxu0 %v2497
    %2941 = vmatprep.subr.bf16.mxu0 0
    %2942 = vmatpush1.bf16.msra.mxu0 %v2498
    %2943 = vmatprep.subr.bf16.mxu0 0
    %2944 = vmatpush1.bf16.msra.mxu0 %v2499
    %2945 = vmatprep.subr.bf16.mxu0 0
    %2946 = vmatpush1.bf16.msra.mxu0 %v2500
    %2947 = vmatprep.subr.bf16.mxu0 0
    %2948 = vmatpush1.bf16.msra.mxu0 %v2501
    %2949 = vmatprep.mubr.bf16.mxu0 %v1601
    %2950 = vmatmul.mubr.bf16.gmra.mrb[0].mxu0 %v1600
    %v2951 = vpop.f32.mrb[0].mxu0
    %v2952 = vadd.f32 %v2911, %v2951
    %v2953 = vpop.f32.mrb[0].mxu0
    %v2954 = vpop.f32.mrb[0].mxu0
    %v2955 = vadd.f32 %v2914, %v2954
    %v2956 = vpop.f32.mrb[0].mxu0
    %2957 = vdwg.mxu0
    %v2958 = vadd.f32 %v756, %v2952
    %v2959 = vadd.f32 %v757, %v2955
    %v2960 = vsel %vm124, %v2958, 0.0
    %2961 = vadd.xlane.f32.xlu0 %v2960
    %v2962 = vpop.xlane.xlu0 %2961
    %v2963 = vsel %vm124, %v2959, 0.0
    %2964 = vadd.xlane.f32.xlu0 %v2963
    %v2965 = vpop.xlane.xlu0 %2964
    %v2966 = vmul.f32 %v2962, %v725
    %v2967 = vmul.f32 %v2965, %v725
    %v2968 = vsub.f32 %v2958, %v2966
    %v2969 = vsub.f32 %v2959, %v2967
    %v2970 = vmul.f32 %v2968, %v2968
    %v2971 = vmul.f32 %v2969, %v2969
    %v2972 = vsel %vm124, %v2970, 0.0
    %2973 = vadd.xlane.f32.xlu0 %v2972
    %v2974 = vpop.xlane.xlu0 %2973
    %v2975 = vsel %vm124, %v2971, 0.0
    %2976 = vadd.xlane.f32.xlu0 %v2975
    %v2977 = vpop.xlane.xlu0 %2976
    %v2978 = vmul.f32 %v2974, %v725
    %v2979 = vmul.f32 %v2977, %v725
    %v2980 = vadd.f32 %v2978, 1e-05
    %v2981 = vadd.f32 %v2979, 1e-05
    %v2982 = vrsqrt.pop %v2980
    %v2983 = vrsqrt.pop %v2981
    %v2984 = vmul.f32 %v2968, %v2982
    %v2985 = vmul.f32 %v2969, %v2983
    %v2986 = vlaneseq
    %v2987 = vshrl.u32 %v2986, 7
    %v2988 = vsub.s32 6, %v2987
    %v2989 = vrot.slane %v51, %v2988
    %v2990 = vmul.f32 %v2984, %v2989
    %v2991 = vmul.f32 %v2985, %v2989
    %v2992 = vlaneseq
    %v2993 = vshrl.u32 %v2992, 7
    %v2994 = vsub.s32 7, %v2993
    %v2995 = vrot.slane %v51, %v2994
    %v2996 = vadd.f32 %v2990, %v2995
    %v2997 = vadd.f32 %v2991, %v2995
    %s2998 = scalar_lea.vmem %s9, 128
    %v2999 = vld [vmem:[%s2998] sm:$0xff]
    %v3000 = vld [vmem:[%s2998 + $0x8] sm:$0xff]
    %v3001 = vld [vmem:[%s2998 + $0x10] sm:$0xff]
    %v3002 = vld [vmem:[%s2998 + $0x18] sm:$0xff]
    %v3003 = vld [vmem:[%s2998 + $0x20] sm:$0xff]
    %v3004 = vld [vmem:[%s2998 + $0x28] sm:$0xff]
    %v3005 = vld [vmem:[%s2998 + $0x30] sm:$0xff]
    %v3006 = vld [vmem:[%s2998 + $0x38] sm:$0xff]
    %v3007 = vld [vmem:[%s2998 + $0x40] sm:$0xff]
    %v3008 = vld [vmem:[%s2998 + $0x48] sm:$0xff]
    %v3009 = vld [vmem:[%s2998 + $0x50] sm:$0xff]
    %v3010 = vld [vmem:[%s2998 + $0x58] sm:$0xff]
    %v3011 = vld [vmem:[%s2998 + $0x60] sm:$0xff]
    %v3012 = vld [vmem:[%s2998 + $0x68] sm:$0xff]
    %v3013 = vld [vmem:[%s2998 + $0x70] sm:$0xff]
    %v3014 = vld [vmem:[%s2998 + $0x78] sm:$0xff]
    %v3015 = vpack.c.bf16 %v2997, %v2996
    %v3016 = vld [vmem:[%s5] sm:$0xff]
    %v3017 = vld [vmem:[%s5 + $0x8] sm:$0xff]
    %v3018 = vld [vmem:[%s5 + $0x10] sm:$0xff]
    %v3019 = vld [vmem:[%s5 + $0x18] sm:$0xff]
    %v3020 = vld [vmem:[%s5 + $0x20] sm:$0xff]
    %v3021 = vld [vmem:[%s5 + $0x28] sm:$0xff]
    %v3022 = vld [vmem:[%s5 + $0x30] sm:$0xff]
    %v3023 = vld [vmem:[%s5 + $0x38] sm:$0xff]
    %v3024 = vlaneseq
    %v3025 = vshrl.u32 %v3024, 7
    %v3026 = vsub.s32 0, %v3025
    %v3027 = vrot.slane %v2999, %v3026
    %v3028 = vlaneseq
    %v3029 = vshrl.u32 %v3028, 7
    %v3030 = vsub.s32 0, %v3029
    %v3031 = vrot.slane %v3000, %v3030
    %v3040 = vunpack.c.l.b16 %v3016
    %v3041 = vunpack.c.h.b16 %v3016
    %v3042 = vunpack.c.l.b16 %v3017
    %v3043 = vunpack.c.h.b16 %v3017
    %v3044 = vunpack.c.l.b16 %v3018
    %v3045 = vunpack.c.h.b16 %v3018
    %v3046 = vunpack.c.l.b16 %v3019
    %v3047 = vunpack.c.h.b16 %v3019
    %v3048 = vunpack.c.l.b16 %v3020
    %v3049 = vunpack.c.h.b16 %v3020
    %v3050 = vunpack.c.l.b16 %v3021
    %v3051 = vunpack.c.h.b16 %v3021
    %v3052 = vunpack.c.l.b16 %v3022
    %v3053 = vunpack.c.h.b16 %v3022
    %v3054 = vunpack.c.l.b16 %v3023
    %v3055 = vunpack.c.h.b16 %v3023
    %v3056 = vpack.c.b16 %v3042, %v3040
    %v3057 = vpack.c.b16 %v3043, %v3041
    %v3058 = vpack.c.b16 %v3046, %v3044
    %v3059 = vpack.c.b16 %v3047, %v3045
    %v3060 = vpack.c.b16 %v3050, %v3048
    %v3061 = vpack.c.b16 %v3051, %v3049
    %v3062 = vpack.c.b16 %v3054, %v3052
    %v3063 = vpack.c.b16 %v3055, %v3053
    %v3073 = vsel %vm124, %v3015, 0
    %3075 = vmatprep.subr.bf16.mxu0 %v3057
    %3076 = vmatpush1.bf16.msra.mxu0 %v3056
    %3077 = vmatprep.subr.bf16.mxu0 %v3059
    %3078 = vmatpush1.bf16.msra.mxu0 %v3058
    %3079 = vmatprep.subr.bf16.mxu0 %v3061
    %3080 = vmatpush1.bf16.msra.mxu0 %v3060
    %3081 = vmatprep.subr.bf16.mxu0 %v3063
    %3082 = vmatpush1.bf16.msra.mxu0 %v3062
    %3083 = vmatprep.subr.bf16.mxu0 0
    %3084 = vmatpush1.bf16.msra.mxu0 0
    %3085 = vmatprep.subr.bf16.mxu0 0
    %3086 = vmatpush1.bf16.msra.mxu0 0
    %3087 = vmatprep.subr.bf16.mxu0 0
    %3088 = vmatpush1.bf16.msra.mxu0 0
    %3089 = vmatprep.subr.bf16.mxu0 0
    %3090 = vmatpush1.bf16.msra.mxu0 0
    %3091 = vmatprep.subr.bf16.mxu0 0
    %3092 = vmatpush1.bf16.msra.mxu0 0
    %3093 = vmatprep.subr.bf16.mxu0 0
    %3094 = vmatpush1.bf16.msra.mxu0 0
    %3095 = vmatprep.subr.bf16.mxu0 0
    %3096 = vmatpush1.bf16.msra.mxu0 0
    %3097 = vmatprep.subr.bf16.mxu0 0
    %3098 = vmatpush1.bf16.msra.mxu0 0
    %3099 = vmatprep.subr.bf16.mxu0 0
    %3100 = vmatpush1.bf16.msra.mxu0 0
    %3101 = vmatprep.subr.bf16.mxu0 0
    %3102 = vmatpush1.bf16.msra.mxu0 0
    %3103 = vmatprep.subr.bf16.mxu0 0
    %3104 = vmatpush1.bf16.msra.mxu0 0
    %3105 = vmatprep.subr.bf16.mxu0 0
    %3106 = vmatpush1.bf16.msra.mxu0 0
    %3107 = vmatprep.mubr.bf16.mxu0 0
    %3108 = vmatmul.mubr.bf16.gmra.mrb[0].mxu0 %v3073
    %v3109 = vpop.f32.mrb[0].mxu0
    %v3110 = vadd.f32 %v3027, %v3109
    %v3111 = vpop.f32.mrb[0].mxu0
    %v3112 = vadd.f32 %v3031, %v3111
    %v3113 = vpop.f32.mrb[0].mxu0
    %v3114 = vadd.f32 %v3027, %v3113
    %v3115 = vpop.f32.mrb[0].mxu0
    %v3116 = vadd.f32 %v3031, %v3115
    %3117 = vdwg.mxu0
    %3120 = vrot.lane.b32.xlu0 %v3110, 96
    %v3121 = vpop.permute.xlu0 %3120
    %3122 = vrot.lane.b32.xlu0 %v3114, 96
    %v3123 = vpop.permute.xlu0 %3122
    %v3126 = vpack.c.bf16 %v3110, %v3110
    %v3127 = vpack.c.bf16 %v3114, %v3114
    %v3128 = vpack.c.bf16 %v3121, %v3121
    %v3129 = vpack.c.bf16 %v3123, %v3123
    %3132 = vrot.lane.b32.xlu0 %v3112, 96
    %v3133 = vpop.permute.xlu0 %3132
    %3134 = vrot.lane.b32.xlu0 %v3116, 96
    %v3135 = vpop.permute.xlu0 %3134
    %v3138 = vpack.c.bf16 %v3112, %v3112
    %v3139 = vpack.c.bf16 %v3116, %v3116
    %v3140 = vpack.c.bf16 %v3133, %v3133
    %v3141 = vpack.c.bf16 %v3135, %v3135
    %3143 = vrot.lane.b32.xlu0 %v3126, 64
    %v3144 = vpop.permute.xlu0 %3143
    %v3146 = vsel %vm198, %v3126, 0
    %v3149 = vsel %vm198, %v3144, 0
    %3151 = vmatprep.subr.bf16.mxu0 0
    %3152 = vmatpush1.bf16.xpose.msra.mxu0 %v3149
    %3153 = vmatprep.subr.bf16.mxu0 0
    %3154 = vmatpush1.bf16.xpose.msra.mxu0 0
    %3155 = vmatprep.subr.bf16.mxu0 0
    %3156 = vmatpush1.bf16.xpose.msra.mxu0 0
    %3157 = vmatprep.subr.bf16.mxu0 0
    %3158 = vmatpush1.bf16.xpose.msra.mxu0 0
    %3159 = vmatprep.subr.bf16.mxu0 0
    %3160 = vmatpush1.bf16.xpose.msra.mxu0 0
    %3161 = vmatprep.subr.bf16.mxu0 0
    %3162 = vmatpush1.bf16.xpose.msra.mxu0 0
    %3163 = vmatprep.subr.bf16.mxu0 0
    %3164 = vmatpush1.bf16.xpose.msra.mxu0 0
    %3165 = vmatprep.subr.bf16.mxu0 0
    %3166 = vmatpush1.bf16.xpose.msra.mxu0 0
    %3167 = vmatprep.subr.bf16.mxu0 0
    %3168 = vmatpush1.bf16.xpose.msra.mxu0 0
    %3169 = vmatprep.subr.bf16.mxu0 0
    %3170 = vmatpush1.bf16.xpose.msra.mxu0 0
    %3171 = vmatprep.subr.bf16.mxu0 0
    %3172 = vmatpush1.bf16.xpose.msra.mxu0 0
    %3173 = vmatprep.subr.bf16.mxu0 0
    %3174 = vmatpush1.bf16.xpose.msra.mxu0 0
    %3175 = vmatprep.subr.bf16.mxu0 0
    %3176 = vmatpush1.bf16.xpose.msra.mxu0 0
    %3177 = vmatprep.subr.bf16.mxu0 0
    %3178 = vmatpush1.bf16.xpose.msra.mxu0 0
    %3179 = vmatprep.subr.bf16.mxu0 0
    %3180 = vmatpush1.bf16.xpose.msra.mxu0 0
    %3181 = vmatprep.subr.bf16.mxu0 0
    %3182 = vmatpush1.bf16.xpose.msra.mxu0 0
    %3183 = vmatprep.mubr.bf16.mxu0 0
    %3184 = vmatmul.mubr.bf16.gmra.mrb[0].mxu0 %v3146
    %v3185 = vpop.f32.mrb[0].mxu0
    %v3186 = vadd.f32 %v50, %v3185
    %v3187 = vpop.f32.mrb[0].mxu0
    %v3188 = vpop.f32.mrb[0].mxu0
    %v3189 = vpop.f32.mrb[0].mxu0
    %3190 = vdwg.mxu0
    %3192 = vrot.lane.b32.xlu0 %v3127, 64
    %v3193 = vpop.permute.xlu0 %3192
    %v3195 = vsel %vm198, %v3127, 0
    %v3198 = vsel %vm198, %v3193, 0
    %3200 = vmatprep.subr.bf16.mxu0 0
    %3201 = vmatpush1.bf16.xpose.msra.mxu0 %v3198
    %3202 = vmatprep.subr.bf16.mxu0 0
    %3203 = vmatpush1.bf16.xpose.msra.mxu0 0
    %3204 = vmatprep.subr.bf16.mxu0 0
    %3205 = vmatpush1.bf16.xpose.msra.mxu0 0
    %3206 = vmatprep.subr.bf16.mxu0 0
    %3207 = vmatpush1.bf16.xpose.msra.mxu0 0
    %3208 = vmatprep.subr.bf16.mxu0 0
    %3209 = vmatpush1.bf16.xpose.msra.mxu0 0
    %3210 = vmatprep.subr.bf16.mxu0 0
    %3211 = vmatpush1.bf16.xpose.msra.mxu0 0
    %3212 = vmatprep.subr.bf16.mxu0 0
    %3213 = vmatpush1.bf16.xpose.msra.mxu0 0
    %3214 = vmatprep.subr.bf16.mxu0 0
    %3215 = vmatpush1.bf16.xpose.msra.mxu0 0
    %3216 = vmatprep.subr.bf16.mxu0 0
    %3217 = vmatpush1.bf16.xpose.msra.mxu0 0
    %3218 = vmatprep.subr.bf16.mxu0 0
    %3219 = vmatpush1.bf16.xpose.msra.mxu0 0
    %3220 = vmatprep.subr.bf16.mxu0 0
    %3221 = vmatpush1.bf16.xpose.msra.mxu0 0
    %3222 = vmatprep.subr.bf16.mxu0 0
    %3223 = vmatpush1.bf16.xpose.msra.mxu0 0
    %3224 = vmatprep.subr.bf16.mxu0 0
    %3225 = vmatpush1.bf16.xpose.msra.mxu0 0
    %3226 = vmatprep.subr.bf16.mxu0 0
    %3227 = vmatpush1.bf16.xpose.msra.mxu0 0
    %3228 = vmatprep.subr.bf16.mxu0 0
    %3229 = vmatpush1.bf16.xpose.msra.mxu0 0
    %3230 = vmatprep.subr.bf16.mxu0 0
    %3231 = vmatpush1.bf16.xpose.msra.mxu0 0
    %3232 = vmatprep.mubr.bf16.mxu0 0
    %3233 = vmatmul.mubr.bf16.gmra.mrb[0].mxu0 %v3195
    %v3234 = vpop.f32.mrb[0].mxu0
    %v3235 = vadd.f32 %v50, %v3234
    %v3236 = vpop.f32.mrb[0].mxu0
    %v3237 = vpop.f32.mrb[0].mxu0
    %v3238 = vpop.f32.mrb[0].mxu0
    %3239 = vdwg.mxu0
    %3241 = vrot.lane.b32.xlu0 %v3128, 64
    %v3242 = vpop.permute.xlu0 %3241
    %v3244 = vsel %vm198, %v3128, 0
    %v3247 = vsel %vm198, %v3242, 0
    %3249 = vmatprep.subr.bf16.mxu0 0
    %3250 = vmatpush1.bf16.xpose.msra.mxu0 %v3247
    %3251 = vmatprep.subr.bf16.mxu0 0
    %3252 = vmatpush1.bf16.xpose.msra.mxu0 0
    %3253 = vmatprep.subr.bf16.mxu0 0
    %3254 = vmatpush1.bf16.xpose.msra.mxu0 0
    %3255 = vmatprep.subr.bf16.mxu0 0
    %3256 = vmatpush1.bf16.xpose.msra.mxu0 0
    %3257 = vmatprep.subr.bf16.mxu0 0
    %3258 = vmatpush1.bf16.xpose.msra.mxu0 0
    %3259 = vmatprep.subr.bf16.mxu0 0
    %3260 = vmatpush1.bf16.xpose.msra.mxu0 0
    %3261 = vmatprep.subr.bf16.mxu0 0
    %3262 = vmatpush1.bf16.xpose.msra.mxu0 0
    %3263 = vmatprep.subr.bf16.mxu0 0
    %3264 = vmatpush1.bf16.xpose.msra.mxu0 0
    %3265 = vmatprep.subr.bf16.mxu0 0
    %3266 = vmatpush1.bf16.xpose.msra.mxu0 0
    %3267 = vmatprep.subr.bf16.mxu0 0
    %3268 = vmatpush1.bf16.xpose.msra.mxu0 0
    %3269 = vmatprep.subr.bf16.mxu0 0
    %3270 = vmatpush1.bf16.xpose.msra.mxu0 0
    %3271 = vmatprep.subr.bf16.mxu0 0
    %3272 = vmatpush1.bf16.xpose.msra.mxu0 0
    %3273 = vmatprep.subr.bf16.mxu0 0
    %3274 = vmatpush1.bf16.xpose.msra.mxu0 0
    %3275 = vmatprep.subr.bf16.mxu0 0
    %3276 = vmatpush1.bf16.xpose.msra.mxu0 0
    %3277 = vmatprep.subr.bf16.mxu0 0
    %3278 = vmatpush1.bf16.xpose.msra.mxu0 0
    %3279 = vmatprep.subr.bf16.mxu0 0
    %3280 = vmatpush1.bf16.xpose.msra.mxu0 0
    %3281 = vmatprep.mubr.bf16.mxu0 0
    %3282 = vmatmul.mubr.bf16.gmra.mrb[0].mxu0 %v3244
    %v3283 = vpop.f32.mrb[0].mxu0
    %v3284 = vadd.f32 %v50, %v3283
    %v3285 = vpop.f32.mrb[0].mxu0
    %v3286 = vpop.f32.mrb[0].mxu0
    %v3287 = vpop.f32.mrb[0].mxu0
    %3288 = vdwg.mxu0
    %3290 = vrot.lane.b32.xlu0 %v3129, 64
    %v3291 = vpop.permute.xlu0 %3290
    %v3293 = vsel %vm198, %v3129, 0
    %v3296 = vsel %vm198, %v3291, 0
    %3298 = vmatprep.subr.bf16.mxu0 0
    %3299 = vmatpush1.bf16.xpose.msra.mxu0 %v3296
    %3300 = vmatprep.subr.bf16.mxu0 0
    %3301 = vmatpush1.bf16.xpose.msra.mxu0 0
    %3302 = vmatprep.subr.bf16.mxu0 0
    %3303 = vmatpush1.bf16.xpose.msra.mxu0 0
    %3304 = vmatprep.subr.bf16.mxu0 0
    %3305 = vmatpush1.bf16.xpose.msra.mxu0 0
    %3306 = vmatprep.subr.bf16.mxu0 0
    %3307 = vmatpush1.bf16.xpose.msra.mxu0 0
    %3308 = vmatprep.subr.bf16.mxu0 0
    %3309 = vmatpush1.bf16.xpose.msra.mxu0 0
    %3310 = vmatprep.subr.bf16.mxu0 0
    %3311 = vmatpush1.bf16.xpose.msra.mxu0 0
    %3312 = vmatprep.subr.bf16.mxu0 0
    %3313 = vmatpush1.bf16.xpose.msra.mxu0 0
    %3314 = vmatprep.subr.bf16.mxu0 0
    %3315 = vmatpush1.bf16.xpose.msra.mxu0 0
    %3316 = vmatprep.subr.bf16.mxu0 0
    %3317 = vmatpush1.bf16.xpose.msra.mxu0 0
    %3318 = vmatprep.subr.bf16.mxu0 0
    %3319 = vmatpush1.bf16.xpose.msra.mxu0 0
    %3320 = vmatprep.subr.bf16.mxu0 0
    %3321 = vmatpush1.bf16.xpose.msra.mxu0 0
    %3322 = vmatprep.subr.bf16.mxu0 0
    %3323 = vmatpush1.bf16.xpose.msra.mxu0 0
    %3324 = vmatprep.subr.bf16.mxu0 0
    %3325 = vmatpush1.bf16.xpose.msra.mxu0 0
    %3326 = vmatprep.subr.bf16.mxu0 0
    %3327 = vmatpush1.bf16.xpose.msra.mxu0 0
    %3328 = vmatprep.subr.bf16.mxu0 0
    %3329 = vmatpush1.bf16.xpose.msra.mxu0 0
    %3330 = vmatprep.mubr.bf16.mxu0 0
    %3331 = vmatmul.mubr.bf16.gmra.mrb[0].mxu0 %v3293
    %v3332 = vpop.f32.mrb[0].mxu0
    %v3333 = vadd.f32 %v50, %v3332
    %v3334 = vpop.f32.mrb[0].mxu0
    %v3335 = vpop.f32.mrb[0].mxu0
    %v3336 = vpop.f32.mrb[0].mxu0
    %3337 = vdwg.mxu0
    %v3338 = vsel %vm392, %v3186, -inf
    %3339 = vmax.xlane.f32.xlu0 %v3338
    %v3340 = vpop.xlane.xlu0 %3339
    %v3341 = vsel %vm392, %v3235, -inf
    %3342 = vmax.xlane.f32.xlu0 %v3341
    %v3343 = vpop.xlane.xlu0 %3342
    %v3344 = vsel %vm392, %v3284, -inf
    %3345 = vmax.xlane.f32.xlu0 %v3344
    %v3346 = vpop.xlane.xlu0 %3345
    %v3347 = vsel %vm392, %v3333, -inf
    %3348 = vmax.xlane.f32.xlu0 %v3347
    %v3349 = vpop.xlane.xlu0 %3348
    %v3350 = vsub.f32 %v3186, %v3340
    %v3351 = vsub.f32 %v3235, %v3343
    %v3352 = vsub.f32 %v3284, %v3346
    %v3353 = vsub.f32 %v3333, %v3349
    %v3354 = vmul.f32 %v3350, 1.442695
    %v3355 = vpow.pop %v3354
    %v3356 = vmul.f32 %v3351, 1.442695
    %v3357 = vpow.pop %v3356
    %v3358 = vmul.f32 %v3352, 1.442695
    %v3359 = vpow.pop %v3358
    %v3360 = vmul.f32 %v3353, 1.442695
    %v3361 = vpow.pop %v3360
    %v3362 = vsel %vm392, %v3355, 0.0
    %3363 = vadd.xlane.f32.xlu0 %v3362
    %v3364 = vpop.xlane.xlu0 %3363
    %v3365 = vsel %vm392, %v3357, 0.0
    %3366 = vadd.xlane.f32.xlu0 %v3365
    %v3367 = vpop.xlane.xlu0 %3366
    %v3368 = vsel %vm392, %v3359, 0.0
    %3369 = vadd.xlane.f32.xlu0 %v3368
    %v3370 = vpop.xlane.xlu0 %3369
    %v3371 = vsel %vm392, %v3361, 0.0
    %3372 = vadd.xlane.f32.xlu0 %v3371
    %v3373 = vpop.xlane.xlu0 %3372
    %v3374 = vrcp.pop %v3364
    %v3375 = vrcp.pop %v3367
    %v3376 = vrcp.pop %v3370
    %v3377 = vrcp.pop %v3373
    %v3378 = vmul.f32 %v3355, %v3374
    %v3379 = vmul.f32 %v3357, %v3375
    %v3380 = vmul.f32 %v3359, %v3376
    %v3381 = vmul.f32 %v3361, %v3377
    %v3382 = vpack.c.bf16 %v3378, %v3378
    %v3383 = vpack.c.bf16 %v3379, %v3379
    %v3384 = vpack.c.bf16 %v3380, %v3380
    %v3385 = vpack.c.bf16 %v3381, %v3381
    %v3387 = vsel %vm392, %v3382, 0
    %v3390 = vsel %vm444, %v3138, 0
    %3392 = vmatprep.subr.bf16.mxu0 0
    %3393 = vmatpush1.bf16.msra.mxu0 %v3390
    %3394 = vmatprep.subr.bf16.mxu0 0
    %3395 = vmatpush1.bf16.msra.mxu0 0
    %3396 = vmatprep.subr.bf16.mxu0 0
    %3397 = vmatpush1.bf16.msra.mxu0 0
    %3398 = vmatprep.subr.bf16.mxu0 0
    %3399 = vmatpush1.bf16.msra.mxu0 0
    %3400 = vmatprep.subr.bf16.mxu0 0
    %3401 = vmatpush1.bf16.msra.mxu0 0
    %3402 = vmatprep.subr.bf16.mxu0 0
    %3403 = vmatpush1.bf16.msra.mxu0 0
    %3404 = vmatprep.subr.bf16.mxu0 0
    %3405 = vmatpush1.bf16.msra.mxu0 0
    %3406 = vmatprep.subr.bf16.mxu0 0
    %3407 = vmatpush1.bf16.msra.mxu0 0
    %3408 = vmatprep.subr.bf16.mxu0 0
    %3409 = vmatpush1.bf16.msra.mxu0 0
    %3410 = vmatprep.subr.bf16.mxu0 0
    %3411 = vmatpush1.bf16.msra.mxu0 0
    %3412 = vmatprep.subr.bf16.mxu0 0
    %3413 = vmatpush1.bf16.msra.mxu0 0
    %3414 = vmatprep.subr.bf16.mxu0 0
    %3415 = vmatpush1.bf16.msra.mxu0 0
    %3416 = vmatprep.subr.bf16.mxu0 0
    %3417 = vmatpush1.bf16.msra.mxu0 0
    %3418 = vmatprep.subr.bf16.mxu0 0
    %3419 = vmatpush1.bf16.msra.mxu0 0
    %3420 = vmatprep.subr.bf16.mxu0 0
    %3421 = vmatpush1.bf16.msra.mxu0 0
    %3422 = vmatprep.subr.bf16.mxu0 0
    %3423 = vmatpush1.bf16.msra.mxu0 0
    %3424 = vmatprep.mubr.bf16.mxu0 0
    %3425 = vmatmul.mubr.bf16.gmra.mrb[0].mxu0 %v3387
    %v3426 = vpop.f32.mrb[0].mxu0
    %v3427 = vadd.f32 0.0, %v3426
    %v3428 = vpop.f32.mrb[0].mxu0
    %v3429 = vpop.f32.mrb[0].mxu0
    %v3430 = vpop.f32.mrb[0].mxu0
    %3431 = vdwg.mxu0
    %v3433 = vsel %vm392, %v3383, 0
    %v3436 = vsel %vm444, %v3139, 0
    %3438 = vmatprep.subr.bf16.mxu0 0
    %3439 = vmatpush1.bf16.msra.mxu0 %v3436
    %3440 = vmatprep.subr.bf16.mxu0 0
    %3441 = vmatpush1.bf16.msra.mxu0 0
    %3442 = vmatprep.subr.bf16.mxu0 0
    %3443 = vmatpush1.bf16.msra.mxu0 0
    %3444 = vmatprep.subr.bf16.mxu0 0
    %3445 = vmatpush1.bf16.msra.mxu0 0
    %3446 = vmatprep.subr.bf16.mxu0 0
    %3447 = vmatpush1.bf16.msra.mxu0 0
    %3448 = vmatprep.subr.bf16.mxu0 0
    %3449 = vmatpush1.bf16.msra.mxu0 0
    %3450 = vmatprep.subr.bf16.mxu0 0
    %3451 = vmatpush1.bf16.msra.mxu0 0
    %3452 = vmatprep.subr.bf16.mxu0 0
    %3453 = vmatpush1.bf16.msra.mxu0 0
    %3454 = vmatprep.subr.bf16.mxu0 0
    %3455 = vmatpush1.bf16.msra.mxu0 0
    %3456 = vmatprep.subr.bf16.mxu0 0
    %3457 = vmatpush1.bf16.msra.mxu0 0
    %3458 = vmatprep.subr.bf16.mxu0 0
    %3459 = vmatpush1.bf16.msra.mxu0 0
    %3460 = vmatprep.subr.bf16.mxu0 0
    %3461 = vmatpush1.bf16.msra.mxu0 0
    %3462 = vmatprep.subr.bf16.mxu0 0
    %3463 = vmatpush1.bf16.msra.mxu0 0
    %3464 = vmatprep.subr.bf16.mxu0 0
    %3465 = vmatpush1.bf16.msra.mxu0 0
    %3466 = vmatprep.subr.bf16.mxu0 0
    %3467 = vmatpush1.bf16.msra.mxu0 0
    %3468 = vmatprep.subr.bf16.mxu0 0
    %3469 = vmatpush1.bf16.msra.mxu0 0
    %3470 = vmatprep.mubr.bf16.mxu0 0
    %3471 = vmatmul.mubr.bf16.gmra.mrb[0].mxu0 %v3433
    %v3472 = vpop.f32.mrb[0].mxu0
    %v3473 = vadd.f32 0.0, %v3472
    %v3474 = vpop.f32.mrb[0].mxu0
    %v3475 = vpop.f32.mrb[0].mxu0
    %v3476 = vpop.f32.mrb[0].mxu0
    %3477 = vdwg.mxu0
    %v3479 = vsel %vm392, %v3384, 0
    %v3482 = vsel %vm444, %v3140, 0
    %3484 = vmatprep.subr.bf16.mxu0 0
    %3485 = vmatpush1.bf16.msra.mxu0 %v3482
    %3486 = vmatprep.subr.bf16.mxu0 0
    %3487 = vmatpush1.bf16.msra.mxu0 0
    %3488 = vmatprep.subr.bf16.mxu0 0
    %3489 = vmatpush1.bf16.msra.mxu0 0
    %3490 = vmatprep.subr.bf16.mxu0 0
    %3491 = vmatpush1.bf16.msra.mxu0 0
    %3492 = vmatprep.subr.bf16.mxu0 0
    %3493 = vmatpush1.bf16.msra.mxu0 0
    %3494 = vmatprep.subr.bf16.mxu0 0
    %3495 = vmatpush1.bf16.msra.mxu0 0
    %3496 = vmatprep.subr.bf16.mxu0 0
    %3497 = vmatpush1.bf16.msra.mxu0 0
    %3498 = vmatprep.subr.bf16.mxu0 0
    %3499 = vmatpush1.bf16.msra.mxu0 0
    %3500 = vmatprep.subr.bf16.mxu0 0
    %3501 = vmatpush1.bf16.msra.mxu0 0
    %3502 = vmatprep.subr.bf16.mxu0 0
    %3503 = vmatpush1.bf16.msra.mxu0 0
    %3504 = vmatprep.subr.bf16.mxu0 0
    %3505 = vmatpush1.bf16.msra.mxu0 0
    %3506 = vmatprep.subr.bf16.mxu0 0
    %3507 = vmatpush1.bf16.msra.mxu0 0
    %3508 = vmatprep.subr.bf16.mxu0 0
    %3509 = vmatpush1.bf16.msra.mxu0 0
    %3510 = vmatprep.subr.bf16.mxu0 0
    %3511 = vmatpush1.bf16.msra.mxu0 0
    %3512 = vmatprep.subr.bf16.mxu0 0
    %3513 = vmatpush1.bf16.msra.mxu0 0
    %3514 = vmatprep.subr.bf16.mxu0 0
    %3515 = vmatpush1.bf16.msra.mxu0 0
    %3516 = vmatprep.mubr.bf16.mxu0 0
    %3517 = vmatmul.mubr.bf16.gmra.mrb[0].mxu0 %v3479
    %v3518 = vpop.f32.mrb[0].mxu0
    %v3519 = vadd.f32 0.0, %v3518
    %v3520 = vpop.f32.mrb[0].mxu0
    %v3521 = vpop.f32.mrb[0].mxu0
    %v3522 = vpop.f32.mrb[0].mxu0
    %3523 = vdwg.mxu0
    %v3525 = vsel %vm392, %v3385, 0
    %v3528 = vsel %vm444, %v3141, 0
    %3530 = vmatprep.subr.bf16.mxu0 0
    %3531 = vmatpush1.bf16.msra.mxu0 %v3528
    %3532 = vmatprep.subr.bf16.mxu0 0
    %3533 = vmatpush1.bf16.msra.mxu0 0
    %3534 = vmatprep.subr.bf16.mxu0 0
    %3535 = vmatpush1.bf16.msra.mxu0 0
    %3536 = vmatprep.subr.bf16.mxu0 0
    %3537 = vmatpush1.bf16.msra.mxu0 0
    %3538 = vmatprep.subr.bf16.mxu0 0
    %3539 = vmatpush1.bf16.msra.mxu0 0
    %3540 = vmatprep.subr.bf16.mxu0 0
    %3541 = vmatpush1.bf16.msra.mxu0 0
    %3542 = vmatprep.subr.bf16.mxu0 0
    %3543 = vmatpush1.bf16.msra.mxu0 0
    %3544 = vmatprep.subr.bf16.mxu0 0
    %3545 = vmatpush1.bf16.msra.mxu0 0
    %3546 = vmatprep.subr.bf16.mxu0 0
    %3547 = vmatpush1.bf16.msra.mxu0 0
    %3548 = vmatprep.subr.bf16.mxu0 0
    %3549 = vmatpush1.bf16.msra.mxu0 0
    %3550 = vmatprep.subr.bf16.mxu0 0
    %3551 = vmatpush1.bf16.msra.mxu0 0
    %3552 = vmatprep.subr.bf16.mxu0 0
    %3553 = vmatpush1.bf16.msra.mxu0 0
    %3554 = vmatprep.subr.bf16.mxu0 0
    %3555 = vmatpush1.bf16.msra.mxu0 0
    %3556 = vmatprep.subr.bf16.mxu0 0
    %3557 = vmatpush1.bf16.msra.mxu0 0
    %3558 = vmatprep.subr.bf16.mxu0 0
    %3559 = vmatpush1.bf16.msra.mxu0 0
    %3560 = vmatprep.subr.bf16.mxu0 0
    %3561 = vmatpush1.bf16.msra.mxu0 0
    %3562 = vmatprep.mubr.bf16.mxu0 0
    %3563 = vmatmul.mubr.bf16.gmra.mrb[0].mxu0 %v3525
    %v3564 = vpop.f32.mrb[0].mxu0
    %v3565 = vadd.f32 0.0, %v3564
    %v3566 = vpop.f32.mrb[0].mxu0
    %v3567 = vpop.f32.mrb[0].mxu0
    %v3568 = vpop.f32.mrb[0].mxu0
    %3569 = vdwg.mxu0
    %3572 = vrot.lane.b32.xlu0 %v3519, 32
    %v3573 = vpop.permute.xlu0 %3572
    %3574 = vrot.lane.b32.xlu0 %v3565, 32
    %v3575 = vpop.permute.xlu0 %3574
    %v3578 = vsel %vm198, %v3427, %v3573
    %v3579 = vsel %vm198, %v3473, %v3575
    %v3580 = vpack.c.bf16 %v3579, %v3578
    %v3581 = vld [vmem:[%s6] sm:$0xf]
    %v3582 = vld [vmem:[%s6 + $0x4] sm:$0xf]
    %v3583 = vld [vmem:[%s6 + $0x8] sm:$0xf]
    %v3584 = vld [vmem:[%s6 + $0xc] sm:$0xf]
    %v3585 = vld [vmem:[%s6 + $0x10] sm:$0xf]
    %v3586 = vld [vmem:[%s6 + $0x14] sm:$0xf]
    %v3587 = vld [vmem:[%s6 + $0x18] sm:$0xf]
    %v3588 = vld [vmem:[%s6 + $0x1c] sm:$0xf]
    %v3589 = vlaneseq
    %v3590 = vshrl.u32 %v3589, 7
    %v3591 = vsub.s32 1, %v3590
    %v3592 = vrot.slane %v2999, %v3591
    %v3601 = vunpack.c.l.b16 %v3581
    %v3602 = vunpack.c.l.b16 %v3582
    %v3603 = vunpack.c.l.b16 %v3583
    %v3604 = vunpack.c.l.b16 %v3584
    %v3605 = vunpack.c.l.b16 %v3585
    %v3606 = vunpack.c.l.b16 %v3586
    %v3607 = vunpack.c.l.b16 %v3587
    %v3608 = vunpack.c.l.b16 %v3588
    %v3609 = vpack.c.b16 %v3602, %v3601
    %v3610 = vpack.c.b16 %v3604, %v3603
    %v3611 = vpack.c.b16 %v3606, %v3605
    %v3612 = vpack.c.b16 %v3608, %v3607
    %v3618 = vsel %vm124, %v3580, 0
    %3620 = vmatprep.subr.bf16.mxu0 0
    %3621 = vmatpush1.bf16.msra.mxu0 %v3609
    %3622 = vmatprep.subr.bf16.mxu0 0
    %3623 = vmatpush1.bf16.msra.mxu0 %v3610
    %3624 = vmatprep.subr.bf16.mxu0 0
    %3625 = vmatpush1.bf16.msra.mxu0 %v3611
    %3626 = vmatprep.subr.bf16.mxu0 0
    %3627 = vmatpush1.bf16.msra.mxu0 %v3612
    %3628 = vmatprep.subr.bf16.mxu0 0
    %3629 = vmatpush1.bf16.msra.mxu0 0
    %3630 = vmatprep.subr.bf16.mxu0 0
    %3631 = vmatpush1.bf16.msra.mxu0 0
    %3632 = vmatprep.subr.bf16.mxu0 0
    %3633 = vmatpush1.bf16.msra.mxu0 0
    %3634 = vmatprep.subr.bf16.mxu0 0
    %3635 = vmatpush1.bf16.msra.mxu0 0
    %3636 = vmatprep.subr.bf16.mxu0 0
    %3637 = vmatpush1.bf16.msra.mxu0 0
    %3638 = vmatprep.subr.bf16.mxu0 0
    %3639 = vmatpush1.bf16.msra.mxu0 0
    %3640 = vmatprep.subr.bf16.mxu0 0
    %3641 = vmatpush1.bf16.msra.mxu0 0
    %3642 = vmatprep.subr.bf16.mxu0 0
    %3643 = vmatpush1.bf16.msra.mxu0 0
    %3644 = vmatprep.subr.bf16.mxu0 0
    %3645 = vmatpush1.bf16.msra.mxu0 0
    %3646 = vmatprep.subr.bf16.mxu0 0
    %3647 = vmatpush1.bf16.msra.mxu0 0
    %3648 = vmatprep.subr.bf16.mxu0 0
    %3649 = vmatpush1.bf16.msra.mxu0 0
    %3650 = vmatprep.subr.bf16.mxu0 0
    %3651 = vmatpush1.bf16.msra.mxu0 0
    %3652 = vmatprep.mubr.bf16.mxu0 0
    %3653 = vmatmul.mubr.bf16.gmra.mrb[0].mxu0 %v3618
    %v3654 = vpop.f32.mrb[0].mxu0
    %v3655 = vadd.f32 %v3592, %v3654
    %v3656 = vpop.f32.mrb[0].mxu0
    %v3657 = vpop.f32.mrb[0].mxu0
    %v3658 = vadd.f32 %v3592, %v3657
    %v3659 = vpop.f32.mrb[0].mxu0
    %3660 = vdwg.mxu0
    %v3661 = vadd.f32 %v2996, %v3655
    %v3662 = vadd.f32 %v2997, %v3658
    %v3663 = vsel %vm124, %v3661, 0.0
    %3664 = vadd.xlane.f32.xlu0 %v3663
    %v3665 = vpop.xlane.xlu0 %3664
    %v3666 = vsel %vm124, %v3662, 0.0
    %3667 = vadd.xlane.f32.xlu0 %v3666
    %v3668 = vpop.xlane.xlu0 %3667
    %v3669 = vmul.f32 %v3665, %v725
    %v3670 = vmul.f32 %v3668, %v725
    %v3671 = vsub.f32 %v3661, %v3669
    %v3672 = vsub.f32 %v3662, %v3670
    %v3673 = vmul.f32 %v3671, %v3671
    %v3674 = vmul.f32 %v3672, %v3672
    %v3675 = vsel %vm124, %v3673, 0.0
    %3676 = vadd.xlane.f32.xlu0 %v3675
    %v3677 = vpop.xlane.xlu0 %3676
    %v3678 = vsel %vm124, %v3674, 0.0
    %3679 = vadd.xlane.f32.xlu0 %v3678
    %v3680 = vpop.xlane.xlu0 %3679
    %v3681 = vmul.f32 %v3677, %v725
    %v3682 = vmul.f32 %v3680, %v725
    %v3683 = vadd.f32 %v3681, 1e-05
    %v3684 = vadd.f32 %v3682, 1e-05
    %v3685 = vrsqrt.pop %v3683
    %v3686 = vrsqrt.pop %v3684
    %v3687 = vmul.f32 %v3671, %v3685
    %v3688 = vmul.f32 %v3672, %v3686
    %v3689 = vlaneseq
    %v3690 = vshrl.u32 %v3689, 7
    %v3691 = vsub.s32 2, %v3690
    %v3692 = vrot.slane %v2999, %v3691
    %v3693 = vmul.f32 %v3687, %v3692
    %v3694 = vmul.f32 %v3688, %v3692
    %v3695 = vlaneseq
    %v3696 = vshrl.u32 %v3695, 7
    %v3697 = vsub.s32 3, %v3696
    %v3698 = vrot.slane %v2999, %v3697
    %v3699 = vadd.f32 %v3693, %v3698
    %v3700 = vadd.f32 %v3694, %v3698
    %v3701 = vpack.c.bf16 %v3700, %v3699
    %v3702 = vld [vmem:[%s7] sm:$0xff]
    %v3703 = vld [vmem:[%s7 + $0x8] sm:$0xff]
    %v3704 = vld [vmem:[%s7 + $0x10] sm:$0xff]
    %v3705 = vld [vmem:[%s7 + $0x18] sm:$0xff]
    %v3706 = vld [vmem:[%s7 + $0x20] sm:$0xff]
    %v3707 = vld [vmem:[%s7 + $0x28] sm:$0xff]
    %v3708 = vld [vmem:[%s7 + $0x30] sm:$0xff]
    %v3709 = vld [vmem:[%s7 + $0x38] sm:$0xff]
    %v3710 = vld [vmem:[%s7 + $0x40] sm:$0xff]
    %v3711 = vld [vmem:[%s7 + $0x48] sm:$0xff]
    %v3712 = vld [vmem:[%s7 + $0x50] sm:$0xff]
    %v3713 = vld [vmem:[%s7 + $0x58] sm:$0xff]
    %v3714 = vld [vmem:[%s7 + $0x60] sm:$0xff]
    %v3715 = vld [vmem:[%s7 + $0x68] sm:$0xff]
    %v3716 = vld [vmem:[%s7 + $0x70] sm:$0xff]
    %v3717 = vld [vmem:[%s7 + $0x78] sm:$0xff]
    %v3718 = vld [vmem:[%s7 + $0x80] sm:$0xff]
    %v3719 = vld [vmem:[%s7 + $0x88] sm:$0xff]
    %v3720 = vld [vmem:[%s7 + $0x90] sm:$0xff]
    %v3721 = vld [vmem:[%s7 + $0x98] sm:$0xff]
    %v3722 = vld [vmem:[%s7 + $0xa0] sm:$0xff]
    %v3723 = vld [vmem:[%s7 + $0xa8] sm:$0xff]
    %v3724 = vld [vmem:[%s7 + $0xb0] sm:$0xff]
    %v3725 = vld [vmem:[%s7 + $0xb8] sm:$0xff]
    %v3726 = vld [vmem:[%s7 + $0xc0] sm:$0xff]
    %v3727 = vld [vmem:[%s7 + $0xc8] sm:$0xff]
    %v3728 = vld [vmem:[%s7 + $0xd0] sm:$0xff]
    %v3729 = vld [vmem:[%s7 + $0xd8] sm:$0xff]
    %v3730 = vld [vmem:[%s7 + $0xe0] sm:$0xff]
    %v3731 = vld [vmem:[%s7 + $0xe8] sm:$0xff]
    %v3732 = vld [vmem:[%s7 + $0xf0] sm:$0xff]
    %v3733 = vld [vmem:[%s7 + $0xf8] sm:$0xff]
    %v3734 = vld [vmem:[%s7 + $0x100] sm:$0xff]
    %v3735 = vld [vmem:[%s7 + $0x108] sm:$0xff]
    %v3736 = vld [vmem:[%s7 + $0x110] sm:$0xff]
    %v3737 = vld [vmem:[%s7 + $0x118] sm:$0xff]
    %v3738 = vld [vmem:[%s7 + $0x120] sm:$0xff]
    %v3739 = vld [vmem:[%s7 + $0x128] sm:$0xff]
    %v3740 = vld [vmem:[%s7 + $0x130] sm:$0xff]
    %v3741 = vld [vmem:[%s7 + $0x138] sm:$0xff]
    %v3742 = vld [vmem:[%s7 + $0x140] sm:$0xff]
    %v3743 = vld [vmem:[%s7 + $0x148] sm:$0xff]
    %v3744 = vld [vmem:[%s7 + $0x150] sm:$0xff]
    %v3745 = vld [vmem:[%s7 + $0x158] sm:$0xff]
    %v3746 = vld [vmem:[%s7 + $0x160] sm:$0xff]
    %v3747 = vld [vmem:[%s7 + $0x168] sm:$0xff]
    %v3748 = vld [vmem:[%s7 + $0x170] sm:$0xff]
    %v3749 = vld [vmem:[%s7 + $0x178] sm:$0xff]
    %v3750 = vld [vmem:[%s7 + $0x180] sm:$0xff]
    %v3751 = vld [vmem:[%s7 + $0x188] sm:$0xff]
    %v3752 = vld [vmem:[%s7 + $0x190] sm:$0xff]
    %v3753 = vld [vmem:[%s7 + $0x198] sm:$0xff]
    %v3754 = vld [vmem:[%s7 + $0x1a0] sm:$0xff]
    %v3755 = vld [vmem:[%s7 + $0x1a8] sm:$0xff]
    %v3756 = vld [vmem:[%s7 + $0x1b0] sm:$0xff]
    %v3757 = vld [vmem:[%s7 + $0x1b8] sm:$0xff]
    %v3758 = vld [vmem:[%s7 + $0x1c0] sm:$0xff]
    %v3759 = vld [vmem:[%s7 + $0x1c8] sm:$0xff]
    %v3760 = vld [vmem:[%s7 + $0x1d0] sm:$0xff]
    %v3761 = vld [vmem:[%s7 + $0x1d8] sm:$0xff]
    %v3762 = vld [vmem:[%s7 + $0x1e0] sm:$0xff]
    %v3763 = vld [vmem:[%s7 + $0x1e8] sm:$0xff]
    %v3764 = vld [vmem:[%s7 + $0x1f0] sm:$0xff]
    %v3765 = vld [vmem:[%s7 + $0x1f8] sm:$0xff]
    %v3766 = vlaneseq
    %v3767 = vshrl.u32 %v3766, 7
    %v3768 = vsub.s32 4, %v3767
    %v3769 = vrot.slane %v2999, %v3768
    %v3770 = vlaneseq
    %v3771 = vshrl.u32 %v3770, 7
    %v3772 = vsub.s32 4, %v3771
    %v3773 = vrot.slane %v3000, %v3772
    %v3774 = vlaneseq
    %v3775 = vshrl.u32 %v3774, 7
    %v3776 = vsub.s32 4, %v3775
    %v3777 = vrot.slane %v3001, %v3776
    %v3778 = vlaneseq
    %v3779 = vshrl.u32 %v3778, 7
    %v3780 = vsub.s32 4, %v3779
    %v3781 = vrot.slane %v3002, %v3780
    %v3782 = vlaneseq
    %v3783 = vshrl.u32 %v3782, 7
    %v3784 = vsub.s32 4, %v3783
    %v3785 = vrot.slane %v3003, %v3784
    %v3786 = vlaneseq
    %v3787 = vshrl.u32 %v3786, 7
    %v3788 = vsub.s32 4, %v3787
    %v3789 = vrot.slane %v3004, %v3788
    %v3790 = vlaneseq
    %v3791 = vshrl.u32 %v3790, 7
    %v3792 = vsub.s32 4, %v3791
    %v3793 = vrot.slane %v3005, %v3792
    %v3794 = vlaneseq
    %v3795 = vshrl.u32 %v3794, 7
    %v3796 = vsub.s32 4, %v3795
    %v3797 = vrot.slane %v3006, %v3796
    %v3798 = vlaneseq
    %v3799 = vshrl.u32 %v3798, 7
    %v3800 = vsub.s32 4, %v3799
    %v3801 = vrot.slane %v3007, %v3800
    %v3802 = vlaneseq
    %v3803 = vshrl.u32 %v3802, 7
    %v3804 = vsub.s32 4, %v3803
    %v3805 = vrot.slane %v3008, %v3804
    %v3806 = vlaneseq
    %v3807 = vshrl.u32 %v3806, 7
    %v3808 = vsub.s32 4, %v3807
    %v3809 = vrot.slane %v3009, %v3808
    %v3810 = vlaneseq
    %v3811 = vshrl.u32 %v3810, 7
    %v3812 = vsub.s32 4, %v3811
    %v3813 = vrot.slane %v3010, %v3812
    %v3814 = vlaneseq
    %v3815 = vshrl.u32 %v3814, 7
    %v3816 = vsub.s32 4, %v3815
    %v3817 = vrot.slane %v3011, %v3816
    %v3818 = vlaneseq
    %v3819 = vshrl.u32 %v3818, 7
    %v3820 = vsub.s32 4, %v3819
    %v3821 = vrot.slane %v3012, %v3820
    %v3822 = vlaneseq
    %v3823 = vshrl.u32 %v3822, 7
    %v3824 = vsub.s32 4, %v3823
    %v3825 = vrot.slane %v3013, %v3824
    %v3826 = vlaneseq
    %v3827 = vshrl.u32 %v3826, 7
    %v3828 = vsub.s32 4, %v3827
    %v3829 = vrot.slane %v3014, %v3828
    %v3894 = vunpack.c.l.b16 %v3702
    %v3895 = vunpack.c.h.b16 %v3702
    %v3896 = vunpack.c.l.b16 %v3703
    %v3897 = vunpack.c.h.b16 %v3703
    %v3898 = vunpack.c.l.b16 %v3704
    %v3899 = vunpack.c.h.b16 %v3704
    %v3900 = vunpack.c.l.b16 %v3705
    %v3901 = vunpack.c.h.b16 %v3705
    %v3902 = vunpack.c.l.b16 %v3706
    %v3903 = vunpack.c.h.b16 %v3706
    %v3904 = vunpack.c.l.b16 %v3707
    %v3905 = vunpack.c.h.b16 %v3707
    %v3906 = vunpack.c.l.b16 %v3708
    %v3907 = vunpack.c.h.b16 %v3708
    %v3908 = vunpack.c.l.b16 %v3709
    %v3909 = vunpack.c.h.b16 %v3709
    %v3910 = vunpack.c.l.b16 %v3710
    %v3911 = vunpack.c.h.b16 %v3710
    %v3912 = vunpack.c.l.b16 %v3711
    %v3913 = vunpack.c.h.b16 %v3711
    %v3914 = vunpack.c.l.b16 %v3712
    %v3915 = vunpack.c.h.b16 %v3712
    %v3916 = vunpack.c.l.b16 %v3713
    %v3917 = vunpack.c.h.b16 %v3713
    %v3918 = vunpack.c.l.b16 %v3714
    %v3919 = vunpack.c.h.b16 %v3714
    %v3920 = vunpack.c.l.b16 %v3715
    %v3921 = vunpack.c.h.b16 %v3715
    %v3922 = vunpack.c.l.b16 %v3716
    %v3923 = vunpack.c.h.b16 %v3716
    %v3924 = vunpack.c.l.b16 %v3717
    %v3925 = vunpack.c.h.b16 %v3717
    %v3926 = vunpack.c.l.b16 %v3718
    %v3927 = vunpack.c.h.b16 %v3718
    %v3928 = vunpack.c.l.b16 %v3719
    %v3929 = vunpack.c.h.b16 %v3719
    %v3930 = vunpack.c.l.b16 %v3720
    %v3931 = vunpack.c.h.b16 %v3720
    %v3932 = vunpack.c.l.b16 %v3721
    %v3933 = vunpack.c.h.b16 %v3721
    %v3934 = vunpack.c.l.b16 %v3722
    %v3935 = vunpack.c.h.b16 %v3722
    %v3936 = vunpack.c.l.b16 %v3723
    %v3937 = vunpack.c.h.b16 %v3723
    %v3938 = vunpack.c.l.b16 %v3724
    %v3939 = vunpack.c.h.b16 %v3724
    %v3940 = vunpack.c.l.b16 %v3725
    %v3941 = vunpack.c.h.b16 %v3725
    %v3942 = vunpack.c.l.b16 %v3726
    %v3943 = vunpack.c.h.b16 %v3726
    %v3944 = vunpack.c.l.b16 %v3727
    %v3945 = vunpack.c.h.b16 %v3727
    %v3946 = vunpack.c.l.b16 %v3728
    %v3947 = vunpack.c.h.b16 %v3728
    %v3948 = vunpack.c.l.b16 %v3729
    %v3949 = vunpack.c.h.b16 %v3729
    %v3950 = vunpack.c.l.b16 %v3730
    %v3951 = vunpack.c.h.b16 %v3730
    %v3952 = vunpack.c.l.b16 %v3731
    %v3953 = vunpack.c.h.b16 %v3731
    %v3954 = vunpack.c.l.b16 %v3732
    %v3955 = vunpack.c.h.b16 %v3732
    %v3956 = vunpack.c.l.b16 %v3733
    %v3957 = vunpack.c.h.b16 %v3733
    %v3958 = vunpack.c.l.b16 %v3734
    %v3959 = vunpack.c.h.b16 %v3734
    %v3960 = vunpack.c.l.b16 %v3735
    %v3961 = vunpack.c.h.b16 %v3735
    %v3962 = vunpack.c.l.b16 %v3736
    %v3963 = vunpack.c.h.b16 %v3736
    %v3964 = vunpack.c.l.b16 %v3737
    %v3965 = vunpack.c.h.b16 %v3737
    %v3966 = vunpack.c.l.b16 %v3738
    %v3967 = vunpack.c.h.b16 %v3738
    %v3968 = vunpack.c.l.b16 %v3739
    %v3969 = vunpack.c.h.b16 %v3739
    %v3970 = vunpack.c.l.b16 %v3740
    %v3971 = vunpack.c.h.b16 %v3740
    %v3972 = vunpack.c.l.b16 %v3741
    %v3973 = vunpack.c.h.b16 %v3741
    %v3974 = vunpack.c.l.b16 %v3742
    %v3975 = vunpack.c.h.b16 %v3742
    %v3976 = vunpack.c.l.b16 %v3743
    %v3977 = vunpack.c.h.b16 %v3743
    %v3978 = vunpack.c.l.b16 %v3744
    %v3979 = vunpack.c.h.b16 %v3744
    %v3980 = vunpack.c.l.b16 %v3745
    %v3981 = vunpack.c.h.b16 %v3745
    %v3982 = vunpack.c.l.b16 %v3746
    %v3983 = vunpack.c.h.b16 %v3746
    %v3984 = vunpack.c.l.b16 %v3747
    %v3985 = vunpack.c.h.b16 %v3747
    %v3986 = vunpack.c.l.b16 %v3748
    %v3987 = vunpack.c.h.b16 %v3748
    %v3988 = vunpack.c.l.b16 %v3749
    %v3989 = vunpack.c.h.b16 %v3749
    %v3990 = vunpack.c.l.b16 %v3750
    %v3991 = vunpack.c.h.b16 %v3750
    %v3992 = vunpack.c.l.b16 %v3751
    %v3993 = vunpack.c.h.b16 %v3751
    %v3994 = vunpack.c.l.b16 %v3752
    %v3995 = vunpack.c.h.b16 %v3752
    %v3996 = vunpack.c.l.b16 %v3753
    %v3997 = vunpack.c.h.b16 %v3753
    %v3998 = vunpack.c.l.b16 %v3754
    %v3999 = vunpack.c.h.b16 %v3754
    %v4000 = vunpack.c.l.b16 %v3755
    %v4001 = vunpack.c.h.b16 %v3755
    %v4002 = vunpack.c.l.b16 %v3756
    %v4003 = vunpack.c.h.b16 %v3756
    %v4004 = vunpack.c.l.b16 %v3757
    %v4005 = vunpack.c.h.b16 %v3757
    %v4006 = vunpack.c.l.b16 %v3758
    %v4007 = vunpack.c.h.b16 %v3758
    %v4008 = vunpack.c.l.b16 %v3759
    %v4009 = vunpack.c.h.b16 %v3759
    %v4010 = vunpack.c.l.b16 %v3760
    %v4011 = vunpack.c.h.b16 %v3760
    %v4012 = vunpack.c.l.b16 %v3761
    %v4013 = vunpack.c.h.b16 %v3761
    %v4014 = vunpack.c.l.b16 %v3762
    %v4015 = vunpack.c.h.b16 %v3762
    %v4016 = vunpack.c.l.b16 %v3763
    %v4017 = vunpack.c.h.b16 %v3763
    %v4018 = vunpack.c.l.b16 %v3764
    %v4019 = vunpack.c.h.b16 %v3764
    %v4020 = vunpack.c.l.b16 %v3765
    %v4021 = vunpack.c.h.b16 %v3765
    %v4022 = vpack.c.b16 %v3910, %v3894
    %v4023 = vpack.c.b16 %v3911, %v3895
    %v4024 = vpack.c.b16 %v3912, %v3896
    %v4025 = vpack.c.b16 %v3913, %v3897
    %v4026 = vpack.c.b16 %v3914, %v3898
    %v4027 = vpack.c.b16 %v3915, %v3899
    %v4028 = vpack.c.b16 %v3916, %v3900
    %v4029 = vpack.c.b16 %v3917, %v3901
    %v4030 = vpack.c.b16 %v3918, %v3902
    %v4031 = vpack.c.b16 %v3919, %v3903
    %v4032 = vpack.c.b16 %v3920, %v3904
    %v4033 = vpack.c.b16 %v3921, %v3905
    %v4034 = vpack.c.b16 %v3922, %v3906
    %v4035 = vpack.c.b16 %v3923, %v3907
    %v4036 = vpack.c.b16 %v3924, %v3908
    %v4037 = vpack.c.b16 %v3925, %v3909
    %v4038 = vpack.c.b16 %v3942, %v3926
    %v4039 = vpack.c.b16 %v3943, %v3927
    %v4040 = vpack.c.b16 %v3944, %v3928
    %v4041 = vpack.c.b16 %v3945, %v3929
    %v4042 = vpack.c.b16 %v3946, %v3930
    %v4043 = vpack.c.b16 %v3947, %v3931
    %v4044 = vpack.c.b16 %v3948, %v3932
    %v4045 = vpack.c.b16 %v3949, %v3933
    %v4046 = vpack.c.b16 %v3950, %v3934
    %v4047 = vpack.c.b16 %v3951, %v3935
    %v4048 = vpack.c.b16 %v3952, %v3936
    %v4049 = vpack.c.b16 %v3953, %v3937
    %v4050 = vpack.c.b16 %v3954, %v3938
    %v4051 = vpack.c.b16 %v3955, %v3939
    %v4052 = vpack.c.b16 %v3956, %v3940
    %v4053 = vpack.c.b16 %v3957, %v3941
    %v4054 = vpack.c.b16 %v3974, %v3958
    %v4055 = vpack.c.b16 %v3975, %v3959
    %v4056 = vpack.c.b16 %v3976, %v3960
    %v4057 = vpack.c.b16 %v3977, %v3961
    %v4058 = vpack.c.b16 %v3978, %v3962
    %v4059 = vpack.c.b16 %v3979, %v3963
    %v4060 = vpack.c.b16 %v3980, %v3964
    %v4061 = vpack.c.b16 %v3981, %v3965
    %v4062 = vpack.c.b16 %v3982, %v3966
    %v4063 = vpack.c.b16 %v3983, %v3967
    %v4064 = vpack.c.b16 %v3984, %v3968
    %v4065 = vpack.c.b16 %v3985, %v3969
    %v4066 = vpack.c.b16 %v3986, %v3970
    %v4067 = vpack.c.b16 %v3987, %v3971
    %v4068 = vpack.c.b16 %v3988, %v3972
    %v4069 = vpack.c.b16 %v3989, %v3973
    %v4070 = vpack.c.b16 %v4006, %v3990
    %v4071 = vpack.c.b16 %v4007, %v3991
    %v4072 = vpack.c.b16 %v4008, %v3992
    %v4073 = vpack.c.b16 %v4009, %v3993
    %v4074 = vpack.c.b16 %v4010, %v3994
    %v4075 = vpack.c.b16 %v4011, %v3995
    %v4076 = vpack.c.b16 %v4012, %v3996
    %v4077 = vpack.c.b16 %v4013, %v3997
    %v4078 = vpack.c.b16 %v4014, %v3998
    %v4079 = vpack.c.b16 %v4015, %v3999
    %v4080 = vpack.c.b16 %v4016, %v4000
    %v4081 = vpack.c.b16 %v4017, %v4001
    %v4082 = vpack.c.b16 %v4018, %v4002
    %v4083 = vpack.c.b16 %v4019, %v4003
    %v4084 = vpack.c.b16 %v4020, %v4004
    %v4085 = vpack.c.b16 %v4021, %v4005
    %v4151 = vsel %vm124, %v3701, 0
    %4153 = vmatprep.subr.bf16.mxu0 %v4023
    %4154 = vmatpush1.bf16.msra.mxu0 %v4022
    %4155 = vmatprep.subr.bf16.mxu0 %v4039
    %4156 = vmatpush1.bf16.msra.mxu0 %v4038
    %4157 = vmatprep.subr.bf16.mxu0 %v4055
    %4158 = vmatpush1.bf16.msra.mxu0 %v4054
    %4159 = vmatprep.subr.bf16.mxu0 %v4071
    %4160 = vmatpush1.bf16.msra.mxu0 %v4070
    %4161 = vmatprep.subr.bf16.mxu0 0
    %4162 = vmatpush1.bf16.msra.mxu0 0
    %4163 = vmatprep.subr.bf16.mxu0 0
    %4164 = vmatpush1.bf16.msra.mxu0 0
    %4165 = vmatprep.subr.bf16.mxu0 0
    %4166 = vmatpush1.bf16.msra.mxu0 0
    %4167 = vmatprep.subr.bf16.mxu0 0
    %4168 = vmatpush1.bf16.msra.mxu0 0
    %4169 = vmatprep.subr.bf16.mxu0 0
    %4170 = vmatpush1.bf16.msra.mxu0 0
    %4171 = vmatprep.subr.bf16.mxu0 0
    %4172 = vmatpush1.bf16.msra.mxu0 0
    %4173 = vmatprep.subr.bf16.mxu0 0
    %4174 = vmatpush1.bf16.msra.mxu0 0
    %4175 = vmatprep.subr.bf16.mxu0 0
    %4176 = vmatpush1.bf16.msra.mxu0 0
    %4177 = vmatprep.subr.bf16.mxu0 0
    %4178 = vmatpush1.bf16.msra.mxu0 0
    %4179 = vmatprep.subr.bf16.mxu0 0
    %4180 = vmatpush1.bf16.msra.mxu0 0
    %4181 = vmatprep.subr.bf16.mxu0 0
    %4182 = vmatpush1.bf16.msra.mxu0 0
    %4183 = vmatprep.subr.bf16.mxu0 0
    %4184 = vmatpush1.bf16.msra.mxu0 0
    %4185 = vmatprep.mubr.bf16.mxu0 0
    %4186 = vmatmul.mubr.bf16.gmra.mrb[0].mxu0 %v4151
    %v4187 = vpop.f32.mrb[0].mxu0
    %v4188 = vadd.f32 %v3769, %v4187
    %v4189 = vpop.f32.mrb[0].mxu0
    %v4190 = vadd.f32 %v3773, %v4189
    %v4191 = vpop.f32.mrb[0].mxu0
    %v4192 = vadd.f32 %v3769, %v4191
    %v4193 = vpop.f32.mrb[0].mxu0
    %v4194 = vadd.f32 %v3773, %v4193
    %4195 = vdwg.mxu0
    %4196 = vmatprep.subr.bf16.mxu0 %v4025
    %4197 = vmatpush1.bf16.msra.mxu0 %v4024
    %4198 = vmatprep.subr.bf16.mxu0 %v4041
    %4199 = vmatpush1.bf16.msra.mxu0 %v4040
    %4200 = vmatprep.subr.bf16.mxu0 %v4057
    %4201 = vmatpush1.bf16.msra.mxu0 %v4056
    %4202 = vmatprep.subr.bf16.mxu0 %v4073
    %4203 = vmatpush1.bf16.msra.mxu0 %v4072
    %4204 = vmatprep.subr.bf16.mxu0 0
    %4205 = vmatpush1.bf16.msra.mxu0 0
    %4206 = vmatprep.subr.bf16.mxu0 0
    %4207 = vmatpush1.bf16.msra.mxu0 0
    %4208 = vmatprep.subr.bf16.mxu0 0
    %4209 = vmatpush1.bf16.msra.mxu0 0
    %4210 = vmatprep.subr.bf16.mxu0 0
    %4211 = vmatpush1.bf16.msra.mxu0 0
    %4212 = vmatprep.subr.bf16.mxu0 0
    %4213 = vmatpush1.bf16.msra.mxu0 0
    %4214 = vmatprep.subr.bf16.mxu0 0
    %4215 = vmatpush1.bf16.msra.mxu0 0
    %4216 = vmatprep.subr.bf16.mxu0 0
    %4217 = vmatpush1.bf16.msra.mxu0 0
    %4218 = vmatprep.subr.bf16.mxu0 0
    %4219 = vmatpush1.bf16.msra.mxu0 0
    %4220 = vmatprep.subr.bf16.mxu0 0
    %4221 = vmatpush1.bf16.msra.mxu0 0
    %4222 = vmatprep.subr.bf16.mxu0 0
    %4223 = vmatpush1.bf16.msra.mxu0 0
    %4224 = vmatprep.subr.bf16.mxu0 0
    %4225 = vmatpush1.bf16.msra.mxu0 0
    %4226 = vmatprep.subr.bf16.mxu0 0
    %4227 = vmatpush1.bf16.msra.mxu0 0
    %4228 = vmatprep.mubr.bf16.mxu0 0
    %4229 = vmatmul.mubr.bf16.gmra.mrb[0].mxu0 %v4151
    %v4230 = vpop.f32.mrb[0].mxu0
    %v4231 = vadd.f32 %v3777, %v4230
    %v4232 = vpop.f32.mrb[0].mxu0
    %v4233 = vadd.f32 %v3781, %v4232
    %v4234 = vpop.f32.mrb[0].mxu0
    %v4235 = vadd.f32 %v3777, %v4234
    %v4236 = vpop.f32.mrb[0].mxu0
    %v4237 = vadd.f32 %v3781, %v4236
    %4238 = vdwg.mxu0
    %4239 = vmatprep.subr.bf16.mxu0 %v4027
    %4240 = vmatpush1.bf16.msra.mxu0 %v4026
    %4241 = vmatprep.subr.bf16.mxu0 %v4043
    %4242 = vmatpush1.bf16.msra.mxu0 %v4042
    %4243 = vmatprep.subr.bf16.mxu0 %v4059
    %4244 = vmatpush1.bf16.msra.mxu0 %v4058
    %4245 = vmatprep.subr.bf16.mxu0 %v4075
    %4246 = vmatpush1.bf16.msra.mxu0 %v4074
    %4247 = vmatprep.subr.bf16.mxu0 0
    %4248 = vmatpush1.bf16.msra.mxu0 0
    %4249 = vmatprep.subr.bf16.mxu0 0
    %4250 = vmatpush1.bf16.msra.mxu0 0
    %4251 = vmatprep.subr.bf16.mxu0 0
    %4252 = vmatpush1.bf16.msra.mxu0 0
    %4253 = vmatprep.subr.bf16.mxu0 0
    %4254 = vmatpush1.bf16.msra.mxu0 0
    %4255 = vmatprep.subr.bf16.mxu0 0
    %4256 = vmatpush1.bf16.msra.mxu0 0
    %4257 = vmatprep.subr.bf16.mxu0 0
    %4258 = vmatpush1.bf16.msra.mxu0 0
    %4259 = vmatprep.subr.bf16.mxu0 0
    %4260 = vmatpush1.bf16.msra.mxu0 0
    %4261 = vmatprep.subr.bf16.mxu0 0
    %4262 = vmatpush1.bf16.msra.mxu0 0
    %4263 = vmatprep.subr.bf16.mxu0 0
    %4264 = vmatpush1.bf16.msra.mxu0 0
    %4265 = vmatprep.subr.bf16.mxu0 0
    %4266 = vmatpush1.bf16.msra.mxu0 0
    %4267 = vmatprep.subr.bf16.mxu0 0
    %4268 = vmatpush1.bf16.msra.mxu0 0
    %4269 = vmatprep.subr.bf16.mxu0 0
    %4270 = vmatpush1.bf16.msra.mxu0 0
    %4271 = vmatprep.mubr.bf16.mxu0 0
    %4272 = vmatmul.mubr.bf16.gmra.mrb[0].mxu0 %v4151
    %v4273 = vpop.f32.mrb[0].mxu0
    %v4274 = vadd.f32 %v3785, %v4273
    %v4275 = vpop.f32.mrb[0].mxu0
    %v4276 = vadd.f32 %v3789, %v4275
    %v4277 = vpop.f32.mrb[0].mxu0
    %v4278 = vadd.f32 %v3785, %v4277
    %v4279 = vpop.f32.mrb[0].mxu0
    %v4280 = vadd.f32 %v3789, %v4279
    %4281 = vdwg.mxu0
    %4282 = vmatprep.subr.bf16.mxu0 %v4029
    %4283 = vmatpush1.bf16.msra.mxu0 %v4028
    %4284 = vmatprep.subr.bf16.mxu0 %v4045
    %4285 = vmatpush1.bf16.msra.mxu0 %v4044
    %4286 = vmatprep.subr.bf16.mxu0 %v4061
    %4287 = vmatpush1.bf16.msra.mxu0 %v4060
    %4288 = vmatprep.subr.bf16.mxu0 %v4077
    %4289 = vmatpush1.bf16.msra.mxu0 %v4076
    %4290 = vmatprep.subr.bf16.mxu0 0
    %4291 = vmatpush1.bf16.msra.mxu0 0
    %4292 = vmatprep.subr.bf16.mxu0 0
    %4293 = vmatpush1.bf16.msra.mxu0 0
    %4294 = vmatprep.subr.bf16.mxu0 0
    %4295 = vmatpush1.bf16.msra.mxu0 0
    %4296 = vmatprep.subr.bf16.mxu0 0
    %4297 = vmatpush1.bf16.msra.mxu0 0
    %4298 = vmatprep.subr.bf16.mxu0 0
    %4299 = vmatpush1.bf16.msra.mxu0 0
    %4300 = vmatprep.subr.bf16.mxu0 0
    %4301 = vmatpush1.bf16.msra.mxu0 0
    %4302 = vmatprep.subr.bf16.mxu0 0
    %4303 = vmatpush1.bf16.msra.mxu0 0
    %4304 = vmatprep.subr.bf16.mxu0 0
    %4305 = vmatpush1.bf16.msra.mxu0 0
    %4306 = vmatprep.subr.bf16.mxu0 0
    %4307 = vmatpush1.bf16.msra.mxu0 0
    %4308 = vmatprep.subr.bf16.mxu0 0
    %4309 = vmatpush1.bf16.msra.mxu0 0
    %4310 = vmatprep.subr.bf16.mxu0 0
    %4311 = vmatpush1.bf16.msra.mxu0 0
    %4312 = vmatprep.subr.bf16.mxu0 0
    %4313 = vmatpush1.bf16.msra.mxu0 0
    %4314 = vmatprep.mubr.bf16.mxu0 0
    %4315 = vmatmul.mubr.bf16.gmra.mrb[0].mxu0 %v4151
    %v4316 = vpop.f32.mrb[0].mxu0
    %v4317 = vadd.f32 %v3793, %v4316
    %v4318 = vpop.f32.mrb[0].mxu0
    %v4319 = vadd.f32 %v3797, %v4318
    %v4320 = vpop.f32.mrb[0].mxu0
    %v4321 = vadd.f32 %v3793, %v4320
    %v4322 = vpop.f32.mrb[0].mxu0
    %v4323 = vadd.f32 %v3797, %v4322
    %4324 = vdwg.mxu0
    %4325 = vmatprep.subr.bf16.mxu0 %v4031
    %4326 = vmatpush1.bf16.msra.mxu0 %v4030
    %4327 = vmatprep.subr.bf16.mxu0 %v4047
    %4328 = vmatpush1.bf16.msra.mxu0 %v4046
    %4329 = vmatprep.subr.bf16.mxu0 %v4063
    %4330 = vmatpush1.bf16.msra.mxu0 %v4062
    %4331 = vmatprep.subr.bf16.mxu0 %v4079
    %4332 = vmatpush1.bf16.msra.mxu0 %v4078
    %4333 = vmatprep.subr.bf16.mxu0 0
    %4334 = vmatpush1.bf16.msra.mxu0 0
    %4335 = vmatprep.subr.bf16.mxu0 0
    %4336 = vmatpush1.bf16.msra.mxu0 0
    %4337 = vmatprep.subr.bf16.mxu0 0
    %4338 = vmatpush1.bf16.msra.mxu0 0
    %4339 = vmatprep.subr.bf16.mxu0 0
    %4340 = vmatpush1.bf16.msra.mxu0 0
    %4341 = vmatprep.subr.bf16.mxu0 0
    %4342 = vmatpush1.bf16.msra.mxu0 0
    %4343 = vmatprep.subr.bf16.mxu0 0
    %4344 = vmatpush1.bf16.msra.mxu0 0
    %4345 = vmatprep.subr.bf16.mxu0 0
    %4346 = vmatpush1.bf16.msra.mxu0 0
    %4347 = vmatprep.subr.bf16.mxu0 0
    %4348 = vmatpush1.bf16.msra.mxu0 0
    %4349 = vmatprep.subr.bf16.mxu0 0
    %4350 = vmatpush1.bf16.msra.mxu0 0
    %4351 = vmatprep.subr.bf16.mxu0 0
    %4352 = vmatpush1.bf16.msra.mxu0 0
    %4353 = vmatprep.subr.bf16.mxu0 0
    %4354 = vmatpush1.bf16.msra.mxu0 0
    %4355 = vmatprep.subr.bf16.mxu0 0
    %4356 = vmatpush1.bf16.msra.mxu0 0
    %4357 = vmatprep.mubr.bf16.mxu0 0
    %4358 = vmatmul.mubr.bf16.gmra.mrb[0].mxu0 %v4151
    %v4359 = vpop.f32.mrb[0].mxu0
    %v4360 = vadd.f32 %v3801, %v4359
    %v4361 = vpop.f32.mrb[0].mxu0
    %v4362 = vadd.f32 %v3805, %v4361
    %v4363 = vpop.f32.mrb[0].mxu0
    %v4364 = vadd.f32 %v3801, %v4363
    %v4365 = vpop.f32.mrb[0].mxu0
    %v4366 = vadd.f32 %v3805, %v4365
    %4367 = vdwg.mxu0
    %4368 = vmatprep.subr.bf16.mxu0 %v4033
    %4369 = vmatpush1.bf16.msra.mxu0 %v4032
    %4370 = vmatprep.subr.bf16.mxu0 %v4049
    %4371 = vmatpush1.bf16.msra.mxu0 %v4048
    %4372 = vmatprep.subr.bf16.mxu0 %v4065
    %4373 = vmatpush1.bf16.msra.mxu0 %v4064
    %4374 = vmatprep.subr.bf16.mxu0 %v4081
    %4375 = vmatpush1.bf16.msra.mxu0 %v4080
    %4376 = vmatprep.subr.bf16.mxu0 0
    %4377 = vmatpush1.bf16.msra.mxu0 0
    %4378 = vmatprep.subr.bf16.mxu0 0
    %4379 = vmatpush1.bf16.msra.mxu0 0
    %4380 = vmatprep.subr.bf16.mxu0 0
    %4381 = vmatpush1.bf16.msra.mxu0 0
    %4382 = vmatprep.subr.bf16.mxu0 0
    %4383 = vmatpush1.bf16.msra.mxu0 0
    %4384 = vmatprep.subr.bf16.mxu0 0
    %4385 = vmatpush1.bf16.msra.mxu0 0
    %4386 = vmatprep.subr.bf16.mxu0 0
    %4387 = vmatpush1.bf16.msra.mxu0 0
    %4388 = vmatprep.subr.bf16.mxu0 0
    %4389 = vmatpush1.bf16.msra.mxu0 0
    %4390 = vmatprep.subr.bf16.mxu0 0
    %4391 = vmatpush1.bf16.msra.mxu0 0
    %4392 = vmatprep.subr.bf16.mxu0 0
    %4393 = vmatpush1.bf16.msra.mxu0 0
    %4394 = vmatprep.subr.bf16.mxu0 0
    %4395 = vmatpush1.bf16.msra.mxu0 0
    %4396 = vmatprep.subr.bf16.mxu0 0
    %4397 = vmatpush1.bf16.msra.mxu0 0
    %4398 = vmatprep.subr.bf16.mxu0 0
    %4399 = vmatpush1.bf16.msra.mxu0 0
    %4400 = vmatprep.mubr.bf16.mxu0 0
    %4401 = vmatmul.mubr.bf16.gmra.mrb[0].mxu0 %v4151
    %v4402 = vpop.f32.mrb[0].mxu0
    %v4403 = vadd.f32 %v3809, %v4402
    %v4404 = vpop.f32.mrb[0].mxu0
    %v4405 = vadd.f32 %v3813, %v4404
    %v4406 = vpop.f32.mrb[0].mxu0
    %v4407 = vadd.f32 %v3809, %v4406
    %v4408 = vpop.f32.mrb[0].mxu0
    %v4409 = vadd.f32 %v3813, %v4408
    %4410 = vdwg.mxu0
    %4411 = vmatprep.subr.bf16.mxu0 %v4035
    %4412 = vmatpush1.bf16.msra.mxu0 %v4034
    %4413 = vmatprep.subr.bf16.mxu0 %v4051
    %4414 = vmatpush1.bf16.msra.mxu0 %v4050
    %4415 = vmatprep.subr.bf16.mxu0 %v4067
    %4416 = vmatpush1.bf16.msra.mxu0 %v4066
    %4417 = vmatprep.subr.bf16.mxu0 %v4083
    %4418 = vmatpush1.bf16.msra.mxu0 %v4082
    %4419 = vmatprep.subr.bf16.mxu0 0
    %4420 = vmatpush1.bf16.msra.mxu0 0
    %4421 = vmatprep.subr.bf16.mxu0 0
    %4422 = vmatpush1.bf16.msra.mxu0 0
    %4423 = vmatprep.subr.bf16.mxu0 0
    %4424 = vmatpush1.bf16.msra.mxu0 0
    %4425 = vmatprep.subr.bf16.mxu0 0
    %4426 = vmatpush1.bf16.msra.mxu0 0
    %4427 = vmatprep.subr.bf16.mxu0 0
    %4428 = vmatpush1.bf16.msra.mxu0 0
    %4429 = vmatprep.subr.bf16.mxu0 0
    %4430 = vmatpush1.bf16.msra.mxu0 0
    %4431 = vmatprep.subr.bf16.mxu0 0
    %4432 = vmatpush1.bf16.msra.mxu0 0
    %4433 = vmatprep.subr.bf16.mxu0 0
    %4434 = vmatpush1.bf16.msra.mxu0 0
    %4435 = vmatprep.subr.bf16.mxu0 0
    %4436 = vmatpush1.bf16.msra.mxu0 0
    %4437 = vmatprep.subr.bf16.mxu0 0
    %4438 = vmatpush1.bf16.msra.mxu0 0
    %4439 = vmatprep.subr.bf16.mxu0 0
    %4440 = vmatpush1.bf16.msra.mxu0 0
    %4441 = vmatprep.subr.bf16.mxu0 0
    %4442 = vmatpush1.bf16.msra.mxu0 0
    %4443 = vmatprep.mubr.bf16.mxu0 0
    %4444 = vmatmul.mubr.bf16.gmra.mrb[0].mxu0 %v4151
    %v4445 = vpop.f32.mrb[0].mxu0
    %v4446 = vadd.f32 %v3817, %v4445
    %v4447 = vpop.f32.mrb[0].mxu0
    %v4448 = vadd.f32 %v3821, %v4447
    %v4449 = vpop.f32.mrb[0].mxu0
    %v4450 = vadd.f32 %v3817, %v4449
    %v4451 = vpop.f32.mrb[0].mxu0
    %v4452 = vadd.f32 %v3821, %v4451
    %4453 = vdwg.mxu0
    %4454 = vmatprep.subr.bf16.mxu0 %v4037
    %4455 = vmatpush1.bf16.msra.mxu0 %v4036
    %4456 = vmatprep.subr.bf16.mxu0 %v4053
    %4457 = vmatpush1.bf16.msra.mxu0 %v4052
    %4458 = vmatprep.subr.bf16.mxu0 %v4069
    %4459 = vmatpush1.bf16.msra.mxu0 %v4068
    %4460 = vmatprep.subr.bf16.mxu0 %v4085
    %4461 = vmatpush1.bf16.msra.mxu0 %v4084
    %4462 = vmatprep.subr.bf16.mxu0 0
    %4463 = vmatpush1.bf16.msra.mxu0 0
    %4464 = vmatprep.subr.bf16.mxu0 0
    %4465 = vmatpush1.bf16.msra.mxu0 0
    %4466 = vmatprep.subr.bf16.mxu0 0
    %4467 = vmatpush1.bf16.msra.mxu0 0
    %4468 = vmatprep.subr.bf16.mxu0 0
    %4469 = vmatpush1.bf16.msra.mxu0 0
    %4470 = vmatprep.subr.bf16.mxu0 0
    %4471 = vmatpush1.bf16.msra.mxu0 0
    %4472 = vmatprep.subr.bf16.mxu0 0
    %4473 = vmatpush1.bf16.msra.mxu0 0
    %4474 = vmatprep.subr.bf16.mxu0 0
    %4475 = vmatpush1.bf16.msra.mxu0 0
    %4476 = vmatprep.subr.bf16.mxu0 0
    %4477 = vmatpush1.bf16.msra.mxu0 0
    %4478 = vmatprep.subr.bf16.mxu0 0
    %4479 = vmatpush1.bf16.msra.mxu0 0
    %4480 = vmatprep.subr.bf16.mxu0 0
    %4481 = vmatpush1.bf16.msra.mxu0 0
    %4482 = vmatprep.subr.bf16.mxu0 0
    %4483 = vmatpush1.bf16.msra.mxu0 0
    %4484 = vmatprep.subr.bf16.mxu0 0
    %4485 = vmatpush1.bf16.msra.mxu0 0
    %4486 = vmatprep.mubr.bf16.mxu0 0
    %4487 = vmatmul.mubr.bf16.gmra.mrb[0].mxu0 %v4151
    %v4488 = vpop.f32.mrb[0].mxu0
    %v4489 = vadd.f32 %v3825, %v4488
    %v4490 = vpop.f32.mrb[0].mxu0
    %v4491 = vadd.f32 %v3829, %v4490
    %v4492 = vpop.f32.mrb[0].mxu0
    %v4493 = vadd.f32 %v3825, %v4492
    %v4494 = vpop.f32.mrb[0].mxu0
    %v4495 = vadd.f32 %v3829, %v4494
    %4496 = vdwg.mxu0
    %v4497 = vmax.f32 %v4188, 0.0
    %v4498 = vmax.f32 %v4190, 0.0
    %v4499 = vmax.f32 %v4231, 0.0
    %v4500 = vmax.f32 %v4233, 0.0
    %v4501 = vmax.f32 %v4274, 0.0
    %v4502 = vmax.f32 %v4276, 0.0
    %v4503 = vmax.f32 %v4317, 0.0
    %v4504 = vmax.f32 %v4319, 0.0
    %v4505 = vmax.f32 %v4360, 0.0
    %v4506 = vmax.f32 %v4362, 0.0
    %v4507 = vmax.f32 %v4403, 0.0
    %v4508 = vmax.f32 %v4405, 0.0
    %v4509 = vmax.f32 %v4446, 0.0
    %v4510 = vmax.f32 %v4448, 0.0
    %v4511 = vmax.f32 %v4489, 0.0
    %v4512 = vmax.f32 %v4491, 0.0
    %v4513 = vmax.f32 %v4192, 0.0
    %v4514 = vmax.f32 %v4194, 0.0
    %v4515 = vmax.f32 %v4235, 0.0
    %v4516 = vmax.f32 %v4237, 0.0
    %v4517 = vmax.f32 %v4278, 0.0
    %v4518 = vmax.f32 %v4280, 0.0
    %v4519 = vmax.f32 %v4321, 0.0
    %v4520 = vmax.f32 %v4323, 0.0
    %v4521 = vmax.f32 %v4364, 0.0
    %v4522 = vmax.f32 %v4366, 0.0
    %v4523 = vmax.f32 %v4407, 0.0
    %v4524 = vmax.f32 %v4409, 0.0
    %v4525 = vmax.f32 %v4450, 0.0
    %v4526 = vmax.f32 %v4452, 0.0
    %v4527 = vmax.f32 %v4493, 0.0
    %v4528 = vmax.f32 %v4495, 0.0
    %v4529 = vpack.c.bf16 %v4513, %v4497
    %v4530 = vpack.c.bf16 %v4514, %v4498
    %v4531 = vpack.c.bf16 %v4515, %v4499
    %v4532 = vpack.c.bf16 %v4516, %v4500
    %v4533 = vpack.c.bf16 %v4517, %v4501
    %v4534 = vpack.c.bf16 %v4518, %v4502
    %v4535 = vpack.c.bf16 %v4519, %v4503
    %v4536 = vpack.c.bf16 %v4520, %v4504
    %v4537 = vpack.c.bf16 %v4521, %v4505
    %v4538 = vpack.c.bf16 %v4522, %v4506
    %v4539 = vpack.c.bf16 %v4523, %v4507
    %v4540 = vpack.c.bf16 %v4524, %v4508
    %v4541 = vpack.c.bf16 %v4525, %v4509
    %v4542 = vpack.c.bf16 %v4526, %v4510
    %v4543 = vpack.c.bf16 %v4527, %v4511
    %v4544 = vpack.c.bf16 %v4528, %v4512
    %v4545 = vld [vmem:[%s8] sm:$0xf]
    %v4546 = vld [vmem:[%s8 + $0x4] sm:$0xf]
    %v4547 = vld [vmem:[%s8 + $0x8] sm:$0xf]
    %v4548 = vld [vmem:[%s8 + $0xc] sm:$0xf]
    %v4549 = vld [vmem:[%s8 + $0x10] sm:$0xf]
    %v4550 = vld [vmem:[%s8 + $0x14] sm:$0xf]
    %v4551 = vld [vmem:[%s8 + $0x18] sm:$0xf]
    %v4552 = vld [vmem:[%s8 + $0x1c] sm:$0xf]
    %v4553 = vld [vmem:[%s8 + $0x20] sm:$0xf]
    %v4554 = vld [vmem:[%s8 + $0x24] sm:$0xf]
    %v4555 = vld [vmem:[%s8 + $0x28] sm:$0xf]
    %v4556 = vld [vmem:[%s8 + $0x2c] sm:$0xf]
    %v4557 = vld [vmem:[%s8 + $0x30] sm:$0xf]
    %v4558 = vld [vmem:[%s8 + $0x34] sm:$0xf]
    %v4559 = vld [vmem:[%s8 + $0x38] sm:$0xf]
    %v4560 = vld [vmem:[%s8 + $0x3c] sm:$0xf]
    %v4561 = vld [vmem:[%s8 + $0x40] sm:$0xf]
    %v4562 = vld [vmem:[%s8 + $0x44] sm:$0xf]
    %v4563 = vld [vmem:[%s8 + $0x48] sm:$0xf]
    %v4564 = vld [vmem:[%s8 + $0x4c] sm:$0xf]
    %v4565 = vld [vmem:[%s8 + $0x50] sm:$0xf]
    %v4566 = vld [vmem:[%s8 + $0x54] sm:$0xf]
    %v4567 = vld [vmem:[%s8 + $0x58] sm:$0xf]
    %v4568 = vld [vmem:[%s8 + $0x5c] sm:$0xf]
    %v4569 = vld [vmem:[%s8 + $0x60] sm:$0xf]
    %v4570 = vld [vmem:[%s8 + $0x64] sm:$0xf]
    %v4571 = vld [vmem:[%s8 + $0x68] sm:$0xf]
    %v4572 = vld [vmem:[%s8 + $0x6c] sm:$0xf]
    %v4573 = vld [vmem:[%s8 + $0x70] sm:$0xf]
    %v4574 = vld [vmem:[%s8 + $0x74] sm:$0xf]
    %v4575 = vld [vmem:[%s8 + $0x78] sm:$0xf]
    %v4576 = vld [vmem:[%s8 + $0x7c] sm:$0xf]
    %v4577 = vld [vmem:[%s8 + $0x80] sm:$0xf]
    %v4578 = vld [vmem:[%s8 + $0x84] sm:$0xf]
    %v4579 = vld [vmem:[%s8 + $0x88] sm:$0xf]
    %v4580 = vld [vmem:[%s8 + $0x8c] sm:$0xf]
    %v4581 = vld [vmem:[%s8 + $0x90] sm:$0xf]
    %v4582 = vld [vmem:[%s8 + $0x94] sm:$0xf]
    %v4583 = vld [vmem:[%s8 + $0x98] sm:$0xf]
    %v4584 = vld [vmem:[%s8 + $0x9c] sm:$0xf]
    %v4585 = vld [vmem:[%s8 + $0xa0] sm:$0xf]
    %v4586 = vld [vmem:[%s8 + $0xa4] sm:$0xf]
    %v4587 = vld [vmem:[%s8 + $0xa8] sm:$0xf]
    %v4588 = vld [vmem:[%s8 + $0xac] sm:$0xf]
    %v4589 = vld [vmem:[%s8 + $0xb0] sm:$0xf]
    %v4590 = vld [vmem:[%s8 + $0xb4] sm:$0xf]
    %v4591 = vld [vmem:[%s8 + $0xb8] sm:$0xf]
    %v4592 = vld [vmem:[%s8 + $0xbc] sm:$0xf]
    %v4593 = vld [vmem:[%s8 + $0xc0] sm:$0xf]
    %v4594 = vld [vmem:[%s8 + $0xc4] sm:$0xf]
    %v4595 = vld [vmem:[%s8 + $0xc8] sm:$0xf]
    %v4596 = vld [vmem:[%s8 + $0xcc] sm:$0xf]
    %v4597 = vld [vmem:[%s8 + $0xd0] sm:$0xf]
    %v4598 = vld [vmem:[%s8 + $0xd4] sm:$0xf]
    %v4599 = vld [vmem:[%s8 + $0xd8] sm:$0xf]
    %v4600 = vld [vmem:[%s8 + $0xdc] sm:$0xf]
    %v4601 = vld [vmem:[%s8 + $0xe0] sm:$0xf]
    %v4602 = vld [vmem:[%s8 + $0xe4] sm:$0xf]
    %v4603 = vld [vmem:[%s8 + $0xe8] sm:$0xf]
    %v4604 = vld [vmem:[%s8 + $0xec] sm:$0xf]
    %v4605 = vld [vmem:[%s8 + $0xf0] sm:$0xf]
    %v4606 = vld [vmem:[%s8 + $0xf4] sm:$0xf]
    %v4607 = vld [vmem:[%s8 + $0xf8] sm:$0xf]
    %v4608 = vld [vmem:[%s8 + $0xfc] sm:$0xf]
    %v4609 = vld [vmem:[%s8 + $0x100] sm:$0xf]
    %v4610 = vld [vmem:[%s8 + $0x104] sm:$0xf]
    %v4611 = vld [vmem:[%s8 + $0x108] sm:$0xf]
    %v4612 = vld [vmem:[%s8 + $0x10c] sm:$0xf]
    %v4613 = vld [vmem:[%s8 + $0x110] sm:$0xf]
    %v4614 = vld [vmem:[%s8 + $0x114] sm:$0xf]
    %v4615 = vld [vmem:[%s8 + $0x118] sm:$0xf]
    %v4616 = vld [vmem:[%s8 + $0x11c] sm:$0xf]
    %v4617 = vld [vmem:[%s8 + $0x120] sm:$0xf]
    %v4618 = vld [vmem:[%s8 + $0x124] sm:$0xf]
    %v4619 = vld [vmem:[%s8 + $0x128] sm:$0xf]
    %v4620 = vld [vmem:[%s8 + $0x12c] sm:$0xf]
    %v4621 = vld [vmem:[%s8 + $0x130] sm:$0xf]
    %v4622 = vld [vmem:[%s8 + $0x134] sm:$0xf]
    %v4623 = vld [vmem:[%s8 + $0x138] sm:$0xf]
    %v4624 = vld [vmem:[%s8 + $0x13c] sm:$0xf]
    %v4625 = vld [vmem:[%s8 + $0x140] sm:$0xf]
    %v4626 = vld [vmem:[%s8 + $0x144] sm:$0xf]
    %v4627 = vld [vmem:[%s8 + $0x148] sm:$0xf]
    %v4628 = vld [vmem:[%s8 + $0x14c] sm:$0xf]
    %v4629 = vld [vmem:[%s8 + $0x150] sm:$0xf]
    %v4630 = vld [vmem:[%s8 + $0x154] sm:$0xf]
    %v4631 = vld [vmem:[%s8 + $0x158] sm:$0xf]
    %v4632 = vld [vmem:[%s8 + $0x15c] sm:$0xf]
    %v4633 = vld [vmem:[%s8 + $0x160] sm:$0xf]
    %v4634 = vld [vmem:[%s8 + $0x164] sm:$0xf]
    %v4635 = vld [vmem:[%s8 + $0x168] sm:$0xf]
    %v4636 = vld [vmem:[%s8 + $0x16c] sm:$0xf]
    %v4637 = vld [vmem:[%s8 + $0x170] sm:$0xf]
    %v4638 = vld [vmem:[%s8 + $0x174] sm:$0xf]
    %v4639 = vld [vmem:[%s8 + $0x178] sm:$0xf]
    %v4640 = vld [vmem:[%s8 + $0x17c] sm:$0xf]
    %v4641 = vld [vmem:[%s8 + $0x180] sm:$0xf]
    %v4642 = vld [vmem:[%s8 + $0x184] sm:$0xf]
    %v4643 = vld [vmem:[%s8 + $0x188] sm:$0xf]
    %v4644 = vld [vmem:[%s8 + $0x18c] sm:$0xf]
    %v4645 = vld [vmem:[%s8 + $0x190] sm:$0xf]
    %v4646 = vld [vmem:[%s8 + $0x194] sm:$0xf]
    %v4647 = vld [vmem:[%s8 + $0x198] sm:$0xf]
    %v4648 = vld [vmem:[%s8 + $0x19c] sm:$0xf]
    %v4649 = vld [vmem:[%s8 + $0x1a0] sm:$0xf]
    %v4650 = vld [vmem:[%s8 + $0x1a4] sm:$0xf]
    %v4651 = vld [vmem:[%s8 + $0x1a8] sm:$0xf]
    %v4652 = vld [vmem:[%s8 + $0x1ac] sm:$0xf]
    %v4653 = vld [vmem:[%s8 + $0x1b0] sm:$0xf]
    %v4654 = vld [vmem:[%s8 + $0x1b4] sm:$0xf]
    %v4655 = vld [vmem:[%s8 + $0x1b8] sm:$0xf]
    %v4656 = vld [vmem:[%s8 + $0x1bc] sm:$0xf]
    %v4657 = vld [vmem:[%s8 + $0x1c0] sm:$0xf]
    %v4658 = vld [vmem:[%s8 + $0x1c4] sm:$0xf]
    %v4659 = vld [vmem:[%s8 + $0x1c8] sm:$0xf]
    %v4660 = vld [vmem:[%s8 + $0x1cc] sm:$0xf]
    %v4661 = vld [vmem:[%s8 + $0x1d0] sm:$0xf]
    %v4662 = vld [vmem:[%s8 + $0x1d4] sm:$0xf]
    %v4663 = vld [vmem:[%s8 + $0x1d8] sm:$0xf]
    %v4664 = vld [vmem:[%s8 + $0x1dc] sm:$0xf]
    %v4665 = vld [vmem:[%s8 + $0x1e0] sm:$0xf]
    %v4666 = vld [vmem:[%s8 + $0x1e4] sm:$0xf]
    %v4667 = vld [vmem:[%s8 + $0x1e8] sm:$0xf]
    %v4668 = vld [vmem:[%s8 + $0x1ec] sm:$0xf]
    %v4669 = vld [vmem:[%s8 + $0x1f0] sm:$0xf]
    %v4670 = vld [vmem:[%s8 + $0x1f4] sm:$0xf]
    %v4671 = vld [vmem:[%s8 + $0x1f8] sm:$0xf]
    %v4672 = vld [vmem:[%s8 + $0x1fc] sm:$0xf]
    %v4673 = vld [vmem:[%s8 + $0x200] sm:$0xf]
    %v4674 = vld [vmem:[%s8 + $0x204] sm:$0xf]
    %v4675 = vld [vmem:[%s8 + $0x208] sm:$0xf]
    %v4676 = vld [vmem:[%s8 + $0x20c] sm:$0xf]
    %v4677 = vld [vmem:[%s8 + $0x210] sm:$0xf]
    %v4678 = vld [vmem:[%s8 + $0x214] sm:$0xf]
    %v4679 = vld [vmem:[%s8 + $0x218] sm:$0xf]
    %v4680 = vld [vmem:[%s8 + $0x21c] sm:$0xf]
    %v4681 = vld [vmem:[%s8 + $0x220] sm:$0xf]
    %v4682 = vld [vmem:[%s8 + $0x224] sm:$0xf]
    %v4683 = vld [vmem:[%s8 + $0x228] sm:$0xf]
    %v4684 = vld [vmem:[%s8 + $0x22c] sm:$0xf]
    %v4685 = vld [vmem:[%s8 + $0x230] sm:$0xf]
    %v4686 = vld [vmem:[%s8 + $0x234] sm:$0xf]
    %v4687 = vld [vmem:[%s8 + $0x238] sm:$0xf]
    %v4688 = vld [vmem:[%s8 + $0x23c] sm:$0xf]
    %v4689 = vld [vmem:[%s8 + $0x240] sm:$0xf]
    %v4690 = vld [vmem:[%s8 + $0x244] sm:$0xf]
    %v4691 = vld [vmem:[%s8 + $0x248] sm:$0xf]
    %v4692 = vld [vmem:[%s8 + $0x24c] sm:$0xf]
    %v4693 = vld [vmem:[%s8 + $0x250] sm:$0xf]
    %v4694 = vld [vmem:[%s8 + $0x254] sm:$0xf]
    %v4695 = vld [vmem:[%s8 + $0x258] sm:$0xf]
    %v4696 = vld [vmem:[%s8 + $0x25c] sm:$0xf]
    %v4697 = vld [vmem:[%s8 + $0x260] sm:$0xf]
    %v4698 = vld [vmem:[%s8 + $0x264] sm:$0xf]
    %v4699 = vld [vmem:[%s8 + $0x268] sm:$0xf]
    %v4700 = vld [vmem:[%s8 + $0x26c] sm:$0xf]
    %v4701 = vld [vmem:[%s8 + $0x270] sm:$0xf]
    %v4702 = vld [vmem:[%s8 + $0x274] sm:$0xf]
    %v4703 = vld [vmem:[%s8 + $0x278] sm:$0xf]
    %v4704 = vld [vmem:[%s8 + $0x27c] sm:$0xf]
    %v4705 = vld [vmem:[%s8 + $0x280] sm:$0xf]
    %v4706 = vld [vmem:[%s8 + $0x284] sm:$0xf]
    %v4707 = vld [vmem:[%s8 + $0x288] sm:$0xf]
    %v4708 = vld [vmem:[%s8 + $0x28c] sm:$0xf]
    %v4709 = vld [vmem:[%s8 + $0x290] sm:$0xf]
    %v4710 = vld [vmem:[%s8 + $0x294] sm:$0xf]
    %v4711 = vld [vmem:[%s8 + $0x298] sm:$0xf]
    %v4712 = vld [vmem:[%s8 + $0x29c] sm:$0xf]
    %v4713 = vld [vmem:[%s8 + $0x2a0] sm:$0xf]
    %v4714 = vld [vmem:[%s8 + $0x2a4] sm:$0xf]
    %v4715 = vld [vmem:[%s8 + $0x2a8] sm:$0xf]
    %v4716 = vld [vmem:[%s8 + $0x2ac] sm:$0xf]
    %v4717 = vld [vmem:[%s8 + $0x2b0] sm:$0xf]
    %v4718 = vld [vmem:[%s8 + $0x2b4] sm:$0xf]
    %v4719 = vld [vmem:[%s8 + $0x2b8] sm:$0xf]
    %v4720 = vld [vmem:[%s8 + $0x2bc] sm:$0xf]
    %v4721 = vld [vmem:[%s8 + $0x2c0] sm:$0xf]
    %v4722 = vld [vmem:[%s8 + $0x2c4] sm:$0xf]
    %v4723 = vld [vmem:[%s8 + $0x2c8] sm:$0xf]
    %v4724 = vld [vmem:[%s8 + $0x2cc] sm:$0xf]
    %v4725 = vld [vmem:[%s8 + $0x2d0] sm:$0xf]
    %v4726 = vld [vmem:[%s8 + $0x2d4] sm:$0xf]
    %v4727 = vld [vmem:[%s8 + $0x2d8] sm:$0xf]
    %v4728 = vld [vmem:[%s8 + $0x2dc] sm:$0xf]
    %v4729 = vld [vmem:[%s8 + $0x2e0] sm:$0xf]
    %v4730 = vld [vmem:[%s8 + $0x2e4] sm:$0xf]
    %v4731 = vld [vmem:[%s8 + $0x2e8] sm:$0xf]
    %v4732 = vld [vmem:[%s8 + $0x2ec] sm:$0xf]
    %v4733 = vld [vmem:[%s8 + $0x2f0] sm:$0xf]
    %v4734 = vld [vmem:[%s8 + $0x2f4] sm:$0xf]
    %v4735 = vld [vmem:[%s8 + $0x2f8] sm:$0xf]
    %v4736 = vld [vmem:[%s8 + $0x2fc] sm:$0xf]
    %v4737 = vld [vmem:[%s8 + $0x300] sm:$0xf]
    %v4738 = vld [vmem:[%s8 + $0x304] sm:$0xf]
    %v4739 = vld [vmem:[%s8 + $0x308] sm:$0xf]
    %v4740 = vld [vmem:[%s8 + $0x30c] sm:$0xf]
    %v4741 = vld [vmem:[%s8 + $0x310] sm:$0xf]
    %v4742 = vld [vmem:[%s8 + $0x314] sm:$0xf]
    %v4743 = vld [vmem:[%s8 + $0x318] sm:$0xf]
    %v4744 = vld [vmem:[%s8 + $0x31c] sm:$0xf]
    %v4745 = vld [vmem:[%s8 + $0x320] sm:$0xf]
    %v4746 = vld [vmem:[%s8 + $0x324] sm:$0xf]
    %v4747 = vld [vmem:[%s8 + $0x328] sm:$0xf]
    %v4748 = vld [vmem:[%s8 + $0x32c] sm:$0xf]
    %v4749 = vld [vmem:[%s8 + $0x330] sm:$0xf]
    %v4750 = vld [vmem:[%s8 + $0x334] sm:$0xf]
    %v4751 = vld [vmem:[%s8 + $0x338] sm:$0xf]
    %v4752 = vld [vmem:[%s8 + $0x33c] sm:$0xf]
    %v4753 = vld [vmem:[%s8 + $0x340] sm:$0xf]
    %v4754 = vld [vmem:[%s8 + $0x344] sm:$0xf]
    %v4755 = vld [vmem:[%s8 + $0x348] sm:$0xf]
    %v4756 = vld [vmem:[%s8 + $0x34c] sm:$0xf]
    %v4757 = vld [vmem:[%s8 + $0x350] sm:$0xf]
    %v4758 = vld [vmem:[%s8 + $0x354] sm:$0xf]
    %v4759 = vld [vmem:[%s8 + $0x358] sm:$0xf]
    %v4760 = vld [vmem:[%s8 + $0x35c] sm:$0xf]
    %v4761 = vld [vmem:[%s8 + $0x360] sm:$0xf]
    %v4762 = vld [vmem:[%s8 + $0x364] sm:$0xf]
    %v4763 = vld [vmem:[%s8 + $0x368] sm:$0xf]
    %v4764 = vld [vmem:[%s8 + $0x36c] sm:$0xf]
    %v4765 = vld [vmem:[%s8 + $0x370] sm:$0xf]
    %v4766 = vld [vmem:[%s8 + $0x374] sm:$0xf]
    %v4767 = vld [vmem:[%s8 + $0x378] sm:$0xf]
    %v4768 = vld [vmem:[%s8 + $0x37c] sm:$0xf]
    %v4769 = vld [vmem:[%s8 + $0x380] sm:$0xf]
    %v4770 = vld [vmem:[%s8 + $0x384] sm:$0xf]
    %v4771 = vld [vmem:[%s8 + $0x388] sm:$0xf]
    %v4772 = vld [vmem:[%s8 + $0x38c] sm:$0xf]
    %v4773 = vld [vmem:[%s8 + $0x390] sm:$0xf]
    %v4774 = vld [vmem:[%s8 + $0x394] sm:$0xf]
    %v4775 = vld [vmem:[%s8 + $0x398] sm:$0xf]
    %v4776 = vld [vmem:[%s8 + $0x39c] sm:$0xf]
    %v4777 = vld [vmem:[%s8 + $0x3a0] sm:$0xf]
    %v4778 = vld [vmem:[%s8 + $0x3a4] sm:$0xf]
    %v4779 = vld [vmem:[%s8 + $0x3a8] sm:$0xf]
    %v4780 = vld [vmem:[%s8 + $0x3ac] sm:$0xf]
    %v4781 = vld [vmem:[%s8 + $0x3b0] sm:$0xf]
    %v4782 = vld [vmem:[%s8 + $0x3b4] sm:$0xf]
    %v4783 = vld [vmem:[%s8 + $0x3b8] sm:$0xf]
    %v4784 = vld [vmem:[%s8 + $0x3bc] sm:$0xf]
    %v4785 = vld [vmem:[%s8 + $0x3c0] sm:$0xf]
    %v4786 = vld [vmem:[%s8 + $0x3c4] sm:$0xf]
    %v4787 = vld [vmem:[%s8 + $0x3c8] sm:$0xf]
    %v4788 = vld [vmem:[%s8 + $0x3cc] sm:$0xf]
    %v4789 = vld [vmem:[%s8 + $0x3d0] sm:$0xf]
    %v4790 = vld [vmem:[%s8 + $0x3d4] sm:$0xf]
    %v4791 = vld [vmem:[%s8 + $0x3d8] sm:$0xf]
    %v4792 = vld [vmem:[%s8 + $0x3dc] sm:$0xf]
    %v4793 = vld [vmem:[%s8 + $0x3e0] sm:$0xf]
    %v4794 = vld [vmem:[%s8 + $0x3e4] sm:$0xf]
    %v4795 = vld [vmem:[%s8 + $0x3e8] sm:$0xf]
    %v4796 = vld [vmem:[%s8 + $0x3ec] sm:$0xf]
    %v4797 = vld [vmem:[%s8 + $0x3f0] sm:$0xf]
    %v4798 = vld [vmem:[%s8 + $0x3f4] sm:$0xf]
    %v4799 = vld [vmem:[%s8 + $0x3f8] sm:$0xf]
    %v4800 = vld [vmem:[%s8 + $0x3fc] sm:$0xf]
    %v4801 = vlaneseq
    %v4802 = vshrl.u32 %v4801, 7
    %v4803 = vsub.s32 5, %v4802
    %v4804 = vrot.slane %v2999, %v4803
    %v5061 = vunpack.c.l.b16 %v4545
    %v5062 = vunpack.c.l.b16 %v4546
    %v5063 = vunpack.c.l.b16 %v4547
    %v5064 = vunpack.c.l.b16 %v4548
    %v5065 = vunpack.c.l.b16 %v4549
    %v5066 = vunpack.c.l.b16 %v4550
    %v5067 = vunpack.c.l.b16 %v4551
    %v5068 = vunpack.c.l.b16 %v4552
    %v5069 = vunpack.c.l.b16 %v4553
    %v5070 = vunpack.c.l.b16 %v4554
    %v5071 = vunpack.c.l.b16 %v4555
    %v5072 = vunpack.c.l.b16 %v4556
    %v5073 = vunpack.c.l.b16 %v4557
    %v5074 = vunpack.c.l.b16 %v4558
    %v5075 = vunpack.c.l.b16 %v4559
    %v5076 = vunpack.c.l.b16 %v4560
    %v5077 = vunpack.c.l.b16 %v4561
    %v5078 = vunpack.c.l.b16 %v4562
    %v5079 = vunpack.c.l.b16 %v4563
    %v5080 = vunpack.c.l.b16 %v4564
    %v5081 = vunpack.c.l.b16 %v4565
    %v5082 = vunpack.c.l.b16 %v4566
    %v5083 = vunpack.c.l.b16 %v4567
    %v5084 = vunpack.c.l.b16 %v4568
    %v5085 = vunpack.c.l.b16 %v4569
    %v5086 = vunpack.c.l.b16 %v4570
    %v5087 = vunpack.c.l.b16 %v4571
    %v5088 = vunpack.c.l.b16 %v4572
    %v5089 = vunpack.c.l.b16 %v4573
    %v5090 = vunpack.c.l.b16 %v4574
    %v5091 = vunpack.c.l.b16 %v4575
    %v5092 = vunpack.c.l.b16 %v4576
    %v5093 = vunpack.c.l.b16 %v4577
    %v5094 = vunpack.c.l.b16 %v4578
    %v5095 = vunpack.c.l.b16 %v4579
    %v5096 = vunpack.c.l.b16 %v4580
    %v5097 = vunpack.c.l.b16 %v4581
    %v5098 = vunpack.c.l.b16 %v4582
    %v5099 = vunpack.c.l.b16 %v4583
    %v5100 = vunpack.c.l.b16 %v4584
    %v5101 = vunpack.c.l.b16 %v4585
    %v5102 = vunpack.c.l.b16 %v4586
    %v5103 = vunpack.c.l.b16 %v4587
    %v5104 = vunpack.c.l.b16 %v4588
    %v5105 = vunpack.c.l.b16 %v4589
    %v5106 = vunpack.c.l.b16 %v4590
    %v5107 = vunpack.c.l.b16 %v4591
    %v5108 = vunpack.c.l.b16 %v4592
    %v5109 = vunpack.c.l.b16 %v4593
    %v5110 = vunpack.c.l.b16 %v4594
    %v5111 = vunpack.c.l.b16 %v4595
    %v5112 = vunpack.c.l.b16 %v4596
    %v5113 = vunpack.c.l.b16 %v4597
    %v5114 = vunpack.c.l.b16 %v4598
    %v5115 = vunpack.c.l.b16 %v4599
    %v5116 = vunpack.c.l.b16 %v4600
    %v5117 = vunpack.c.l.b16 %v4601
    %v5118 = vunpack.c.l.b16 %v4602
    %v5119 = vunpack.c.l.b16 %v4603
    %v5120 = vunpack.c.l.b16 %v4604
    %v5121 = vunpack.c.l.b16 %v4605
    %v5122 = vunpack.c.l.b16 %v4606
    %v5123 = vunpack.c.l.b16 %v4607
    %v5124 = vunpack.c.l.b16 %v4608
    %v5125 = vunpack.c.l.b16 %v4609
    %v5126 = vunpack.c.l.b16 %v4610
    %v5127 = vunpack.c.l.b16 %v4611
    %v5128 = vunpack.c.l.b16 %v4612
    %v5129 = vunpack.c.l.b16 %v4613
    %v5130 = vunpack.c.l.b16 %v4614
    %v5131 = vunpack.c.l.b16 %v4615
    %v5132 = vunpack.c.l.b16 %v4616
    %v5133 = vunpack.c.l.b16 %v4617
    %v5134 = vunpack.c.l.b16 %v4618
    %v5135 = vunpack.c.l.b16 %v4619
    %v5136 = vunpack.c.l.b16 %v4620
    %v5137 = vunpack.c.l.b16 %v4621
    %v5138 = vunpack.c.l.b16 %v4622
    %v5139 = vunpack.c.l.b16 %v4623
    %v5140 = vunpack.c.l.b16 %v4624
    %v5141 = vunpack.c.l.b16 %v4625
    %v5142 = vunpack.c.l.b16 %v4626
    %v5143 = vunpack.c.l.b16 %v4627
    %v5144 = vunpack.c.l.b16 %v4628
    %v5145 = vunpack.c.l.b16 %v4629
    %v5146 = vunpack.c.l.b16 %v4630
    %v5147 = vunpack.c.l.b16 %v4631
    %v5148 = vunpack.c.l.b16 %v4632
    %v5149 = vunpack.c.l.b16 %v4633
    %v5150 = vunpack.c.l.b16 %v4634
    %v5151 = vunpack.c.l.b16 %v4635
    %v5152 = vunpack.c.l.b16 %v4636
    %v5153 = vunpack.c.l.b16 %v4637
    %v5154 = vunpack.c.l.b16 %v4638
    %v5155 = vunpack.c.l.b16 %v4639
    %v5156 = vunpack.c.l.b16 %v4640
    %v5157 = vunpack.c.l.b16 %v4641
    %v5158 = vunpack.c.l.b16 %v4642
    %v5159 = vunpack.c.l.b16 %v4643
    %v5160 = vunpack.c.l.b16 %v4644
    %v5161 = vunpack.c.l.b16 %v4645
    %v5162 = vunpack.c.l.b16 %v4646
    %v5163 = vunpack.c.l.b16 %v4647
    %v5164 = vunpack.c.l.b16 %v4648
    %v5165 = vunpack.c.l.b16 %v4649
    %v5166 = vunpack.c.l.b16 %v4650
    %v5167 = vunpack.c.l.b16 %v4651
    %v5168 = vunpack.c.l.b16 %v4652
    %v5169 = vunpack.c.l.b16 %v4653
    %v5170 = vunpack.c.l.b16 %v4654
    %v5171 = vunpack.c.l.b16 %v4655
    %v5172 = vunpack.c.l.b16 %v4656
    %v5173 = vunpack.c.l.b16 %v4657
    %v5174 = vunpack.c.l.b16 %v4658
    %v5175 = vunpack.c.l.b16 %v4659
    %v5176 = vunpack.c.l.b16 %v4660
    %v5177 = vunpack.c.l.b16 %v4661
    %v5178 = vunpack.c.l.b16 %v4662
    %v5179 = vunpack.c.l.b16 %v4663
    %v5180 = vunpack.c.l.b16 %v4664
    %v5181 = vunpack.c.l.b16 %v4665
    %v5182 = vunpack.c.l.b16 %v4666
    %v5183 = vunpack.c.l.b16 %v4667
    %v5184 = vunpack.c.l.b16 %v4668
    %v5185 = vunpack.c.l.b16 %v4669
    %v5186 = vunpack.c.l.b16 %v4670
    %v5187 = vunpack.c.l.b16 %v4671
    %v5188 = vunpack.c.l.b16 %v4672
    %v5189 = vunpack.c.l.b16 %v4673
    %v5190 = vunpack.c.l.b16 %v4674
    %v5191 = vunpack.c.l.b16 %v4675
    %v5192 = vunpack.c.l.b16 %v4676
    %v5193 = vunpack.c.l.b16 %v4677
    %v5194 = vunpack.c.l.b16 %v4678
    %v5195 = vunpack.c.l.b16 %v4679
    %v5196 = vunpack.c.l.b16 %v4680
    %v5197 = vunpack.c.l.b16 %v4681
    %v5198 = vunpack.c.l.b16 %v4682
    %v5199 = vunpack.c.l.b16 %v4683
    %v5200 = vunpack.c.l.b16 %v4684
    %v5201 = vunpack.c.l.b16 %v4685
    %v5202 = vunpack.c.l.b16 %v4686
    %v5203 = vunpack.c.l.b16 %v4687
    %v5204 = vunpack.c.l.b16 %v4688
    %v5205 = vunpack.c.l.b16 %v4689
    %v5206 = vunpack.c.l.b16 %v4690
    %v5207 = vunpack.c.l.b16 %v4691
    %v5208 = vunpack.c.l.b16 %v4692
    %v5209 = vunpack.c.l.b16 %v4693
    %v5210 = vunpack.c.l.b16 %v4694
    %v5211 = vunpack.c.l.b16 %v4695
    %v5212 = vunpack.c.l.b16 %v4696
    %v5213 = vunpack.c.l.b16 %v4697
    %v5214 = vunpack.c.l.b16 %v4698
    %v5215 = vunpack.c.l.b16 %v4699
    %v5216 = vunpack.c.l.b16 %v4700
    %v5217 = vunpack.c.l.b16 %v4701
    %v5218 = vunpack.c.l.b16 %v4702
    %v5219 = vunpack.c.l.b16 %v4703
    %v5220 = vunpack.c.l.b16 %v4704
    %v5221 = vunpack.c.l.b16 %v4705
    %v5222 = vunpack.c.l.b16 %v4706
    %v5223 = vunpack.c.l.b16 %v4707
    %v5224 = vunpack.c.l.b16 %v4708
    %v5225 = vunpack.c.l.b16 %v4709
    %v5226 = vunpack.c.l.b16 %v4710
    %v5227 = vunpack.c.l.b16 %v4711
    %v5228 = vunpack.c.l.b16 %v4712
    %v5229 = vunpack.c.l.b16 %v4713
    %v5230 = vunpack.c.l.b16 %v4714
    %v5231 = vunpack.c.l.b16 %v4715
    %v5232 = vunpack.c.l.b16 %v4716
    %v5233 = vunpack.c.l.b16 %v4717
    %v5234 = vunpack.c.l.b16 %v4718
    %v5235 = vunpack.c.l.b16 %v4719
    %v5236 = vunpack.c.l.b16 %v4720
    %v5237 = vunpack.c.l.b16 %v4721
    %v5238 = vunpack.c.l.b16 %v4722
    %v5239 = vunpack.c.l.b16 %v4723
    %v5240 = vunpack.c.l.b16 %v4724
    %v5241 = vunpack.c.l.b16 %v4725
    %v5242 = vunpack.c.l.b16 %v4726
    %v5243 = vunpack.c.l.b16 %v4727
    %v5244 = vunpack.c.l.b16 %v4728
    %v5245 = vunpack.c.l.b16 %v4729
    %v5246 = vunpack.c.l.b16 %v4730
    %v5247 = vunpack.c.l.b16 %v4731
    %v5248 = vunpack.c.l.b16 %v4732
    %v5249 = vunpack.c.l.b16 %v4733
    %v5250 = vunpack.c.l.b16 %v4734
    %v5251 = vunpack.c.l.b16 %v4735
    %v5252 = vunpack.c.l.b16 %v4736
    %v5253 = vunpack.c.l.b16 %v4737
    %v5254 = vunpack.c.l.b16 %v4738
    %v5255 = vunpack.c.l.b16 %v4739
    %v5256 = vunpack.c.l.b16 %v4740
    %v5257 = vunpack.c.l.b16 %v4741
    %v5258 = vunpack.c.l.b16 %v4742
    %v5259 = vunpack.c.l.b16 %v4743
    %v5260 = vunpack.c.l.b16 %v4744
    %v5261 = vunpack.c.l.b16 %v4745
    %v5262 = vunpack.c.l.b16 %v4746
    %v5263 = vunpack.c.l.b16 %v4747
    %v5264 = vunpack.c.l.b16 %v4748
    %v5265 = vunpack.c.l.b16 %v4749
    %v5266 = vunpack.c.l.b16 %v4750
    %v5267 = vunpack.c.l.b16 %v4751
    %v5268 = vunpack.c.l.b16 %v4752
    %v5269 = vunpack.c.l.b16 %v4753
    %v5270 = vunpack.c.l.b16 %v4754
    %v5271 = vunpack.c.l.b16 %v4755
    %v5272 = vunpack.c.l.b16 %v4756
    %v5273 = vunpack.c.l.b16 %v4757
    %v5274 = vunpack.c.l.b16 %v4758
    %v5275 = vunpack.c.l.b16 %v4759
    %v5276 = vunpack.c.l.b16 %v4760
    %v5277 = vunpack.c.l.b16 %v4761
    %v5278 = vunpack.c.l.b16 %v4762
    %v5279 = vunpack.c.l.b16 %v4763
    %v5280 = vunpack.c.l.b16 %v4764
    %v5281 = vunpack.c.l.b16 %v4765
    %v5282 = vunpack.c.l.b16 %v4766
    %v5283 = vunpack.c.l.b16 %v4767
    %v5284 = vunpack.c.l.b16 %v4768
    %v5285 = vunpack.c.l.b16 %v4769
    %v5286 = vunpack.c.l.b16 %v4770
    %v5287 = vunpack.c.l.b16 %v4771
    %v5288 = vunpack.c.l.b16 %v4772
    %v5289 = vunpack.c.l.b16 %v4773
    %v5290 = vunpack.c.l.b16 %v4774
    %v5291 = vunpack.c.l.b16 %v4775
    %v5292 = vunpack.c.l.b16 %v4776
    %v5293 = vunpack.c.l.b16 %v4777
    %v5294 = vunpack.c.l.b16 %v4778
    %v5295 = vunpack.c.l.b16 %v4779
    %v5296 = vunpack.c.l.b16 %v4780
    %v5297 = vunpack.c.l.b16 %v4781
    %v5298 = vunpack.c.l.b16 %v4782
    %v5299 = vunpack.c.l.b16 %v4783
    %v5300 = vunpack.c.l.b16 %v4784
    %v5301 = vunpack.c.l.b16 %v4785
    %v5302 = vunpack.c.l.b16 %v4786
    %v5303 = vunpack.c.l.b16 %v4787
    %v5304 = vunpack.c.l.b16 %v4788
    %v5305 = vunpack.c.l.b16 %v4789
    %v5306 = vunpack.c.l.b16 %v4790
    %v5307 = vunpack.c.l.b16 %v4791
    %v5308 = vunpack.c.l.b16 %v4792
    %v5309 = vunpack.c.l.b16 %v4793
    %v5310 = vunpack.c.l.b16 %v4794
    %v5311 = vunpack.c.l.b16 %v4795
    %v5312 = vunpack.c.l.b16 %v4796
    %v5313 = vunpack.c.l.b16 %v4797
    %v5314 = vunpack.c.l.b16 %v4798
    %v5315 = vunpack.c.l.b16 %v4799
    %v5316 = vunpack.c.l.b16 %v4800
    %v5317 = vpack.c.b16 %v5062, %v5061
    %v5318 = vpack.c.b16 %v5064, %v5063
    %v5319 = vpack.c.b16 %v5066, %v5065
    %v5320 = vpack.c.b16 %v5068, %v5067
    %v5321 = vpack.c.b16 %v5070, %v5069
    %v5322 = vpack.c.b16 %v5072, %v5071
    %v5323 = vpack.c.b16 %v5074, %v5073
    %v5324 = vpack.c.b16 %v5076, %v5075
    %v5325 = vpack.c.b16 %v5078, %v5077
    %v5326 = vpack.c.b16 %v5080, %v5079
    %v5327 = vpack.c.b16 %v5082, %v5081
    %v5328 = vpack.c.b16 %v5084, %v5083
    %v5329 = vpack.c.b16 %v5086, %v5085
    %v5330 = vpack.c.b16 %v5088, %v5087
    %v5331 = vpack.c.b16 %v5090, %v5089
    %v5332 = vpack.c.b16 %v5092, %v5091
    %v5333 = vpack.c.b16 %v5094, %v5093
    %v5334 = vpack.c.b16 %v5096, %v5095
    %v5335 = vpack.c.b16 %v5098, %v5097
    %v5336 = vpack.c.b16 %v5100, %v5099
    %v5337 = vpack.c.b16 %v5102, %v5101
    %v5338 = vpack.c.b16 %v5104, %v5103
    %v5339 = vpack.c.b16 %v5106, %v5105
    %v5340 = vpack.c.b16 %v5108, %v5107
    %v5341 = vpack.c.b16 %v5110, %v5109
    %v5342 = vpack.c.b16 %v5112, %v5111
    %v5343 = vpack.c.b16 %v5114, %v5113
    %v5344 = vpack.c.b16 %v5116, %v5115
    %v5345 = vpack.c.b16 %v5118, %v5117
    %v5346 = vpack.c.b16 %v5120, %v5119
    %v5347 = vpack.c.b16 %v5122, %v5121
    %v5348 = vpack.c.b16 %v5124, %v5123
    %v5349 = vpack.c.b16 %v5126, %v5125
    %v5350 = vpack.c.b16 %v5128, %v5127
    %v5351 = vpack.c.b16 %v5130, %v5129
    %v5352 = vpack.c.b16 %v5132, %v5131
    %v5353 = vpack.c.b16 %v5134, %v5133
    %v5354 = vpack.c.b16 %v5136, %v5135
    %v5355 = vpack.c.b16 %v5138, %v5137
    %v5356 = vpack.c.b16 %v5140, %v5139
    %v5357 = vpack.c.b16 %v5142, %v5141
    %v5358 = vpack.c.b16 %v5144, %v5143
    %v5359 = vpack.c.b16 %v5146, %v5145
    %v5360 = vpack.c.b16 %v5148, %v5147
    %v5361 = vpack.c.b16 %v5150, %v5149
    %v5362 = vpack.c.b16 %v5152, %v5151
    %v5363 = vpack.c.b16 %v5154, %v5153
    %v5364 = vpack.c.b16 %v5156, %v5155
    %v5365 = vpack.c.b16 %v5158, %v5157
    %v5366 = vpack.c.b16 %v5160, %v5159
    %v5367 = vpack.c.b16 %v5162, %v5161
    %v5368 = vpack.c.b16 %v5164, %v5163
    %v5369 = vpack.c.b16 %v5166, %v5165
    %v5370 = vpack.c.b16 %v5168, %v5167
    %v5371 = vpack.c.b16 %v5170, %v5169
    %v5372 = vpack.c.b16 %v5172, %v5171
    %v5373 = vpack.c.b16 %v5174, %v5173
    %v5374 = vpack.c.b16 %v5176, %v5175
    %v5375 = vpack.c.b16 %v5178, %v5177
    %v5376 = vpack.c.b16 %v5180, %v5179
    %v5377 = vpack.c.b16 %v5182, %v5181
    %v5378 = vpack.c.b16 %v5184, %v5183
    %v5379 = vpack.c.b16 %v5186, %v5185
    %v5380 = vpack.c.b16 %v5188, %v5187
    %v5381 = vpack.c.b16 %v5190, %v5189
    %v5382 = vpack.c.b16 %v5192, %v5191
    %v5383 = vpack.c.b16 %v5194, %v5193
    %v5384 = vpack.c.b16 %v5196, %v5195
    %v5385 = vpack.c.b16 %v5198, %v5197
    %v5386 = vpack.c.b16 %v5200, %v5199
    %v5387 = vpack.c.b16 %v5202, %v5201
    %v5388 = vpack.c.b16 %v5204, %v5203
    %v5389 = vpack.c.b16 %v5206, %v5205
    %v5390 = vpack.c.b16 %v5208, %v5207
    %v5391 = vpack.c.b16 %v5210, %v5209
    %v5392 = vpack.c.b16 %v5212, %v5211
    %v5393 = vpack.c.b16 %v5214, %v5213
    %v5394 = vpack.c.b16 %v5216, %v5215
    %v5395 = vpack.c.b16 %v5218, %v5217
    %v5396 = vpack.c.b16 %v5220, %v5219
    %v5397 = vpack.c.b16 %v5222, %v5221
    %v5398 = vpack.c.b16 %v5224, %v5223
    %v5399 = vpack.c.b16 %v5226, %v5225
    %v5400 = vpack.c.b16 %v5228, %v5227
    %v5401 = vpack.c.b16 %v5230, %v5229
    %v5402 = vpack.c.b16 %v5232, %v5231
    %v5403 = vpack.c.b16 %v5234, %v5233
    %v5404 = vpack.c.b16 %v5236, %v5235
    %v5405 = vpack.c.b16 %v5238, %v5237
    %v5406 = vpack.c.b16 %v5240, %v5239
    %v5407 = vpack.c.b16 %v5242, %v5241
    %v5408 = vpack.c.b16 %v5244, %v5243
    %v5409 = vpack.c.b16 %v5246, %v5245
    %v5410 = vpack.c.b16 %v5248, %v5247
    %v5411 = vpack.c.b16 %v5250, %v5249
    %v5412 = vpack.c.b16 %v5252, %v5251
    %v5413 = vpack.c.b16 %v5254, %v5253
    %v5414 = vpack.c.b16 %v5256, %v5255
    %v5415 = vpack.c.b16 %v5258, %v5257
    %v5416 = vpack.c.b16 %v5260, %v5259
    %v5417 = vpack.c.b16 %v5262, %v5261
    %v5418 = vpack.c.b16 %v5264, %v5263
    %v5419 = vpack.c.b16 %v5266, %v5265
    %v5420 = vpack.c.b16 %v5268, %v5267
    %v5421 = vpack.c.b16 %v5270, %v5269
    %v5422 = vpack.c.b16 %v5272, %v5271
    %v5423 = vpack.c.b16 %v5274, %v5273
    %v5424 = vpack.c.b16 %v5276, %v5275
    %v5425 = vpack.c.b16 %v5278, %v5277
    %v5426 = vpack.c.b16 %v5280, %v5279
    %v5427 = vpack.c.b16 %v5282, %v5281
    %v5428 = vpack.c.b16 %v5284, %v5283
    %v5429 = vpack.c.b16 %v5286, %v5285
    %v5430 = vpack.c.b16 %v5288, %v5287
    %v5431 = vpack.c.b16 %v5290, %v5289
    %v5432 = vpack.c.b16 %v5292, %v5291
    %v5433 = vpack.c.b16 %v5294, %v5293
    %v5434 = vpack.c.b16 %v5296, %v5295
    %v5435 = vpack.c.b16 %v5298, %v5297
    %v5436 = vpack.c.b16 %v5300, %v5299
    %v5437 = vpack.c.b16 %v5302, %v5301
    %v5438 = vpack.c.b16 %v5304, %v5303
    %v5439 = vpack.c.b16 %v5306, %v5305
    %v5440 = vpack.c.b16 %v5308, %v5307
    %v5441 = vpack.c.b16 %v5310, %v5309
    %v5442 = vpack.c.b16 %v5312, %v5311
    %v5443 = vpack.c.b16 %v5314, %v5313
    %v5444 = vpack.c.b16 %v5316, %v5315
    %5573 = vmatprep.subr.bf16.mxu0 0
    %5574 = vmatpush1.bf16.msra.mxu0 %v5317
    %5575 = vmatprep.subr.bf16.mxu0 0
    %5576 = vmatpush1.bf16.msra.mxu0 %v5318
    %5577 = vmatprep.subr.bf16.mxu0 0
    %5578 = vmatpush1.bf16.msra.mxu0 %v5319
    %5579 = vmatprep.subr.bf16.mxu0 0
    %5580 = vmatpush1.bf16.msra.mxu0 %v5320
    %5581 = vmatprep.subr.bf16.mxu0 0
    %5582 = vmatpush1.bf16.msra.mxu0 %v5321
    %5583 = vmatprep.subr.bf16.mxu0 0
    %5584 = vmatpush1.bf16.msra.mxu0 %v5322
    %5585 = vmatprep.subr.bf16.mxu0 0
    %5586 = vmatpush1.bf16.msra.mxu0 %v5323
    %5587 = vmatprep.subr.bf16.mxu0 0
    %5588 = vmatpush1.bf16.msra.mxu0 %v5324
    %5589 = vmatprep.subr.bf16.mxu0 0
    %5590 = vmatpush1.bf16.msra.mxu0 %v5325
    %5591 = vmatprep.subr.bf16.mxu0 0
    %5592 = vmatpush1.bf16.msra.mxu0 %v5326
    %5593 = vmatprep.subr.bf16.mxu0 0
    %5594 = vmatpush1.bf16.msra.mxu0 %v5327
    %5595 = vmatprep.subr.bf16.mxu0 0
    %5596 = vmatpush1.bf16.msra.mxu0 %v5328
    %5597 = vmatprep.subr.bf16.mxu0 0
    %5598 = vmatpush1.bf16.msra.mxu0 %v5329
    %5599 = vmatprep.subr.bf16.mxu0 0
    %5600 = vmatpush1.bf16.msra.mxu0 %v5330
    %5601 = vmatprep.subr.bf16.mxu0 0
    %5602 = vmatpush1.bf16.msra.mxu0 %v5331
    %5603 = vmatprep.subr.bf16.mxu0 0
    %5604 = vmatpush1.bf16.msra.mxu0 %v5332
    %5605 = vmatprep.mubr.bf16.mxu0 %v4530
    %5606 = vmatmul.mubr.bf16.gmra.mrb[0].mxu0 %v4529
    %v5607 = vpop.f32.mrb[0].mxu0
    %v5608 = vadd.f32 %v4804, %v5607
    %v5609 = vpop.f32.mrb[0].mxu0
    %v5610 = vpop.f32.mrb[0].mxu0
    %v5611 = vadd.f32 %v4804, %v5610
    %v5612 = vpop.f32.mrb[0].mxu0
    %5613 = vdwg.mxu0
    %5614 = vmatprep.subr.bf16.mxu0 0
    %5615 = vmatpush1.bf16.msra.mxu0 %v5333
    %5616 = vmatprep.subr.bf16.mxu0 0
    %5617 = vmatpush1.bf16.msra.mxu0 %v5334
    %5618 = vmatprep.subr.bf16.mxu0 0
    %5619 = vmatpush1.bf16.msra.mxu0 %v5335
    %5620 = vmatprep.subr.bf16.mxu0 0
    %5621 = vmatpush1.bf16.msra.mxu0 %v5336
    %5622 = vmatprep.subr.bf16.mxu0 0
    %5623 = vmatpush1.bf16.msra.mxu0 %v5337
    %5624 = vmatprep.subr.bf16.mxu0 0
    %5625 = vmatpush1.bf16.msra.mxu0 %v5338
    %5626 = vmatprep.subr.bf16.mxu0 0
    %5627 = vmatpush1.bf16.msra.mxu0 %v5339
    %5628 = vmatprep.subr.bf16.mxu0 0
    %5629 = vmatpush1.bf16.msra.mxu0 %v5340
    %5630 = vmatprep.subr.bf16.mxu0 0
    %5631 = vmatpush1.bf16.msra.mxu0 %v5341
    %5632 = vmatprep.subr.bf16.mxu0 0
    %5633 = vmatpush1.bf16.msra.mxu0 %v5342
    %5634 = vmatprep.subr.bf16.mxu0 0
    %5635 = vmatpush1.bf16.msra.mxu0 %v5343
    %5636 = vmatprep.subr.bf16.mxu0 0
    %5637 = vmatpush1.bf16.msra.mxu0 %v5344
    %5638 = vmatprep.subr.bf16.mxu0 0
    %5639 = vmatpush1.bf16.msra.mxu0 %v5345
    %5640 = vmatprep.subr.bf16.mxu0 0
    %5641 = vmatpush1.bf16.msra.mxu0 %v5346
    %5642 = vmatprep.subr.bf16.mxu0 0
    %5643 = vmatpush1.bf16.msra.mxu0 %v5347
    %5644 = vmatprep.subr.bf16.mxu0 0
    %5645 = vmatpush1.bf16.msra.mxu0 %v5348
    %5646 = vmatprep.mubr.bf16.mxu0 %v4532
    %5647 = vmatmul.mubr.bf16.gmra.mrb[0].mxu0 %v4531
    %v5648 = vpop.f32.mrb[0].mxu0
    %v5649 = vadd.f32 %v5608, %v5648
    %v5650 = vpop.f32.mrb[0].mxu0
    %v5651 = vpop.f32.mrb[0].mxu0
    %v5652 = vadd.f32 %v5611, %v5651
    %v5653 = vpop.f32.mrb[0].mxu0
    %5654 = vdwg.mxu0
    %5655 = vmatprep.subr.bf16.mxu0 0
    %5656 = vmatpush1.bf16.msra.mxu0 %v5349
    %5657 = vmatprep.subr.bf16.mxu0 0
    %5658 = vmatpush1.bf16.msra.mxu0 %v5350
    %5659 = vmatprep.subr.bf16.mxu0 0
    %5660 = vmatpush1.bf16.msra.mxu0 %v5351
    %5661 = vmatprep.subr.bf16.mxu0 0
    %5662 = vmatpush1.bf16.msra.mxu0 %v5352
    %5663 = vmatprep.subr.bf16.mxu0 0
    %5664 = vmatpush1.bf16.msra.mxu0 %v5353
    %5665 = vmatprep.subr.bf16.mxu0 0
    %5666 = vmatpush1.bf16.msra.mxu0 %v5354
    %5667 = vmatprep.subr.bf16.mxu0 0
    %5668 = vmatpush1.bf16.msra.mxu0 %v5355
    %5669 = vmatprep.subr.bf16.mxu0 0
    %5670 = vmatpush1.bf16.msra.mxu0 %v5356
    %5671 = vmatprep.subr.bf16.mxu0 0
    %5672 = vmatpush1.bf16.msra.mxu0 %v5357
    %5673 = vmatprep.subr.bf16.mxu0 0
    %5674 = vmatpush1.bf16.msra.mxu0 %v5358
    %5675 = vmatprep.subr.bf16.mxu0 0
    %5676 = vmatpush1.bf16.msra.mxu0 %v5359
    %5677 = vmatprep.subr.bf16.mxu0 0
    %5678 = vmatpush1.bf16.msra.mxu0 %v5360
    %5679 = vmatprep.subr.bf16.mxu0 0
    %5680 = vmatpush1.bf16.msra.mxu0 %v5361
    %5681 = vmatprep.subr.bf16.mxu0 0
    %5682 = vmatpush1.bf16.msra.mxu0 %v5362
    %5683 = vmatprep.subr.bf16.mxu0 0
    %5684 = vmatpush1.bf16.msra.mxu0 %v5363
    %5685 = vmatprep.subr.bf16.mxu0 0
    %5686 = vmatpush1.bf16.msra.mxu0 %v5364
    %5687 = vmatprep.mubr.bf16.mxu0 %v4534
    %5688 = vmatmul.mubr.bf16.gmra.mrb[0].mxu0 %v4533
    %v5689 = vpop.f32.mrb[0].mxu0
    %v5690 = vadd.f32 %v5649, %v5689
    %v5691 = vpop.f32.mrb[0].mxu0
    %v5692 = vpop.f32.mrb[0].mxu0
    %v5693 = vadd.f32 %v5652, %v5692
    %v5694 = vpop.f32.mrb[0].mxu0
    %5695 = vdwg.mxu0
    %5696 = vmatprep.subr.bf16.mxu0 0
    %5697 = vmatpush1.bf16.msra.mxu0 %v5365
    %5698 = vmatprep.subr.bf16.mxu0 0
    %5699 = vmatpush1.bf16.msra.mxu0 %v5366
    %5700 = vmatprep.subr.bf16.mxu0 0
    %5701 = vmatpush1.bf16.msra.mxu0 %v5367
    %5702 = vmatprep.subr.bf16.mxu0 0
    %5703 = vmatpush1.bf16.msra.mxu0 %v5368
    %5704 = vmatprep.subr.bf16.mxu0 0
    %5705 = vmatpush1.bf16.msra.mxu0 %v5369
    %5706 = vmatprep.subr.bf16.mxu0 0
    %5707 = vmatpush1.bf16.msra.mxu0 %v5370
    %5708 = vmatprep.subr.bf16.mxu0 0
    %5709 = vmatpush1.bf16.msra.mxu0 %v5371
    %5710 = vmatprep.subr.bf16.mxu0 0
    %5711 = vmatpush1.bf16.msra.mxu0 %v5372
    %5712 = vmatprep.subr.bf16.mxu0 0
    %5713 = vmatpush1.bf16.msra.mxu0 %v5373
    %5714 = vmatprep.subr.bf16.mxu0 0
    %5715 = vmatpush1.bf16.msra.mxu0 %v5374
    %5716 = vmatprep.subr.bf16.mxu0 0
    %5717 = vmatpush1.bf16.msra.mxu0 %v5375
    %5718 = vmatprep.subr.bf16.mxu0 0
    %5719 = vmatpush1.bf16.msra.mxu0 %v5376
    %5720 = vmatprep.subr.bf16.mxu0 0
    %5721 = vmatpush1.bf16.msra.mxu0 %v5377
    %5722 = vmatprep.subr.bf16.mxu0 0
    %5723 = vmatpush1.bf16.msra.mxu0 %v5378
    %5724 = vmatprep.subr.bf16.mxu0 0
    %5725 = vmatpush1.bf16.msra.mxu0 %v5379
    %5726 = vmatprep.subr.bf16.mxu0 0
    %5727 = vmatpush1.bf16.msra.mxu0 %v5380
    %5728 = vmatprep.mubr.bf16.mxu0 %v4536
    %5729 = vmatmul.mubr.bf16.gmra.mrb[0].mxu0 %v4535
    %v5730 = vpop.f32.mrb[0].mxu0
    %v5731 = vadd.f32 %v5690, %v5730
    %v5732 = vpop.f32.mrb[0].mxu0
    %v5733 = vpop.f32.mrb[0].mxu0
    %v5734 = vadd.f32 %v5693, %v5733
    %v5735 = vpop.f32.mrb[0].mxu0
    %5736 = vdwg.mxu0
    %5737 = vmatprep.subr.bf16.mxu0 0
    %5738 = vmatpush1.bf16.msra.mxu0 %v5381
    %5739 = vmatprep.subr.bf16.mxu0 0
    %5740 = vmatpush1.bf16.msra.mxu0 %v5382
    %5741 = vmatprep.subr.bf16.mxu0 0
    %5742 = vmatpush1.bf16.msra.mxu0 %v5383
    %5743 = vmatprep.subr.bf16.mxu0 0
    %5744 = vmatpush1.bf16.msra.mxu0 %v5384
    %5745 = vmatprep.subr.bf16.mxu0 0
    %5746 = vmatpush1.bf16.msra.mxu0 %v5385
    %5747 = vmatprep.subr.bf16.mxu0 0
    %5748 = vmatpush1.bf16.msra.mxu0 %v5386
    %5749 = vmatprep.subr.bf16.mxu0 0
    %5750 = vmatpush1.bf16.msra.mxu0 %v5387
    %5751 = vmatprep.subr.bf16.mxu0 0
    %5752 = vmatpush1.bf16.msra.mxu0 %v5388
    %5753 = vmatprep.subr.bf16.mxu0 0
    %5754 = vmatpush1.bf16.msra.mxu0 %v5389
    %5755 = vmatprep.subr.bf16.mxu0 0
    %5756 = vmatpush1.bf16.msra.mxu0 %v5390
    %5757 = vmatprep.subr.bf16.mxu0 0
    %5758 = vmatpush1.bf16.msra.mxu0 %v5391
    %5759 = vmatprep.subr.bf16.mxu0 0
    %5760 = vmatpush1.bf16.msra.mxu0 %v5392
    %5761 = vmatprep.subr.bf16.mxu0 0
    %5762 = vmatpush1.bf16.msra.mxu0 %v5393
    %5763 = vmatprep.subr.bf16.mxu0 0
    %5764 = vmatpush1.bf16.msra.mxu0 %v5394
    %5765 = vmatprep.subr.bf16.mxu0 0
    %5766 = vmatpush1.bf16.msra.mxu0 %v5395
    %5767 = vmatprep.subr.bf16.mxu0 0
    %5768 = vmatpush1.bf16.msra.mxu0 %v5396
    %5769 = vmatprep.mubr.bf16.mxu0 %v4538
    %5770 = vmatmul.mubr.bf16.gmra.mrb[0].mxu0 %v4537
    %v5771 = vpop.f32.mrb[0].mxu0
    %v5772 = vadd.f32 %v5731, %v5771
    %v5773 = vpop.f32.mrb[0].mxu0
    %v5774 = vpop.f32.mrb[0].mxu0
    %v5775 = vadd.f32 %v5734, %v5774
    %v5776 = vpop.f32.mrb[0].mxu0
    %5777 = vdwg.mxu0
    %5778 = vmatprep.subr.bf16.mxu0 0
    %5779 = vmatpush1.bf16.msra.mxu0 %v5397
    %5780 = vmatprep.subr.bf16.mxu0 0
    %5781 = vmatpush1.bf16.msra.mxu0 %v5398
    %5782 = vmatprep.subr.bf16.mxu0 0
    %5783 = vmatpush1.bf16.msra.mxu0 %v5399
    %5784 = vmatprep.subr.bf16.mxu0 0
    %5785 = vmatpush1.bf16.msra.mxu0 %v5400
    %5786 = vmatprep.subr.bf16.mxu0 0
    %5787 = vmatpush1.bf16.msra.mxu0 %v5401
    %5788 = vmatprep.subr.bf16.mxu0 0
    %5789 = vmatpush1.bf16.msra.mxu0 %v5402
    %5790 = vmatprep.subr.bf16.mxu0 0
    %5791 = vmatpush1.bf16.msra.mxu0 %v5403
    %5792 = vmatprep.subr.bf16.mxu0 0
    %5793 = vmatpush1.bf16.msra.mxu0 %v5404
    %5794 = vmatprep.subr.bf16.mxu0 0
    %5795 = vmatpush1.bf16.msra.mxu0 %v5405
    %5796 = vmatprep.subr.bf16.mxu0 0
    %5797 = vmatpush1.bf16.msra.mxu0 %v5406
    %5798 = vmatprep.subr.bf16.mxu0 0
    %5799 = vmatpush1.bf16.msra.mxu0 %v5407
    %5800 = vmatprep.subr.bf16.mxu0 0
    %5801 = vmatpush1.bf16.msra.mxu0 %v5408
    %5802 = vmatprep.subr.bf16.mxu0 0
    %5803 = vmatpush1.bf16.msra.mxu0 %v5409
    %5804 = vmatprep.subr.bf16.mxu0 0
    %5805 = vmatpush1.bf16.msra.mxu0 %v5410
    %5806 = vmatprep.subr.bf16.mxu0 0
    %5807 = vmatpush1.bf16.msra.mxu0 %v5411
    %5808 = vmatprep.subr.bf16.mxu0 0
    %5809 = vmatpush1.bf16.msra.mxu0 %v5412
    %5810 = vmatprep.mubr.bf16.mxu0 %v4540
    %5811 = vmatmul.mubr.bf16.gmra.mrb[0].mxu0 %v4539
    %v5812 = vpop.f32.mrb[0].mxu0
    %v5813 = vadd.f32 %v5772, %v5812
    %v5814 = vpop.f32.mrb[0].mxu0
    %v5815 = vpop.f32.mrb[0].mxu0
    %v5816 = vadd.f32 %v5775, %v5815
    %v5817 = vpop.f32.mrb[0].mxu0
    %5818 = vdwg.mxu0
    %5819 = vmatprep.subr.bf16.mxu0 0
    %5820 = vmatpush1.bf16.msra.mxu0 %v5413
    %5821 = vmatprep.subr.bf16.mxu0 0
    %5822 = vmatpush1.bf16.msra.mxu0 %v5414
    %5823 = vmatprep.subr.bf16.mxu0 0
    %5824 = vmatpush1.bf16.msra.mxu0 %v5415
    %5825 = vmatprep.subr.bf16.mxu0 0
    %5826 = vmatpush1.bf16.msra.mxu0 %v5416
    %5827 = vmatprep.subr.bf16.mxu0 0
    %5828 = vmatpush1.bf16.msra.mxu0 %v5417
    %5829 = vmatprep.subr.bf16.mxu0 0
    %5830 = vmatpush1.bf16.msra.mxu0 %v5418
    %5831 = vmatprep.subr.bf16.mxu0 0
    %5832 = vmatpush1.bf16.msra.mxu0 %v5419
    %5833 = vmatprep.subr.bf16.mxu0 0
    %5834 = vmatpush1.bf16.msra.mxu0 %v5420
    %5835 = vmatprep.subr.bf16.mxu0 0
    %5836 = vmatpush1.bf16.msra.mxu0 %v5421
    %5837 = vmatprep.subr.bf16.mxu0 0
    %5838 = vmatpush1.bf16.msra.mxu0 %v5422
    %5839 = vmatprep.subr.bf16.mxu0 0
    %5840 = vmatpush1.bf16.msra.mxu0 %v5423
    %5841 = vmatprep.subr.bf16.mxu0 0
    %5842 = vmatpush1.bf16.msra.mxu0 %v5424
    %5843 = vmatprep.subr.bf16.mxu0 0
    %5844 = vmatpush1.bf16.msra.mxu0 %v5425
    %5845 = vmatprep.subr.bf16.mxu0 0
    %5846 = vmatpush1.bf16.msra.mxu0 %v5426
    %5847 = vmatprep.subr.bf16.mxu0 0
    %5848 = vmatpush1.bf16.msra.mxu0 %v5427
    %5849 = vmatprep.subr.bf16.mxu0 0
    %5850 = vmatpush1.bf16.msra.mxu0 %v5428
    %5851 = vmatprep.mubr.bf16.mxu0 %v4542
    %5852 = vmatmul.mubr.bf16.gmra.mrb[0].mxu0 %v4541
    %v5853 = vpop.f32.mrb[0].mxu0
    %v5854 = vadd.f32 %v5813, %v5853
    %v5855 = vpop.f32.mrb[0].mxu0
    %v5856 = vpop.f32.mrb[0].mxu0
    %v5857 = vadd.f32 %v5816, %v5856
    %v5858 = vpop.f32.mrb[0].mxu0
    %5859 = vdwg.mxu0
    %5860 = vmatprep.subr.bf16.mxu0 0
    %5861 = vmatpush1.bf16.msra.mxu0 %v5429
    %5862 = vmatprep.subr.bf16.mxu0 0
    %5863 = vmatpush1.bf16.msra.mxu0 %v5430
    %5864 = vmatprep.subr.bf16.mxu0 0
    %5865 = vmatpush1.bf16.msra.mxu0 %v5431
    %5866 = vmatprep.subr.bf16.mxu0 0
    %5867 = vmatpush1.bf16.msra.mxu0 %v5432
    %5868 = vmatprep.subr.bf16.mxu0 0
    %5869 = vmatpush1.bf16.msra.mxu0 %v5433
    %5870 = vmatprep.subr.bf16.mxu0 0
    %5871 = vmatpush1.bf16.msra.mxu0 %v5434
    %5872 = vmatprep.subr.bf16.mxu0 0
    %5873 = vmatpush1.bf16.msra.mxu0 %v5435
    %5874 = vmatprep.subr.bf16.mxu0 0
    %5875 = vmatpush1.bf16.msra.mxu0 %v5436
    %5876 = vmatprep.subr.bf16.mxu0 0
    %5877 = vmatpush1.bf16.msra.mxu0 %v5437
    %5878 = vmatprep.subr.bf16.mxu0 0
    %5879 = vmatpush1.bf16.msra.mxu0 %v5438
    %5880 = vmatprep.subr.bf16.mxu0 0
    %5881 = vmatpush1.bf16.msra.mxu0 %v5439
    %5882 = vmatprep.subr.bf16.mxu0 0
    %5883 = vmatpush1.bf16.msra.mxu0 %v5440
    %5884 = vmatprep.subr.bf16.mxu0 0
    %5885 = vmatpush1.bf16.msra.mxu0 %v5441
    %5886 = vmatprep.subr.bf16.mxu0 0
    %5887 = vmatpush1.bf16.msra.mxu0 %v5442
    %5888 = vmatprep.subr.bf16.mxu0 0
    %5889 = vmatpush1.bf16.msra.mxu0 %v5443
    %5890 = vmatprep.subr.bf16.mxu0 0
    %5891 = vmatpush1.bf16.msra.mxu0 %v5444
    %5892 = vmatprep.mubr.bf16.mxu0 %v4544
    %5893 = vmatmul.mubr.bf16.gmra.mrb[0].mxu0 %v4543
    %v5894 = vpop.f32.mrb[0].mxu0
    %v5895 = vadd.f32 %v5854, %v5894
    %v5896 = vpop.f32.mrb[0].mxu0
    %v5897 = vpop.f32.mrb[0].mxu0
    %v5898 = vadd.f32 %v5857, %v5897
    %v5899 = vpop.f32.mrb[0].mxu0
    %5900 = vdwg.mxu0
    %v5901 = vadd.f32 %v3699, %v5895
    %v5902 = vadd.f32 %v3700, %v5898
    %v5903 = vsel %vm124, %v5901, 0.0
    %5904 = vadd.xlane.f32.xlu0 %v5903
    %v5905 = vpop.xlane.xlu0 %5904
    %v5906 = vsel %vm124, %v5902, 0.0
    %5907 = vadd.xlane.f32.xlu0 %v5906
    %v5908 = vpop.xlane.xlu0 %5907
    %v5909 = vmul.f32 %v5905, %v725
    %v5910 = vmul.f32 %v5908, %v725
    %v5911 = vsub.f32 %v5901, %v5909
    %v5912 = vsub.f32 %v5902, %v5910
    %v5913 = vmul.f32 %v5911, %v5911
    %v5914 = vmul.f32 %v5912, %v5912
    %v5915 = vsel %vm124, %v5913, 0.0
    %5916 = vadd.xlane.f32.xlu0 %v5915
    %v5917 = vpop.xlane.xlu0 %5916
    %v5918 = vsel %vm124, %v5914, 0.0
    %5919 = vadd.xlane.f32.xlu0 %v5918
    %v5920 = vpop.xlane.xlu0 %5919
    %v5921 = vmul.f32 %v5917, %v725
    %v5922 = vmul.f32 %v5920, %v725
    %v5923 = vadd.f32 %v5921, 1e-05
    %v5924 = vadd.f32 %v5922, 1e-05
    %v5925 = vrsqrt.pop %v5923
    %v5926 = vrsqrt.pop %v5924
    %v5927 = vmul.f32 %v5911, %v5925
    %v5928 = vmul.f32 %v5912, %v5926
    %v5929 = vlaneseq
    %v5930 = vshrl.u32 %v5929, 7
    %v5931 = vsub.s32 6, %v5930
    %v5932 = vrot.slane %v2999, %v5931
    %v5933 = vmul.f32 %v5927, %v5932
    %v5934 = vmul.f32 %v5928, %v5932
    %v5935 = vlaneseq
    %v5936 = vshrl.u32 %v5935, 7
    %v5937 = vsub.s32 7, %v5936
    %v5938 = vrot.slane %v2999, %v5937
    %v5939 = vadd.f32 %v5933, %v5938
    %v5940 = vadd.f32 %v5934, %v5938
    %v5941 = vpack.c.bf16 %v5939, %v5939
    %v5942 = vpack.c.bf16 %v5940, %v5940
    %v5943 = vld [vmem:[%s10] sm:$0xf]
    %v5944 = vld [vmem:[%s10 + $0x4] sm:$0xf]
    %v5945 = vld [vmem:[%s10 + $0x8] sm:$0xf]
    %v5946 = vld [vmem:[%s10 + $0xc] sm:$0xf]
    %v5947 = vld [vmem:[%s10 + $0x10] sm:$0xf]
    %v5948 = vld [vmem:[%s10 + $0x14] sm:$0xf]
    %v5949 = vld [vmem:[%s10 + $0x18] sm:$0xf]
    %v5950 = vld [vmem:[%s10 + $0x1c] sm:$0xf]
    %v5951 = vld [vmem:[%s11] sm:$0x1]
    %v5953 = vlaneseq
    %v5954 = vshrl.u32 %v5953, 7
    %v5955 = vsub.s32 0, %v5954
    %v5956 = vrot.slane %v5951, %v5955
    %v5960 = vunpack.c.l.b16 %v5941
    %v5961 = vunpack.c.l.b16 %v5942
    %v5962 = vrot.slane %v5960, 7
    %v5963 = vrot.slane %v5961, 6
    %vm5964 = vcmask 1041409
    %v5965 = vsel %vm5964, %v5963, %v5962
    %v5966 = vpack.c.b16 %v5965, %v5965
    %v5975 = vunpack.c.l.b16 %v5943
    %v5976 = vunpack.c.l.b16 %v5944
    %v5977 = vunpack.c.l.b16 %v5945
    %v5978 = vunpack.c.l.b16 %v5946
    %v5979 = vunpack.c.l.b16 %v5947
    %v5980 = vunpack.c.l.b16 %v5948
    %v5981 = vunpack.c.l.b16 %v5949
    %v5982 = vunpack.c.l.b16 %v5950
    %v5983 = vpack.c.b16 %v5976, %v5975
    %v5984 = vpack.c.b16 %v5978, %v5977
    %v5985 = vpack.c.b16 %v5980, %v5979
    %v5986 = vpack.c.b16 %v5982, %v5981
    %v5992 = vsel %vm124, %v5966, 0
    %5994 = vmatprep.subr.bf16.mxu0 0
    %5995 = vmatpush1.bf16.msra.mxu0 %v5983
    %5996 = vmatprep.subr.bf16.mxu0 0
    %5997 = vmatpush1.bf16.msra.mxu0 %v5984
    %5998 = vmatprep.subr.bf16.mxu0 0
    %5999 = vmatpush1.bf16.msra.mxu0 %v5985
    %6000 = vmatprep.subr.bf16.mxu0 0
    %6001 = vmatpush1.bf16.msra.mxu0 %v5986
    %6002 = vmatprep.subr.bf16.mxu0 0
    %6003 = vmatpush1.bf16.msra.mxu0 0
    %6004 = vmatprep.subr.bf16.mxu0 0
    %6005 = vmatpush1.bf16.msra.mxu0 0
    %6006 = vmatprep.subr.bf16.mxu0 0
    %6007 = vmatpush1.bf16.msra.mxu0 0
    %6008 = vmatprep.subr.bf16.mxu0 0
    %6009 = vmatpush1.bf16.msra.mxu0 0
    %6010 = vmatprep.subr.bf16.mxu0 0
    %6011 = vmatpush1.bf16.msra.mxu0 0
    %6012 = vmatprep.subr.bf16.mxu0 0
    %6013 = vmatpush1.bf16.msra.mxu0 0
    %6014 = vmatprep.subr.bf16.mxu0 0
    %6015 = vmatpush1.bf16.msra.mxu0 0
    %6016 = vmatprep.subr.bf16.mxu0 0
    %6017 = vmatpush1.bf16.msra.mxu0 0
    %6018 = vmatprep.subr.bf16.mxu0 0
    %6019 = vmatpush1.bf16.msra.mxu0 0
    %6020 = vmatprep.subr.bf16.mxu0 0
    %6021 = vmatpush1.bf16.msra.mxu0 0
    %6022 = vmatprep.subr.bf16.mxu0 0
    %6023 = vmatpush1.bf16.msra.mxu0 0
    %6024 = vmatprep.subr.bf16.mxu0 0
    %6025 = vmatpush1.bf16.msra.mxu0 0
    %6026 = vmatprep.mubr.bf16.mxu0 0
    %6027 = vmatmul.mubr.bf16.gmra.mrb[0].mxu0 %v5992
    %v6028 = vpop.f32.mrb[0].mxu0
    %v6029 = vadd.f32 %v5956, %v6028
    %v6030 = vpop.f32.mrb[0].mxu0
    %v6031 = vpop.f32.mrb[0].mxu0
    %v6032 = vpop.f32.mrb[0].mxu0
    %6033 = vdwg.mxu0
    %vm6034 = vcmask 1041408
    %v6035 = vsel %vm6034, %v6029, -inf
    %6036 = vmax.xlane.f32.xlu0 %v6035
    %v6037 = vpop.xlane.xlu0 %6036
    %v6038 = vsub.f32 %v6029, %v6037
    %v6039 = vmul.f32 %v6038, 1.442695
    %v6040 = vpow.pop %v6039
    %v6041 = vsel %vm6034, %v6040, 0.0
    %6042 = vadd.xlane.f32.xlu0 %v6041
    %v6043 = vpop.xlane.xlu0 %6042
    %v6044 = vlog2.pop %v6043
    %v6045 = vmul.f32 %v6044, 0.6931472
    %v6046 = vsub.f32 %v6038, %v6045
    %6047 = vst [vmem:[#allocation2] sm:$0x3] %v6046
    // Predicated region
    $region50: #{flownet_forward.1} parent=1 // pred_check
      _
    $region51: #{flownet_forward.1} parent=1 // pred_check_branch
      %6049 = sbr.rel (0) target = $region53
    $region52: #{flownet_forward.1} parent=1 // pred_region
      %s6051 = ssub.s32 32, 32
      %6052 = vsyncadd [#allocation3], %s6051
      %s6054 = sshll.u32 [#allocation2], 4
      %s6055 = int_to_ptr.vmem [resolvable:$true] %s6054
      %6057 = dma.vmem_to_hbm [thread:$0]  %s6055, 32, %s12, [#allocation3]
    $region53: #{flownet_forward.1} parent=1 // pred_fallthru
      _
    // Predicated region
    $region54: #{flownet_forward.1} parent=1 // pred_check
      _
    $region55: #{flownet_forward.1} parent=1 // pred_check_branch
      %6059 = sbr.rel (0) target = $region57
    $region56: #{flownet_forward.1} parent=1 // pred_region
      %6060 = dma.done [#allocation3], 32
    $region57: #{flownet_forward.1} parent=1 // pred_fallthru
      _
    %6061 = vsyncpa [#allocation3], 1

</llo_original>
